<compile_context>
chip_gen: v5e
topology: v5e:2x2
jax: 0.10.0
libtpu: 0.0.40
codegen_flags: <defaults>
</compile_context>

<pallas_src>
import functools

import jax
import jax.numpy as jnp
from jax import lax
from jax.experimental import pallas as pl
from jax.experimental.pallas import tpu as pltpu

NEG_INF = float("-inf")


def _norm_tokens(x):
    """Per-token L2 normalization over channels (axis=1): metric / metric.norm(dim=-1)."""
    return x * lax.rsqrt(jnp.sum(x * x, axis=1, keepdims=True))


def _xcy_kernel(xe_ref, xoa_ref, xob_ref, w_ref, shift_ref, o_ref, *, score_thresh):
    """Fused XCY forward for one block of Bblk batch elements.

    xe_ref:    (Bblk, C, T/2)   even tokens (merge-1 src)
    xoa_ref:   (Bblk, C, T/4)   odd tokens with even merge-1 output index (orig pos 4k+1)
    xob_ref:   (Bblk, C, T/4)   odd tokens with odd  merge-1 output index (orig pos 4k+3)
    w_ref:     (Cout, C)        1x1 conv weight with BN scale folded in (VMEM-resident)
    shift_ref: (Cout, 1)        folded BN shift
    o_ref:     (1, Cout, Bblk*T/4)  lane-dense output slab (batch-major on lanes)
    """
    bb, c, t1 = xe_ref.shape
    t2 = t1 // 2

    xe = xe_ref[...]
    xoa = xoa_ref[...]
    xob = xob_ref[...]

    # ---------------- merge 1 (bipartite soft matching, scatter-mean) ----------------
    a_n = _norm_tokens(xe)
    bna = _norm_tokens(xoa)
    bnb = _norm_tokens(xob)
    a_nt = jnp.transpose(a_n, (0, 2, 1))                       # (Bb, t1, C)

    # Cosine scores split by dst parity (columns j=2k and j=2k+1 of the full score matrix).
    sa = jnp.einsum("bic,bck->bik", a_nt, bna, preferred_element_type=jnp.float32)
    sb = jnp.einsum("bic,bck->bik", a_nt, bnb, preferred_element_type=jnp.float32)
    ma = jnp.where(sa < score_thresh, NEG_INF, sa)              # dist > thr  <=>  score < thr'
    mb = jnp.where(sb < score_thresh, NEG_INF, sb)

    # torch.max over the full dst axis: first-occurrence argmax over global index j.
    rmax = jnp.maximum(jnp.max(ma, axis=-1, keepdims=True),
                       jnp.max(mb, axis=-1, keepdims=True))     # (Bb, t1, 1)
    kidx = lax.broadcasted_iota(jnp.int32, (bb, t1, t2), 2)
    sent = jnp.int32(t1)                                        # > any valid dst index
    ia = jnp.min(jnp.where(ma == rmax, 2 * kidx, sent), axis=-1, keepdims=True)
    ib = jnp.min(jnp.where(mb == rmax, 2 * kidx + 1, sent), axis=-1, keepdims=True)
    nid = jnp.minimum(ia, ib)                                   # (Bb, t1, 1) global dst idx

    # Parity-split one-hot scatter matrices -> merge-1 output already de-interleaved for
    # merge 2 (no selection matmul needed anywhere).
    oha = (2 * kidx == nid).astype(jnp.float32)                 # (Bb, t1, t2)
    ohb = (2 * kidx + 1 == nid).astype(jnp.float32)

    suma = jnp.einsum("bci,bik->bck", xe, oha, preferred_element_type=jnp.float32)
    sumb = jnp.einsum("bci,bik->bck", xe, ohb, preferred_element_type=jnp.float32)
    cnta = jnp.sum(oha, axis=1, keepdims=True)                  # (Bb, 1, t2)
    cntb = jnp.sum(ohb, axis=1, keepdims=True)
    a2 = (xoa + suma) * (1.0 / (1.0 + cnta))                    # row reciprocal, not full divide
    b2 = (xob + sumb) * (1.0 / (1.0 + cntb))

    # ---------------- merge 2 ----------------
    a2n = _norm_tokens(a2)
    b2n = _norm_tokens(b2)
    a2nt = jnp.transpose(a2n, (0, 2, 1))                        # (Bb, t2, C)
    s2 = jnp.einsum("bkc,bcm->bkm", a2nt, b2n, preferred_element_type=jnp.float32)
    m2 = jnp.where(s2 < score_thresh, NEG_INF, s2)
    rmax2 = jnp.max(m2, axis=-1, keepdims=True)
    midx = lax.broadcasted_iota(jnp.int32, (bb, t2, t2), 2)
    nid2 = jnp.min(jnp.where(m2 == rmax2, midx, jnp.int32(t2)), axis=-1, keepdims=True)
    oh2 = (midx == nid2).astype(jnp.float32)
    sum2 = jnp.einsum("bck,bkm->bcm", a2, oh2, preferred_element_type=jnp.float32)
    cnt2 = jnp.sum(oh2, axis=1, keepdims=True)
    y2 = (b2 + sum2) * (1.0 / (1.0 + cnt2))                     # (Bb, C, t2)

    # ---------------- 1x1 conv (BN folded) + SiLU, lane-dense store ----------------
    w = w_ref[...]
    shift = shift_ref[...]
    for b in range(bb):   # static; fills lanes [b*t2, (b+1)*t2) of the dense output slab
        z = jnp.dot(w, y2[b], preferred_element_type=jnp.float32) + shift
        o_ref[0, :, b * t2:(b + 1) * t2] = z * jax.nn.sigmoid(z)


def _pick_bblk(b, c, t):
    """Largest batch block that divides B, keeps stacked batch*C rows <= 256 (MXU) and the
    O(T^2) score / one-hot working set within a conservative VMEM budget."""
    t1, t2 = t // 2, t // 4
    per_batch_bytes = (4 * t1 * t2 + 2 * t2 * t2 + 8 * c * t1) * 4
    budget = 16 * 1024 * 1024
    best = 1
    for bb in range(1, b + 1):
        if b % bb:
            continue
        if bb * c > 256 or bb * per_batch_bytes > budget:
            break
        best = bb
    return best
    # NOTE: on v7x with large B, bb*c==256 and an even grid length feed both TensorCores.
    # TODO(synk): for very large H*W the per-batch (t1,t2) score tiles should be blocked
    # over dst tokens with an online max/argmax instead of materialized densely.


def xcy_forward(x_nchw, params, distance_threshold):
    """XCY.forward.  x_nchw: (B, C, H, W) float32 -> (B, Cout, H//2, W//2)."""
    b, c, h, w = x_nchw.shape
    assert h % 2 == 0 and w % 2 == 0
    t = h * w
    t1, t2 = t // 2, t // 4
    cout = params["w_scaled"].shape[0]

    # Host-side de-interleave (cheap XLA strided slices): removes every in-kernel selection
    # matmul and its O(T^2) constant.  Total fed data == original input size (no redundancy).
    x_ct = x_nchw.reshape(b, c, t)
    xe = x_ct[:, :, 0::2]    # merge-1 src:   original tokens 0,2,4,...
    xoa = x_ct[:, :, 1::4]   # merge-1 dst -> merge-2 src base (orig 4k+1)
    xob = x_ct[:, :, 3::4]   # merge-1 dst -> merge-2 dst base (orig 4k+3)

    # dist > thr  <=>  score < 1 - thr^2/2 for unit-norm tokens (scalar precomputed).
    # TODO(synk): compute_distance_threshold's None-path needs a host-side .item() on a
    # data-dependent cdist (and is only defined for batch<2); we require an explicit value.
    score_thresh = 1.0 - 0.5 * float(distance_threshold) ** 2

    bblk = _pick_bblk(b, c, t)
    nblk = b // bblk

    kernel = functools.partial(_xcy_kernel, score_thresh=score_thresh)
    y = pl.pallas_call(
        kernel,
        out_shape=jax.ShapeDtypeStruct((nblk, cout, bblk * t2), jnp.float32),
        grid=(nblk,),
        in_specs=[
            pl.BlockSpec((bblk, c, t1), lambda i: (i, 0, 0)),
            pl.BlockSpec((bblk, c, t2), lambda i: (i, 0, 0)),
            pl.BlockSpec((bblk, c, t2), lambda i: (i, 0, 0)),
            pl.BlockSpec((cout, c), lambda i: (0, 0)),   # VMEM-resident across the grid
            pl.BlockSpec((cout, 1), lambda i: (0, 0)),
        ],
        out_specs=pl.BlockSpec((1, cout, bblk * t2), lambda i: (i, 0, 0)),
        compiler_params=pltpu.CompilerParams(
            dimension_semantics=("parallel",),
            vmem_limit_bytes=32 * 1024 * 1024,
        ),
    )(xe, xoa, xob, params["w_scaled"], params["shift"])

    # (nblk, Cout, Bblk*T/4) -> (B, Cout, H//2, W//2): cheap wrapper-side unpack.
    y = y.reshape(nblk, cout, bblk, t2).transpose(0, 2, 1, 3)
    return y.reshape(b, cout, h // 2, w // 2)


if __name__ == "__main__":
    key = jax.random.PRNGKey(0)
    kx, kw, kg, kb = jax.random.split(key, 4)

    B, C, H, W = 2, 8, 16, 16          # in_ch = 8
    COUT = 16                          # out_ch = 16
    DIST_THRESHOLD = 1.3               # explicit constructor threshold

    x = jax.random.normal(kx, (B, C, H, W), dtype=jnp.float32)

    # Conv(in_ch, out_ch, 1, 1): Conv2d(C->COUT, k=1, bias=False) + BatchNorm2d(eval) + SiLU.
    conv_w = 0.1 * jax.random.normal(kw, (COUT, C), dtype=jnp.float32)     # (Cout, Cin)
    gamma = 1.0 + 0.1 * jax.random.normal(kg, (COUT,), dtype=jnp.float32)
    beta = 0.1 * jax.random.normal(kb, (COUT,), dtype=jnp.float32)
    running_mean = jnp.zeros((COUT,), jnp.float32)
    running_var = jnp.ones((COUT,), jnp.float32)
    eps = 1e-3
    bn_scale = gamma * lax.rsqrt(running_var + eps)
    bn_shift = beta - running_mean * bn_scale

    params = {
        "w_scaled": conv_w * bn_scale[:, None],   # BN scale folded into the 1x1 conv weight
        "shift": bn_shift[:, None],               # (Cout, 1)
    }

    y = xcy_forward(x, params, DIST_THRESHOLD)
    jax.block_until_ready(y)
    assert y.shape == (B, COUT, H // 2, W // 2), y.shape
    assert bool(jnp.isfinite(y).all())
    print("KERNEL_OK")
</pallas_src>

<mosaic_0001>
module attributes {stable_mosaic.version = 11 : i64} {
  func.func @_xcy_kernel(%arg0: i32, %arg1: memref<2x8x128xf32, #tpu.memory_space<vmem>>, %arg2: memref<2x8x64xf32, #tpu.memory_space<vmem>>, %arg3: memref<2x8x64xf32, #tpu.memory_space<vmem>>, %arg4: memref<16x8xf32, #tpu.memory_space<vmem>>, %arg5: memref<16x1xf32, #tpu.memory_space<vmem>>, %arg6: memref<1x16x128xf32, #tpu.memory_space<vmem>>) attributes {dimension_semantics = [#tpu.dimension_semantics<parallel>], iteration_bounds = array<i64: 1>, scalar_prefetch = 0 : i64, scratch_operands = 0 : i64, tpu.core_type = #tpu.core_type<tc>, window_params = [{transform_indices = @transform_0, window_bounds = array<i64: 2, 8, 128>}, {transform_indices = @transform_1, window_bounds = array<i64: 2, 8, 64>}, {transform_indices = @transform_2, window_bounds = array<i64: 2, 8, 64>}, {pipeline_mode = #tpu.pipeline_mode<synchronous>, transform_indices = @transform_3, window_bounds = array<i64: 16, 8>}, {pipeline_mode = #tpu.pipeline_mode<synchronous>, transform_indices = @transform_4, window_bounds = array<i64: 16, 1>}, {transform_indices = @transform_5, window_bounds = array<i64: 1, 16, 128>}]} {
    %c0 = arith.constant 0 : index
    %c0_0 = arith.constant 0 : index
    %c0_1 = arith.constant 0 : index
    %0 = vector.load %arg1[%c0, %c0_0, %c0_1] : memref<2x8x128xf32, #tpu.memory_space<vmem>>, vector<2x8x128xf32>
    %c0_2 = arith.constant 0 : index
    %c0_3 = arith.constant 0 : index
    %c0_4 = arith.constant 0 : index
    %1 = vector.load %arg2[%c0_2, %c0_3, %c0_4] : memref<2x8x64xf32, #tpu.memory_space<vmem>>, vector<2x8x64xf32>
    %c0_5 = arith.constant 0 : index
    %c0_6 = arith.constant 0 : index
    %c0_7 = arith.constant 0 : index
    %2 = vector.load %arg3[%c0_5, %c0_6, %c0_7] : memref<2x8x64xf32, #tpu.memory_space<vmem>>, vector<2x8x64xf32>
    %3 = arith.mulf %0, %0 : vector<2x8x128xf32>
    %cst = arith.constant dense<0.000000e+00> : vector<2x128xf32>
    %4 = vector.multi_reduction <add>, %3, %cst [1] : vector<2x8x128xf32> to vector<2x128xf32>
    %5 = vector.shape_cast %4 : vector<2x128xf32> to vector<2x1x128xf32>
    %6 = math.rsqrt %5 : vector<2x1x128xf32>
    %7 = vector.broadcast %6 : vector<2x1x128xf32> to vector<2x8x128xf32>
    %8 = arith.mulf %0, %7 : vector<2x8x128xf32>
    %9 = arith.mulf %1, %1 : vector<2x8x64xf32>
    %cst_8 = arith.constant dense<0.000000e+00> : vector<2x64xf32>
    %10 = vector.multi_reduction <add>, %9, %cst_8 [1] : vector<2x8x64xf32> to vector<2x64xf32>
    %11 = vector.shape_cast %10 : vector<2x64xf32> to vector<2x1x64xf32>
    %12 = math.rsqrt %11 : vector<2x1x64xf32>
    %13 = vector.broadcast %12 : vector<2x1x64xf32> to vector<2x8x64xf32>
    %14 = arith.mulf %1, %13 : vector<2x8x64xf32>
    %15 = arith.mulf %2, %2 : vector<2x8x64xf32>
    %cst_9 = arith.constant dense<0.000000e+00> : vector<2x64xf32>
    %16 = vector.multi_reduction <add>, %15, %cst_9 [1] : vector<2x8x64xf32> to vector<2x64xf32>
    %17 = vector.shape_cast %16 : vector<2x64xf32> to vector<2x1x64xf32>
    %18 = math.rsqrt %17 : vector<2x1x64xf32>
    %19 = vector.broadcast %18 : vector<2x1x64xf32> to vector<2x8x64xf32>
    %20 = arith.mulf %2, %19 : vector<2x8x64xf32>
    %21 = tpu.transpose %8, [0, 2, 1] : vector<2x8x128xf32> -> vector<2x128x8xf32>
    "tpu.trace_start"() <{level = 10 : i32, message = "bic,bck->bik"}> : () -> ()
    %cst_10 = arith.constant dense<0.000000e+00> : vector<2x128x64xf32>
    %22 = tpu.matmul %21, %14, %cst_10 {dimension_numbers = #tpu.dot_dimension_numbers<[2], [1], [1], [2], [0, 0, 0, 1, 1, 2], [0], [0]>} : vector<2x128x8xf32>, vector<2x8x64xf32>, vector<2x128x64xf32> -> vector<2x128x64xf32>
    %cst_11 = arith.constant dense<0.000000e+00> : vector<2x128x64xf32>
    %23 = tpu.matmul %21, %20, %cst_11 {dimension_numbers = #tpu.dot_dimension_numbers<[2], [1], [1], [2], [0, 0, 0, 1, 1, 2], [0], [0]>} : vector<2x128x8xf32>, vector<2x8x64xf32>, vector<2x128x64xf32> -> vector<2x128x64xf32>
    %cst_12 = arith.constant 1.550000e-01 : f32
    "tpu.trace_stop"() : () -> ()
    %24 = vector.broadcast %cst_12 : f32 to vector<2x128x64xf32>
    %25 = arith.cmpf olt, %22, %24 : vector<2x128x64xf32>
    %cst_13 = arith.constant 0xFF800000 : f32
    %26 = vector.broadcast %cst_13 : f32 to vector<2x128x64xf32>
    %27 = arith.select %25, %26, %22 : vector<2x128x64xi1>, vector<2x128x64xf32>
    %cst_14 = arith.constant 1.550000e-01 : f32
    %28 = vector.broadcast %cst_14 : f32 to vector<2x128x64xf32>
    %29 = arith.cmpf olt, %23, %28 : vector<2x128x64xf32>
    %cst_15 = arith.constant 0xFF800000 : f32
    %30 = vector.broadcast %cst_15 : f32 to vector<2x128x64xf32>
    %31 = arith.select %29, %30, %23 : vector<2x128x64xi1>, vector<2x128x64xf32>
    %cst_16 = arith.constant dense<0xFF800000> : vector<2x128xf32>
    %32 = vector.multi_reduction <maximumf>, %27, %cst_16 [2] : vector<2x128x64xf32> to vector<2x128xf32>
    %33 = vector.shape_cast %32 : vector<2x128xf32> to vector<2x128x1xf32>
    %cst_17 = arith.constant dense<0xFF800000> : vector<2x128xf32>
    %34 = vector.multi_reduction <maximumf>, %31, %cst_17 [2] : vector<2x128x64xf32> to vector<2x128xf32>
    %35 = vector.shape_cast %34 : vector<2x128xf32> to vector<2x128x1xf32>
    %36 = arith.maximumf %33, %35 : vector<2x128x1xf32>
    %37 = tpu.iota {dimensions = array<i32: 2>} : vector<2x128x64xi32>
    %38 = vector.broadcast %36 : vector<2x128x1xf32> to vector<2x128x64xf32>
    %39 = arith.cmpf oeq, %27, %38 : vector<2x128x64xf32>
    %c2_i32 = arith.constant 2 : i32
    %40 = vector.broadcast %c2_i32 : i32 to vector<2x128x64xi32>
    %41 = arith.muli %40, %37 : vector<2x128x64xi32>
    %c128_i32 = arith.constant 128 : i32
    %42 = vector.broadcast %c128_i32 : i32 to vector<2x128x64xi32>
    %43 = arith.select %39, %41, %42 : vector<2x128x64xi1>, vector<2x128x64xi32>
    %cst_18 = arith.constant dense<2147483647> : vector<2x128xi32>
    %44 = vector.multi_reduction <minsi>, %43, %cst_18 [2] : vector<2x128x64xi32> to vector<2x128xi32>
    %45 = vector.shape_cast %44 : vector<2x128xi32> to vector<2x128x1xi32>
    %46 = vector.broadcast %36 : vector<2x128x1xf32> to vector<2x128x64xf32>
    %47 = arith.cmpf oeq, %31, %46 : vector<2x128x64xf32>
    %c2_i32_19 = arith.constant 2 : i32
    %48 = vector.broadcast %c2_i32_19 : i32 to vector<2x128x64xi32>
    %49 = arith.muli %48, %37 : vector<2x128x64xi32>
    %c1_i32 = arith.constant 1 : i32
    %50 = vector.broadcast %c1_i32 : i32 to vector<2x128x64xi32>
    %51 = arith.addi %49, %50 : vector<2x128x64xi32>
    %c128_i32_20 = arith.constant 128 : i32
    %52 = vector.broadcast %c128_i32_20 : i32 to vector<2x128x64xi32>
    %53 = arith.select %47, %51, %52 : vector<2x128x64xi1>, vector<2x128x64xi32>
    %cst_21 = arith.constant dense<2147483647> : vector<2x128xi32>
    %54 = vector.multi_reduction <minsi>, %53, %cst_21 [2] : vector<2x128x64xi32> to vector<2x128xi32>
    %55 = vector.shape_cast %54 : vector<2x128xi32> to vector<2x128x1xi32>
    %56 = arith.minsi %45, %55 : vector<2x128x1xi32>
    %c2_i32_22 = arith.constant 2 : i32
    %57 = vector.broadcast %c2_i32_22 : i32 to vector<2x128x64xi32>
    %58 = arith.muli %57, %37 : vector<2x128x64xi32>
    %59 = vector.broadcast %56 : vector<2x128x1xi32> to vector<2x128x64xi32>
    %60 = arith.cmpi eq, %58, %59 : vector<2x128x64xi32>
    %61 = arith.extui %60 : vector<2x128x64xi1> to vector<2x128x64xi32>
    %62 = arith.sitofp %61 : vector<2x128x64xi32> to vector<2x128x64xf32>
    %c2_i32_23 = arith.constant 2 : i32
    %63 = vector.broadcast %c2_i32_23 : i32 to vector<2x128x64xi32>
    %64 = arith.muli %63, %37 : vector<2x128x64xi32>
    %c1_i32_24 = arith.constant 1 : i32
    %65 = vector.broadcast %c1_i32_24 : i32 to vector<2x128x64xi32>
    %66 = arith.addi %64, %65 : vector<2x128x64xi32>
    %67 = vector.broadcast %56 : vector<2x128x1xi32> to vector<2x128x64xi32>
    %68 = arith.cmpi eq, %66, %67 : vector<2x128x64xi32>
    %69 = arith.extui %68 : vector<2x128x64xi1> to vector<2x128x64xi32>
    %70 = arith.sitofp %69 : vector<2x128x64xi32> to vector<2x128x64xf32>
    "tpu.trace_start"() <{level = 10 : i32, message = "bci,bik->bck"}> : () -> ()
    %cst_25 = arith.constant dense<0.000000e+00> : vector<2x8x64xf32>
    %71 = tpu.matmul %0, %62, %cst_25 {dimension_numbers = #tpu.dot_dimension_numbers<[2], [1], [1], [2], [0, 0, 0, 1, 1, 2], [0], [0]>} : vector<2x8x128xf32>, vector<2x128x64xf32>, vector<2x8x64xf32> -> vector<2x8x64xf32>
    %cst_26 = arith.constant dense<0.000000e+00> : vector<2x8x64xf32>
    %72 = tpu.matmul %0, %70, %cst_26 {dimension_numbers = #tpu.dot_dimension_numbers<[2], [1], [1], [2], [0, 0, 0, 1, 1, 2], [0], [0]>} : vector<2x8x128xf32>, vector<2x128x64xf32>, vector<2x8x64xf32> -> vector<2x8x64xf32>
    "tpu.trace_stop"() : () -> ()
    %cst_27 = arith.constant dense<0.000000e+00> : vector<2x64xf32>
    %73 = vector.multi_reduction <add>, %62, %cst_27 [1] : vector<2x128x64xf32> to vector<2x64xf32>
    %74 = vector.shape_cast %73 : vector<2x64xf32> to vector<2x1x64xf32>
    %cst_28 = arith.constant dense<0.000000e+00> : vector<2x64xf32>
    %75 = vector.multi_reduction <add>, %70, %cst_28 [1] : vector<2x128x64xf32> to vector<2x64xf32>
    %76 = vector.shape_cast %75 : vector<2x64xf32> to vector<2x1x64xf32>
    %77 = arith.addf %1, %71 : vector<2x8x64xf32>
    %cst_29 = arith.constant 1.000000e+00 : f32
    %78 = vector.broadcast %cst_29 : f32 to vector<2x1x64xf32>
    %79 = arith.addf %78, %74 : vector<2x1x64xf32>
    %cst_30 = arith.constant 1.000000e+00 : f32
    %80 = vector.broadcast %cst_30 : f32 to vector<2x1x64xf32>
    %81 = arith.divf %80, %79 : vector<2x1x64xf32>
    %82 = vector.broadcast %81 : vector<2x1x64xf32> to vector<2x8x64xf32>
    %83 = arith.mulf %77, %82 : vector<2x8x64xf32>
    %84 = arith.addf %2, %72 : vector<2x8x64xf32>
    %cst_31 = arith.constant 1.000000e+00 : f32
    %85 = vector.broadcast %cst_31 : f32 to vector<2x1x64xf32>
    %86 = arith.addf %85, %76 : vector<2x1x64xf32>
    %cst_32 = arith.constant 1.000000e+00 : f32
    %87 = vector.broadcast %cst_32 : f32 to vector<2x1x64xf32>
    %88 = arith.divf %87, %86 : vector<2x1x64xf32>
    %89 = vector.broadcast %88 : vector<2x1x64xf32> to vector<2x8x64xf32>
    %90 = arith.mulf %84, %89 : vector<2x8x64xf32>
    %91 = arith.mulf %83, %83 : vector<2x8x64xf32>
    %cst_33 = arith.constant dense<0.000000e+00> : vector<2x64xf32>
    %92 = vector.multi_reduction <add>, %91, %cst_33 [1] : vector<2x8x64xf32> to vector<2x64xf32>
    %93 = vector.shape_cast %92 : vector<2x64xf32> to vector<2x1x64xf32>
    %94 = math.rsqrt %93 : vector<2x1x64xf32>
    %95 = vector.broadcast %94 : vector<2x1x64xf32> to vector<2x8x64xf32>
    %96 = arith.mulf %83, %95 : vector<2x8x64xf32>
    %97 = arith.mulf %90, %90 : vector<2x8x64xf32>
    %cst_34 = arith.constant dense<0.000000e+00> : vector<2x64xf32>
    %98 = vector.multi_reduction <add>, %97, %cst_34 [1] : vector<2x8x64xf32> to vector<2x64xf32>
    %99 = vector.shape_cast %98 : vector<2x64xf32> to vector<2x1x64xf32>
    %100 = math.rsqrt %99 : vector<2x1x64xf32>
    %101 = vector.broadcast %100 : vector<2x1x64xf32> to vector<2x8x64xf32>
    %102 = arith.mulf %90, %101 : vector<2x8x64xf32>
    %103 = tpu.transpose %96, [0, 2, 1] : vector<2x8x64xf32> -> vector<2x64x8xf32>
    "tpu.trace_start"() <{level = 10 : i32, message = "bkc,bcm->bkm"}> : () -> ()
    %cst_35 = arith.constant dense<0.000000e+00> : vector<2x64x64xf32>
    %104 = tpu.matmul %103, %102, %cst_35 {dimension_numbers = #tpu.dot_dimension_numbers<[2], [1], [1], [2], [0, 0, 0, 1, 1, 2], [0], [0]>} : vector<2x64x8xf32>, vector<2x8x64xf32>, vector<2x64x64xf32> -> vector<2x64x64xf32>
    %cst_36 = arith.constant 1.550000e-01 : f32
    "tpu.trace_stop"() : () -> ()
    %105 = vector.broadcast %cst_36 : f32 to vector<2x64x64xf32>
    %106 = arith.cmpf olt, %104, %105 : vector<2x64x64xf32>
    %cst_37 = arith.constant 0xFF800000 : f32
    %107 = vector.broadcast %cst_37 : f32 to vector<2x64x64xf32>
    %108 = arith.select %106, %107, %104 : vector<2x64x64xi1>, vector<2x64x64xf32>
    %cst_38 = arith.constant dense<0xFF800000> : vector<2x64xf32>
    %109 = vector.multi_reduction <maximumf>, %108, %cst_38 [2] : vector<2x64x64xf32> to vector<2x64xf32>
    %110 = vector.shape_cast %109 : vector<2x64xf32> to vector<2x64x1xf32>
    %111 = tpu.iota {dimensions = array<i32: 2>} : vector<2x64x64xi32>
    %112 = vector.broadcast %110 : vector<2x64x1xf32> to vector<2x64x64xf32>
    %113 = arith.cmpf oeq, %108, %112 : vector<2x64x64xf32>
    %c64_i32 = arith.constant 64 : i32
    %114 = vector.broadcast %c64_i32 : i32 to vector<2x64x64xi32>
    %115 = arith.select %113, %111, %114 : vector<2x64x64xi1>, vector<2x64x64xi32>
    %cst_39 = arith.constant dense<2147483647> : vector<2x64xi32>
    %116 = vector.multi_reduction <minsi>, %115, %cst_39 [2] : vector<2x64x64xi32> to vector<2x64xi32>
    %117 = vector.shape_cast %116 : vector<2x64xi32> to vector<2x64x1xi32>
    %118 = vector.broadcast %117 : vector<2x64x1xi32> to vector<2x64x64xi32>
    %119 = arith.cmpi eq, %111, %118 : vector<2x64x64xi32>
    %120 = arith.extui %119 : vector<2x64x64xi1> to vector<2x64x64xi32>
    %121 = arith.sitofp %120 : vector<2x64x64xi32> to vector<2x64x64xf32>
    "tpu.trace_start"() <{level = 10 : i32, message = "bck,bkm->bcm"}> : () -> ()
    %cst_40 = arith.constant dense<0.000000e+00> : vector<2x8x64xf32>
    %122 = tpu.matmul %83, %121, %cst_40 {dimension_numbers = #tpu.dot_dimension_numbers<[2], [1], [1], [2], [0, 0, 0, 1, 1, 2], [0], [0]>} : vector<2x8x64xf32>, vector<2x64x64xf32>, vector<2x8x64xf32> -> vector<2x8x64xf32>
    "tpu.trace_stop"() : () -> ()
    %cst_41 = arith.constant dense<0.000000e+00> : vector<2x64xf32>
    %123 = vector.multi_reduction <add>, %121, %cst_41 [1] : vector<2x64x64xf32> to vector<2x64xf32>
    %124 = vector.shape_cast %123 : vector<2x64xf32> to vector<2x1x64xf32>
    %125 = arith.addf %90, %122 : vector<2x8x64xf32>
    %cst_42 = arith.constant 1.000000e+00 : f32
    %126 = vector.broadcast %cst_42 : f32 to vector<2x1x64xf32>
    %127 = arith.addf %126, %124 : vector<2x1x64xf32>
    %cst_43 = arith.constant 1.000000e+00 : f32
    %128 = vector.broadcast %cst_43 : f32 to vector<2x1x64xf32>
    %129 = arith.divf %128, %127 : vector<2x1x64xf32>
    %130 = vector.broadcast %129 : vector<2x1x64xf32> to vector<2x8x64xf32>
    %131 = arith.mulf %125, %130 : vector<2x8x64xf32>
    %c0_44 = arith.constant 0 : index
    %c0_45 = arith.constant 0 : index
    %132 = vector.load %arg4[%c0_44, %c0_45] : memref<16x8xf32, #tpu.memory_space<vmem>>, vector<16x8xf32>
    %c0_46 = arith.constant 0 : index
    %c0_47 = arith.constant 0 : index
    %133 = vector.load %arg5[%c0_46, %c0_47] : memref<16x1xf32, #tpu.memory_space<vmem>>, vector<16x1xf32>
    %134 = vector.extract_strided_slice %131 {offsets = [0, 0, 0], sizes = [1, 8, 64], strides = [1, 1, 1]} : vector<2x8x64xf32> to vector<1x8x64xf32>
    %135 = vector.shape_cast %134 : vector<1x8x64xf32> to vector<8x64xf32>
    %cst_48 = arith.constant dense<0.000000e+00> : vector<16x64xf32>
    %136 = tpu.matmul %132, %135, %cst_48 {dimension_numbers = #tpu.dot_dimension_numbers<[1], [0], [0], [1], [0, 0, 1, 1], [], []>} : vector<16x8xf32>, vector<8x64xf32>, vector<16x64xf32> -> vector<16x64xf32>
    %137 = vector.broadcast %133 : vector<16x1xf32> to vector<16x64xf32>
    %138 = arith.addf %136, %137 : vector<16x64xf32>
    %139 = arith.negf %138 : vector<16x64xf32>
    %140 = math.exp %139 : vector<16x64xf32>
    %cst_49 = arith.constant 1.000000e+00 : f32
    %141 = vector.broadcast %cst_49 : f32 to vector<16x64xf32>
    %142 = arith.addf %141, %140 : vector<16x64xf32>
    %143 = arith.divf %141, %142 : vector<16x64xf32>
    %144 = arith.mulf %138, %143 : vector<16x64xf32>
    %c0_50 = arith.constant 0 : index
    %c0_51 = arith.constant 0 : index
    %c0_52 = arith.constant 0 : index
    %145 = vector.load %arg6[%c0_50, %c0_51, %c0_52] : memref<1x16x128xf32, #tpu.memory_space<vmem>>, vector<1x16x64xf32>
    %146 = vector.shape_cast %145 : vector<1x16x64xf32> to vector<16x64xf32>
    %147 = vector.shape_cast %144 : vector<16x64xf32> to vector<1x16x64xf32>
    tpu.vector_store %arg6[%c0_50, %c0_51, %c0_52], %147 {strides = array<i32>} : memref<1x16x128xf32, #tpu.memory_space<vmem>>, vector<1x16x64xf32>,
    %148 = vector.extract_strided_slice %131 {offsets = [1, 0, 0], sizes = [1, 8, 64], strides = [1, 1, 1]} : vector<2x8x64xf32> to vector<1x8x64xf32>
    %149 = vector.shape_cast %148 : vector<1x8x64xf32> to vector<8x64xf32>
    %cst_53 = arith.constant dense<0.000000e+00> : vector<16x64xf32>
    %150 = tpu.matmul %132, %149, %cst_53 {dimension_numbers = #tpu.dot_dimension_numbers<[1], [0], [0], [1], [0, 0, 1, 1], [], []>} : vector<16x8xf32>, vector<8x64xf32>, vector<16x64xf32> -> vector<16x64xf32>
    %151 = vector.broadcast %133 : vector<16x1xf32> to vector<16x64xf32>
    %152 = arith.addf %150, %151 : vector<16x64xf32>
    %153 = arith.negf %152 : vector<16x64xf32>
    %154 = math.exp %153 : vector<16x64xf32>
    %cst_54 = arith.constant 1.000000e+00 : f32
    %155 = vector.broadcast %cst_54 : f32 to vector<16x64xf32>
    %156 = arith.addf %155, %154 : vector<16x64xf32>
    %157 = arith.divf %155, %156 : vector<16x64xf32>
    %158 = arith.mulf %152, %157 : vector<16x64xf32>
    %c0_55 = arith.constant 0 : index
    %c0_56 = arith.constant 0 : index
    %c64 = arith.constant 64 : index
    %159 = vector.load %arg6[%c0_55, %c0_56, %c64] : memref<1x16x128xf32, #tpu.memory_space<vmem>>, vector<1x16x64xf32>
    %160 = vector.shape_cast %159 : vector<1x16x64xf32> to vector<16x64xf32>
    %161 = vector.shape_cast %158 : vector<16x64xf32> to vector<1x16x64xf32>
    tpu.vector_store %arg6[%c0_55, %c0_56, %c64], %161 {strides = array<i32>} : memref<1x16x128xf32, #tpu.memory_space<vmem>>, vector<1x16x64xf32>,
    return
  }
  func.func @transform_0(%arg0: i32) -> (i32, i32, i32) {
    %c0_i32 = arith.constant 0 : i32
    %c0_i32_0 = arith.constant 0 : i32
    %c0_i32_1 = arith.constant 0 : i32
    return %arg0, %c0_i32, %c0_i32_0 : i32, i32, i32
  }
  func.func @transform_1(%arg0: i32) -> (i32, i32, i32) {
    %c0_i32 = arith.constant 0 : i32
    %c0_i32_0 = arith.constant 0 : i32
    %c0_i32_1 = arith.constant 0 : i32
    return %arg0, %c0_i32, %c0_i32_0 : i32, i32, i32
  }
  func.func @transform_2(%arg0: i32) -> (i32, i32, i32) {
    %c0_i32 = arith.constant 0 : i32
    %c0_i32_0 = arith.constant 0 : i32
    %c0_i32_1 = arith.constant 0 : i32
    return %arg0, %c0_i32, %c0_i32_0 : i32, i32, i32
  }
  func.func @transform_3(%arg0: i32) -> (i32, i32) {
    %c0_i32 = arith.constant 0 : i32
    %c0_i32_0 = arith.constant 0 : i32
    %c0_i32_1 = arith.constant 0 : i32
    return %c0_i32, %c0_i32_0 : i32, i32
  }
  func.func @transform_4(%arg0: i32) -> (i32, i32) {
    %c0_i32 = arith.constant 0 : i32
    %c0_i32_0 = arith.constant 0 : i32
    %c0_i32_1 = arith.constant 0 : i32
    return %c0_i32, %c0_i32_0 : i32, i32
  }
  func.func @transform_5(%arg0: i32) -> (i32, i32, i32) {
    %c0_i32 = arith.constant 0 : i32
    %c0_i32_0 = arith.constant 0 : i32
    %c0_i32_1 = arith.constant 0 : i32
    return %arg0, %c0_i32, %c0_i32_0 : i32, i32, i32
  }
}

</mosaic_0001>

<llo_original>
// kernel: tpu_custom_call.1
$region0: #{tpu_custom_call.1}
  #allocation0 [shape = 'u32[]', space=smem, size = 0x4, offset = 0x4, fixed_abs, tag = 'smem constant byte address 0x4 - core index']
  #allocation1 [shape = 'u32[72,128]{1,0:T(1,128)}', space=vmem, size = 0x9000, scoped, tag = 'internal scratch']
  %s0 = inlined_call_operand.vmem [shape: f32[2,8,128], index: 0, kind: input, shape index: {}]
  %s1 = inlined_call_operand.vmem [shape: f32[2,8,64], index: 1, kind: input, shape index: {}]
  %s2 = inlined_call_operand.hbm [shape: f32[2,8,64], index: 2, kind: input, shape index: {}]
  %s3 = inlined_call_operand.vmem [shape: f32[16,8], index: 3, kind: input, shape index: {}]
  %s4 = inlined_call_operand.vmem [shape: f32[16,1], index: 4, kind: input, shape index: {}]
  %s5 = inlined_call_operand.hbm [shape: f32[1,16,128], index: 5, kind: output, shape index: {}]
  %s6 = sld [smem:[#allocation0]]
  $region34: #{tpu_custom_call.1} parent=0
    _
  %s8 = ssub.s32 1, %s6
  %s9 = scalar_select 0, %s8, %s6
  $region1: #{tpu_custom_call.1} parent=0
    #allocation2 [shape = 'u8[8192]{0}', space=vmem, size = 0x2000, scoped, tag = 'input window, operand 2, single buffered']
    #allocation3 [shape = 's32[1]{0}', space=sflag, size = 0x4, scoped, tag = 'scoped memory for tpu_custom_call.1']
    #allocation4 [shape = 's32[1]{0}', space=sflag, size = 0x4, scoped, tag = 'scoped memory for tpu_custom_call.1']
    #allocation5 [shape = 'u8[8192]{0}', space=vmem, size = 0x2000, scoped, tag = 'output window, operand 0, single buffered']
    %10 = vsyncpa [#allocation3], 0
    %11 = vsyncpa [#allocation4], 0
    // Predicated region
    $region2: #{tpu_custom_call.1} parent=1 // pred_check
      _
    $region3: #{tpu_custom_call.1} parent=1 // pred_check_branch
      %13 = sbr.rel (0) target = $region5
    $region4: #{tpu_custom_call.1} parent=1 // pred_region
      _
    $region5: #{tpu_custom_call.1} parent=1 // pred_fallthru
      _
    // Predicated region
    $region6: #{tpu_custom_call.1} parent=1 // pred_check
      _
    $region7: #{tpu_custom_call.1} parent=1 // pred_check_branch
      %15 = sbr.rel (0) target = $region9
    $region8: #{tpu_custom_call.1} parent=1 // pred_region
      _
    $region9: #{tpu_custom_call.1} parent=1 // pred_fallthru
      _
    // Predicated region
    $region10: #{tpu_custom_call.1} parent=1 // pred_check
      _
    $region11: #{tpu_custom_call.1} parent=1 // pred_check_branch
      %17 = sbr.rel (0) target = $region13
    $region12: #{tpu_custom_call.1} parent=1 // pred_region
      %19 = vsyncadd [#allocation3], 0
      %s20 = sshll.u32 %s2, 4
      %s21 = int_to_ptr.hbm [resolvable:$true] %s20
      %s22 = sshll.u32 [#allocation2], 4
      %s23 = int_to_ptr.vmem [resolvable:$true] %s22
      %28 = dma.hbm_to_vmem [thread:$0]  %s21, 256, %s23, [#allocation3], 128, 128, 8
    $region13: #{tpu_custom_call.1} parent=1 // pred_fallthru
      _
    // Predicated region
    $region14: #{tpu_custom_call.1} parent=1 // pred_check
      _
    $region15: #{tpu_custom_call.1} parent=1 // pred_check_branch
      %30 = sbr.rel (0) target = $region17
    $region16: #{tpu_custom_call.1} parent=1 // pred_region
      _
    $region17: #{tpu_custom_call.1} parent=1 // pred_fallthru
      _
    // Predicated region
    $region18: #{tpu_custom_call.1} parent=1 // pred_check
      _
    $region19: #{tpu_custom_call.1} parent=1 // pred_check_branch
      %32 = sbr.rel (0) target = $region21
    $region20: #{tpu_custom_call.1} parent=1 // pred_region
      _
    $region21: #{tpu_custom_call.1} parent=1 // pred_fallthru
      _
    // Predicated region
    $region22: #{tpu_custom_call.1} parent=1 // pred_check
      _
    $region23: #{tpu_custom_call.1} parent=1 // pred_check_branch
      %34 = sbr.rel (0) target = $region25
    $region24: #{tpu_custom_call.1} parent=1 // pred_region
      %36 = dma.done [#allocation3], 256
    $region25: #{tpu_custom_call.1} parent=1 // pred_fallthru
      _
    %v37 = vld [vmem:[%s0] sm:$0xff]
    %v38 = vld [vmem:[%s0 + $0x8] sm:$0xff]
    %v39 = vld [vmem:[%s1] sm:$0xff]
    %v40 = vld [vmem:[%s1 + $0x8] sm:$0xff]
    %v41 = vld [vmem:[#allocation2] sm:$0xff]
    %v42 = vld [vmem:[#allocation2 + $0x8] sm:$0xff]
    %v43 = vmul.f32 %v37, %v37
    %v44 = vmul.f32 %v38, %v38
    %v45 = vrot.slane %v43, 4
    %v46 = vadd.f32 %v43, %v45
    %v47 = vrot.slane %v46, 2
    %v48 = vadd.f32 %v46, %v47
    %v49 = vrot.slane %v48, 1
    %v50 = vadd.f32 %v48, %v49
    %v51 = vrot.slane %v44, 4
    %v52 = vadd.f32 %v44, %v51
    %v53 = vrot.slane %v52, 2
    %v54 = vadd.f32 %v52, %v53
    %v55 = vrot.slane %v54, 1
    %v56 = vadd.f32 %v54, %v55
    %v57 = vrsqrt.pop %v50
    %v58 = vmul.f32 %v57, %v50
    %v59 = vmul.f32 %v58, %v57
    %v60 = vmul.f32 0.5, %v59
    %v61 = vsub.f32 1.5, %v60
    %v62 = vmul.f32 %v57, %v61
    %vm63 = vweird.f32 %v50
    %vm64 = vweird.f32 %v57
    %vm65 = vmor %vm63, %vm64
    %v66 = vsel %vm65, %v57, %v62
    %v67 = vrsqrt.pop %v56
    %v68 = vmul.f32 %v67, %v56
    %v69 = vmul.f32 %v68, %v67
    %v70 = vmul.f32 0.5, %v69
    %v71 = vsub.f32 1.5, %v70
    %v72 = vmul.f32 %v67, %v71
    %vm73 = vweird.f32 %v56
    %vm74 = vweird.f32 %v67
    %vm75 = vmor %vm73, %vm74
    %v76 = vsel %vm75, %v67, %v72
    %v77 = vmul.f32 %v37, %v66
    %v78 = vmul.f32 %v38, %v76
    %v79 = vmul.f32 %v39, %v39
    %v80 = vmul.f32 %v40, %v40
    %vm81 = vcmask 523264
    %v82 = vsel %vm81, %v79, 0.0
    %v83 = vrot.slane %v82, 4
    %v84 = vadd.f32 %v82, %v83
    %v85 = vrot.slane %v84, 2
    %v86 = vadd.f32 %v84, %v85
    %v87 = vrot.slane %v86, 1
    %v88 = vadd.f32 %v86, %v87
    %v89 = vsel %vm81, %v80, 0.0
    %v90 = vrot.slane %v89, 4
    %v91 = vadd.f32 %v89, %v90
    %v92 = vrot.slane %v91, 2
    %v93 = vadd.f32 %v91, %v92
    %v94 = vrot.slane %v93, 1
    %v95 = vadd.f32 %v93, %v94
    %v96 = vrsqrt.pop %v88
    %v97 = vmul.f32 %v96, %v88
    %v98 = vmul.f32 %v97, %v96
    %v99 = vmul.f32 0.5, %v98
    %v100 = vsub.f32 1.5, %v99
    %v101 = vmul.f32 %v96, %v100
    %vm102 = vweird.f32 %v88
    %vm103 = vweird.f32 %v96
    %vm104 = vmor %vm102, %vm103
    %v105 = vsel %vm104, %v96, %v101
    %v106 = vrsqrt.pop %v95
    %v107 = vmul.f32 %v106, %v95
    %v108 = vmul.f32 %v107, %v106
    %v109 = vmul.f32 0.5, %v108
    %v110 = vsub.f32 1.5, %v109
    %v111 = vmul.f32 %v106, %v110
    %vm112 = vweird.f32 %v95
    %vm113 = vweird.f32 %v106
    %vm114 = vmor %vm112, %vm113
    %v115 = vsel %vm114, %v106, %v111
    %v116 = vmul.f32 %v39, %v105
    %v117 = vmul.f32 %v40, %v115
    %v118 = vmul.f32 %v41, %v41
    %v119 = vmul.f32 %v42, %v42
    %v120 = vsel %vm81, %v118, 0.0
    %v121 = vrot.slane %v120, 4
    %v122 = vadd.f32 %v120, %v121
    %v123 = vrot.slane %v122, 2
    %v124 = vadd.f32 %v122, %v123
    %v125 = vrot.slane %v124, 1
    %v126 = vadd.f32 %v124, %v125
    %v127 = vsel %vm81, %v119, 0.0
    %v128 = vrot.slane %v127, 4
    %v129 = vadd.f32 %v127, %v128
    %v130 = vrot.slane %v129, 2
    %v131 = vadd.f32 %v129, %v130
    %v132 = vrot.slane %v131, 1
    %v133 = vadd.f32 %v131, %v132
    %v134 = vrsqrt.pop %v126
    %v135 = vmul.f32 %v134, %v126
    %v136 = vmul.f32 %v135, %v134
    %v137 = vmul.f32 0.5, %v136
    %v138 = vsub.f32 1.5, %v137
    %v139 = vmul.f32 %v134, %v138
    %vm140 = vweird.f32 %v126
    %vm141 = vweird.f32 %v134
    %vm142 = vmor %vm140, %vm141
    %v143 = vsel %vm142, %v134, %v139
    %v144 = vrsqrt.pop %v133
    %v145 = vmul.f32 %v144, %v133
    %v146 = vmul.f32 %v145, %v144
    %v147 = vmul.f32 0.5, %v146
    %v148 = vsub.f32 1.5, %v147
    %v149 = vmul.f32 %v144, %v148
    %vm150 = vweird.f32 %v133
    %vm151 = vweird.f32 %v144
    %vm152 = vmor %vm150, %vm151
    %v153 = vsel %vm152, %v144, %v149
    %v154 = vmul.f32 %v41, %v143
    %v155 = vmul.f32 %v42, %v153
    %156 = vxpose.xlu0.b32.start [1/16] %v77, 128
    %157 = vxpose.xlu0.b32.cont [2/16] 0.0, 128
    %158 = vxpose.xlu0.b32.cont [3/16] 0.0, 128
    %159 = vxpose.xlu0.b32.cont [4/16] 0.0, 128
    %160 = vxpose.xlu0.b32.cont [5/16] 0.0, 128
    %161 = vxpose.xlu0.b32.cont [6/16] 0.0, 128
    %162 = vxpose.xlu0.b32.cont [7/16] 0.0, 128
    %163 = vxpose.xlu0.b32.cont [8/16] 0.0, 128
    %164 = vxpose.xlu0.b32.cont [9/16] 0.0, 128
    %165 = vxpose.xlu0.b32.cont [10/16] 0.0, 128
    %166 = vxpose.xlu0.b32.cont [11/16] 0.0, 128
    %167 = vxpose.xlu0.b32.cont [12/16] 0.0, 128
    %168 = vxpose.xlu0.b32.cont [13/16] 0.0, 128
    %169 = vxpose.xlu0.b32.cont [14/16] 0.0, 128
    %170 = vxpose.xlu0.b32.cont [15/16] 0.0, 128
    %171 = vxpose.xlu0.b32.end [16/16] 0.0, 128
    %v172 = vpop.trf.xlu0
    %v173 = vpop.trf.xlu0
    %v174 = vpop.trf.xlu0
    %v175 = vpop.trf.xlu0
    %v176 = vpop.trf.xlu0
    %v177 = vpop.trf.xlu0
    %v178 = vpop.trf.xlu0
    %v179 = vpop.trf.xlu0
    %v180 = vpop.trf.xlu0
    %v181 = vpop.trf.xlu0
    %v182 = vpop.trf.xlu0
    %v183 = vpop.trf.xlu0
    %v184 = vpop.trf.xlu0
    %v185 = vpop.trf.xlu0
    %v186 = vpop.trf.xlu0
    %v187 = vpop.trf.xlu0
    %188 = vxpose.xlu0.b32.start [1/16] %v78, 128
    %189 = vxpose.xlu0.b32.cont [2/16] 0.0, 128
    %190 = vxpose.xlu0.b32.cont [3/16] 0.0, 128
    %191 = vxpose.xlu0.b32.cont [4/16] 0.0, 128
    %192 = vxpose.xlu0.b32.cont [5/16] 0.0, 128
    %193 = vxpose.xlu0.b32.cont [6/16] 0.0, 128
    %194 = vxpose.xlu0.b32.cont [7/16] 0.0, 128
    %195 = vxpose.xlu0.b32.cont [8/16] 0.0, 128
    %196 = vxpose.xlu0.b32.cont [9/16] 0.0, 128
    %197 = vxpose.xlu0.b32.cont [10/16] 0.0, 128
    %198 = vxpose.xlu0.b32.cont [11/16] 0.0, 128
    %199 = vxpose.xlu0.b32.cont [12/16] 0.0, 128
    %200 = vxpose.xlu0.b32.cont [13/16] 0.0, 128
    %201 = vxpose.xlu0.b32.cont [14/16] 0.0, 128
    %202 = vxpose.xlu0.b32.cont [15/16] 0.0, 128
    %203 = vxpose.xlu0.b32.end [16/16] 0.0, 128
    %v204 = vpop.trf.xlu0
    %v205 = vpop.trf.xlu0
    %v206 = vpop.trf.xlu0
    %v207 = vpop.trf.xlu0
    %v208 = vpop.trf.xlu0
    %v209 = vpop.trf.xlu0
    %v210 = vpop.trf.xlu0
    %v211 = vpop.trf.xlu0
    %v212 = vpop.trf.xlu0
    %v213 = vpop.trf.xlu0
    %v214 = vpop.trf.xlu0
    %v215 = vpop.trf.xlu0
    %v216 = vpop.trf.xlu0
    %v217 = vpop.trf.xlu0
    %v218 = vpop.trf.xlu0
    %v219 = vpop.trf.xlu0
    %vm220 = vcmask 64512
    %v222 = vsel %vm220, %v172, 0
    %v225 = vsel %vm220, %v173, 0
    %v228 = vsel %vm220, %v174, 0
    %v231 = vsel %vm220, %v175, 0
    %v234 = vsel %vm220, %v176, 0
    %v237 = vsel %vm220, %v177, 0
    %v240 = vsel %vm220, %v178, 0
    %v243 = vsel %vm220, %v179, 0
    %v246 = vsel %vm220, %v180, 0
    %v249 = vsel %vm220, %v181, 0
    %v252 = vsel %vm220, %v182, 0
    %v255 = vsel %vm220, %v183, 0
    %v258 = vsel %vm220, %v184, 0
    %v261 = vsel %vm220, %v185, 0
    %v264 = vsel %vm220, %v186, 0
    %v267 = vsel %vm220, %v187, 0
    %269 = vmatpush.msra.mxu0 0.0
    %270 = vmatpush.msra.mxu0 0.0
    %271 = vmatpush.msra.mxu0 0.0
    %272 = vmatpush.msra.mxu0 0.0
    %273 = vmatpush.msra.mxu0 0.0
    %274 = vmatpush.msra.mxu0 0.0
    %275 = vmatpush.msra.mxu0 0.0
    %276 = vmatpush.msra.mxu0 0.0
    %277 = vmatpush.msra.mxu0 0.0
    %278 = vmatpush.msra.mxu0 0.0
    %279 = vmatpush.msra.mxu0 0.0
    %280 = vmatpush.msra.mxu0 0.0
    %281 = vmatpush.msra.mxu0 0.0
    %282 = vmatpush.msra.mxu0 0.0
    %283 = vmatpush.msra.mxu0 0.0
    %284 = vmatpush.msra.mxu0 %v116
    %285 = vmatmul.f32.gmra.mxu0 %v222
    %v286 = vpop.f32.mrf.mxu0
    %v287 = vadd.f32 0.0, %v286
    %288 = vmatmul.f32.gmra.mxu0 %v225
    %v289 = vpop.f32.mrf.mxu0
    %v290 = vadd.f32 0.0, %v289
    %291 = vmatmul.f32.gmra.mxu0 %v228
    %v292 = vpop.f32.mrf.mxu0
    %v293 = vadd.f32 0.0, %v292
    %294 = vmatmul.f32.gmra.mxu0 %v231
    %v295 = vpop.f32.mrf.mxu0
    %v296 = vadd.f32 0.0, %v295
    %297 = vmatmul.f32.gmra.mxu0 %v234
    %v298 = vpop.f32.mrf.mxu0
    %v299 = vadd.f32 0.0, %v298
    %300 = vmatmul.f32.gmra.mxu0 %v237
    %v301 = vpop.f32.mrf.mxu0
    %v302 = vadd.f32 0.0, %v301
    %303 = vmatmul.f32.gmra.mxu0 %v240
    %v304 = vpop.f32.mrf.mxu0
    %v305 = vadd.f32 0.0, %v304
    %306 = vmatmul.f32.gmra.mxu0 %v243
    %v307 = vpop.f32.mrf.mxu0
    %v308 = vadd.f32 0.0, %v307
    %309 = vmatmul.f32.gmra.mxu0 %v246
    %v310 = vpop.f32.mrf.mxu0
    %v311 = vadd.f32 0.0, %v310
    %312 = vmatmul.f32.gmra.mxu0 %v249
    %v313 = vpop.f32.mrf.mxu0
    %v314 = vadd.f32 0.0, %v313
    %315 = vmatmul.f32.gmra.mxu0 %v252
    %v316 = vpop.f32.mrf.mxu0
    %v317 = vadd.f32 0.0, %v316
    %318 = vmatmul.f32.gmra.mxu0 %v255
    %v319 = vpop.f32.mrf.mxu0
    %v320 = vadd.f32 0.0, %v319
    %321 = vmatmul.f32.gmra.mxu0 %v258
    %v322 = vpop.f32.mrf.mxu0
    %v323 = vadd.f32 0.0, %v322
    %324 = vmatmul.f32.gmra.mxu0 %v261
    %v325 = vpop.f32.mrf.mxu0
    %v326 = vadd.f32 0.0, %v325
    %327 = vmatmul.f32.gmra.mxu0 %v264
    %v328 = vpop.f32.mrf.mxu0
    %v329 = vadd.f32 0.0, %v328
    %330 = vmatmul.f32.gmra.mxu0 %v267
    %v331 = vpop.f32.mrf.mxu0
    %v332 = vadd.f32 0.0, %v331
    %333 = vdwg.mxu0
    %v335 = vsel %vm220, %v204, 0
    %v338 = vsel %vm220, %v205, 0
    %v341 = vsel %vm220, %v206, 0
    %v344 = vsel %vm220, %v207, 0
    %v347 = vsel %vm220, %v208, 0
    %v350 = vsel %vm220, %v209, 0
    %v353 = vsel %vm220, %v210, 0
    %v356 = vsel %vm220, %v211, 0
    %v359 = vsel %vm220, %v212, 0
    %v362 = vsel %vm220, %v213, 0
    %v365 = vsel %vm220, %v214, 0
    %v368 = vsel %vm220, %v215, 0
    %v371 = vsel %vm220, %v216, 0
    %v374 = vsel %vm220, %v217, 0
    %v377 = vsel %vm220, %v218, 0
    %v380 = vsel %vm220, %v219, 0
    %382 = vmatpush.msra.mxu0 0.0
    %383 = vmatpush.msra.mxu0 0.0
    %384 = vmatpush.msra.mxu0 0.0
    %385 = vmatpush.msra.mxu0 0.0
    %386 = vmatpush.msra.mxu0 0.0
    %387 = vmatpush.msra.mxu0 0.0
    %388 = vmatpush.msra.mxu0 0.0
    %389 = vmatpush.msra.mxu0 0.0
    %390 = vmatpush.msra.mxu0 0.0
    %391 = vmatpush.msra.mxu0 0.0
    %392 = vmatpush.msra.mxu0 0.0
    %393 = vmatpush.msra.mxu0 0.0
    %394 = vmatpush.msra.mxu0 0.0
    %395 = vmatpush.msra.mxu0 0.0
    %396 = vmatpush.msra.mxu0 0.0
    %397 = vmatpush.msra.mxu0 %v117
    %398 = vmatmul.f32.gmra.mxu0 %v335
    %v399 = vpop.f32.mrf.mxu0
    %v400 = vadd.f32 0.0, %v399
    %401 = vmatmul.f32.gmra.mxu0 %v338
    %v402 = vpop.f32.mrf.mxu0
    %v403 = vadd.f32 0.0, %v402
    %404 = vmatmul.f32.gmra.mxu0 %v341
    %v405 = vpop.f32.mrf.mxu0
    %v406 = vadd.f32 0.0, %v405
    %407 = vmatmul.f32.gmra.mxu0 %v344
    %v408 = vpop.f32.mrf.mxu0
    %v409 = vadd.f32 0.0, %v408
    %410 = vmatmul.f32.gmra.mxu0 %v347
    %v411 = vpop.f32.mrf.mxu0
    %v412 = vadd.f32 0.0, %v411
    %413 = vmatmul.f32.gmra.mxu0 %v350
    %v414 = vpop.f32.mrf.mxu0
    %v415 = vadd.f32 0.0, %v414
    %416 = vmatmul.f32.gmra.mxu0 %v353
    %v417 = vpop.f32.mrf.mxu0
    %v418 = vadd.f32 0.0, %v417
    %419 = vmatmul.f32.gmra.mxu0 %v356
    %v420 = vpop.f32.mrf.mxu0
    %v421 = vadd.f32 0.0, %v420
    %422 = vmatmul.f32.gmra.mxu0 %v359
    %v423 = vpop.f32.mrf.mxu0
    %v424 = vadd.f32 0.0, %v423
    %425 = vmatmul.f32.gmra.mxu0 %v362
    %v426 = vpop.f32.mrf.mxu0
    %v427 = vadd.f32 0.0, %v426
    %428 = vmatmul.f32.gmra.mxu0 %v365
    %v429 = vpop.f32.mrf.mxu0
    %v430 = vadd.f32 0.0, %v429
    %431 = vmatmul.f32.gmra.mxu0 %v368
    %v432 = vpop.f32.mrf.mxu0
    %v433 = vadd.f32 0.0, %v432
    %434 = vmatmul.f32.gmra.mxu0 %v371
    %v435 = vpop.f32.mrf.mxu0
    %v436 = vadd.f32 0.0, %v435
    %437 = vmatmul.f32.gmra.mxu0 %v374
    %v438 = vpop.f32.mrf.mxu0
    %v439 = vadd.f32 0.0, %v438
    %440 = vmatmul.f32.gmra.mxu0 %v377
    %v441 = vpop.f32.mrf.mxu0
    %v442 = vadd.f32 0.0, %v441
    %443 = vmatmul.f32.gmra.mxu0 %v380
    %v444 = vpop.f32.mrf.mxu0
    %v445 = vadd.f32 0.0, %v444
    %446 = vdwg.mxu0
    %447 = vmatpush.msra.mxu0 0.0
    %448 = vmatpush.msra.mxu0 0.0
    %449 = vmatpush.msra.mxu0 0.0
    %450 = vmatpush.msra.mxu0 0.0
    %451 = vmatpush.msra.mxu0 0.0
    %452 = vmatpush.msra.mxu0 0.0
    %453 = vmatpush.msra.mxu0 0.0
    %454 = vmatpush.msra.mxu0 0.0
    %455 = vmatpush.msra.mxu0 0.0
    %456 = vmatpush.msra.mxu0 0.0
    %457 = vmatpush.msra.mxu0 0.0
    %458 = vmatpush.msra.mxu0 0.0
    %459 = vmatpush.msra.mxu0 0.0
    %460 = vmatpush.msra.mxu0 0.0
    %461 = vmatpush.msra.mxu0 0.0
    %462 = vmatpush.msra.mxu0 %v154
    %463 = vmatmul.f32.gmra.mxu0 %v222
    %v464 = vpop.f32.mrf.mxu0
    %v465 = vadd.f32 0.0, %v464
    %466 = vmatmul.f32.gmra.mxu0 %v225
    %v467 = vpop.f32.mrf.mxu0
    %v468 = vadd.f32 0.0, %v467
    %469 = vmatmul.f32.gmra.mxu0 %v228
    %v470 = vpop.f32.mrf.mxu0
    %v471 = vadd.f32 0.0, %v470
    %472 = vmatmul.f32.gmra.mxu0 %v231
    %v473 = vpop.f32.mrf.mxu0
    %v474 = vadd.f32 0.0, %v473
    %475 = vmatmul.f32.gmra.mxu0 %v234
    %v476 = vpop.f32.mrf.mxu0
    %v477 = vadd.f32 0.0, %v476
    %478 = vmatmul.f32.gmra.mxu0 %v237
    %v479 = vpop.f32.mrf.mxu0
    %v480 = vadd.f32 0.0, %v479
    %481 = vmatmul.f32.gmra.mxu0 %v240
    %v482 = vpop.f32.mrf.mxu0
    %v483 = vadd.f32 0.0, %v482
    %484 = vmatmul.f32.gmra.mxu0 %v243
    %v485 = vpop.f32.mrf.mxu0
    %v486 = vadd.f32 0.0, %v485
    %487 = vmatmul.f32.gmra.mxu0 %v246
    %v488 = vpop.f32.mrf.mxu0
    %v489 = vadd.f32 0.0, %v488
    %490 = vmatmul.f32.gmra.mxu0 %v249
    %v491 = vpop.f32.mrf.mxu0
    %v492 = vadd.f32 0.0, %v491
    %493 = vmatmul.f32.gmra.mxu0 %v252
    %v494 = vpop.f32.mrf.mxu0
    %v495 = vadd.f32 0.0, %v494
    %496 = vmatmul.f32.gmra.mxu0 %v255
    %v497 = vpop.f32.mrf.mxu0
    %v498 = vadd.f32 0.0, %v497
    %499 = vmatmul.f32.gmra.mxu0 %v258
    %v500 = vpop.f32.mrf.mxu0
    %v501 = vadd.f32 0.0, %v500
    %502 = vmatmul.f32.gmra.mxu0 %v261
    %v503 = vpop.f32.mrf.mxu0
    %v504 = vadd.f32 0.0, %v503
    %505 = vmatmul.f32.gmra.mxu0 %v264
    %v506 = vpop.f32.mrf.mxu0
    %v507 = vadd.f32 0.0, %v506
    %508 = vmatmul.f32.gmra.mxu0 %v267
    %v509 = vpop.f32.mrf.mxu0
    %v510 = vadd.f32 0.0, %v509
    %511 = vdwg.mxu0
    %512 = vmatpush.msra.mxu0 0.0
    %513 = vmatpush.msra.mxu0 0.0
    %514 = vmatpush.msra.mxu0 0.0
    %515 = vmatpush.msra.mxu0 0.0
    %516 = vmatpush.msra.mxu0 0.0
    %517 = vmatpush.msra.mxu0 0.0
    %518 = vmatpush.msra.mxu0 0.0
    %519 = vmatpush.msra.mxu0 0.0
    %520 = vmatpush.msra.mxu0 0.0
    %521 = vmatpush.msra.mxu0 0.0
    %522 = vmatpush.msra.mxu0 0.0
    %523 = vmatpush.msra.mxu0 0.0
    %524 = vmatpush.msra.mxu0 0.0
    %525 = vmatpush.msra.mxu0 0.0
    %526 = vmatpush.msra.mxu0 0.0
    %527 = vmatpush.msra.mxu0 %v155
    %528 = vmatmul.f32.gmra.mxu0 %v335
    %v529 = vpop.f32.mrf.mxu0
    %v530 = vadd.f32 0.0, %v529
    %531 = vmatmul.f32.gmra.mxu0 %v338
    %v532 = vpop.f32.mrf.mxu0
    %v533 = vadd.f32 0.0, %v532
    %534 = vmatmul.f32.gmra.mxu0 %v341
    %v535 = vpop.f32.mrf.mxu0
    %v536 = vadd.f32 0.0, %v535
    %537 = vmatmul.f32.gmra.mxu0 %v344
    %v538 = vpop.f32.mrf.mxu0
    %v539 = vadd.f32 0.0, %v538
    %540 = vmatmul.f32.gmra.mxu0 %v347
    %v541 = vpop.f32.mrf.mxu0
    %v542 = vadd.f32 0.0, %v541
    %543 = vmatmul.f32.gmra.mxu0 %v350
    %v544 = vpop.f32.mrf.mxu0
    %v545 = vadd.f32 0.0, %v544
    %546 = vmatmul.f32.gmra.mxu0 %v353
    %v547 = vpop.f32.mrf.mxu0
    %v548 = vadd.f32 0.0, %v547
    %549 = vmatmul.f32.gmra.mxu0 %v356
    %v550 = vpop.f32.mrf.mxu0
    %v551 = vadd.f32 0.0, %v550
    %552 = vmatmul.f32.gmra.mxu0 %v359
    %v553 = vpop.f32.mrf.mxu0
    %v554 = vadd.f32 0.0, %v553
    %555 = vmatmul.f32.gmra.mxu0 %v362
    %v556 = vpop.f32.mrf.mxu0
    %v557 = vadd.f32 0.0, %v556
    %558 = vmatmul.f32.gmra.mxu0 %v365
    %v559 = vpop.f32.mrf.mxu0
    %v560 = vadd.f32 0.0, %v559
    %561 = vmatmul.f32.gmra.mxu0 %v368
    %v562 = vpop.f32.mrf.mxu0
    %v563 = vadd.f32 0.0, %v562
    %564 = vmatmul.f32.gmra.mxu0 %v371
    %v565 = vpop.f32.mrf.mxu0
    %v566 = vadd.f32 0.0, %v565
    %567 = vmatmul.f32.gmra.mxu0 %v374
    %v568 = vpop.f32.mrf.mxu0
    %v569 = vadd.f32 0.0, %v568
    %570 = vmatmul.f32.gmra.mxu0 %v377
    %v571 = vpop.f32.mrf.mxu0
    %v572 = vadd.f32 0.0, %v571
    %573 = vmatmul.f32.gmra.mxu0 %v380
    %v574 = vpop.f32.mrf.mxu0
    %v575 = vadd.f32 0.0, %v574
    %576 = vdwg.mxu0
    %vm577 = vcmp.lt.f32.partialorder %v287, 0.155
    %vm578 = vcmp.lt.f32.partialorder %v290, 0.155
    %vm579 = vcmp.lt.f32.partialorder %v293, 0.155
    %vm580 = vcmp.lt.f32.partialorder %v296, 0.155
    %vm581 = vcmp.lt.f32.partialorder %v299, 0.155
    %vm582 = vcmp.lt.f32.partialorder %v302, 0.155
    %vm583 = vcmp.lt.f32.partialorder %v305, 0.155
    %vm584 = vcmp.lt.f32.partialorder %v308, 0.155
    %vm585 = vcmp.lt.f32.partialorder %v311, 0.155
    %vm586 = vcmp.lt.f32.partialorder %v314, 0.155
    %vm587 = vcmp.lt.f32.partialorder %v317, 0.155
    %vm588 = vcmp.lt.f32.partialorder %v320, 0.155
    %vm589 = vcmp.lt.f32.partialorder %v323, 0.155
    %vm590 = vcmp.lt.f32.partialorder %v326, 0.155
    %vm591 = vcmp.lt.f32.partialorder %v329, 0.155
    %vm592 = vcmp.lt.f32.partialorder %v332, 0.155
    %vm593 = vcmp.lt.f32.partialorder %v400, 0.155
    %vm594 = vcmp.lt.f32.partialorder %v403, 0.155
    %vm595 = vcmp.lt.f32.partialorder %v406, 0.155
    %vm596 = vcmp.lt.f32.partialorder %v409, 0.155
    %vm597 = vcmp.lt.f32.partialorder %v412, 0.155
    %vm598 = vcmp.lt.f32.partialorder %v415, 0.155
    %vm599 = vcmp.lt.f32.partialorder %v418, 0.155
    %vm600 = vcmp.lt.f32.partialorder %v421, 0.155
    %vm601 = vcmp.lt.f32.partialorder %v424, 0.155
    %vm602 = vcmp.lt.f32.partialorder %v427, 0.155
    %vm603 = vcmp.lt.f32.partialorder %v430, 0.155
    %vm604 = vcmp.lt.f32.partialorder %v433, 0.155
    %vm605 = vcmp.lt.f32.partialorder %v436, 0.155
    %vm606 = vcmp.lt.f32.partialorder %v439, 0.155
    %vm607 = vcmp.lt.f32.partialorder %v442, 0.155
    %vm608 = vcmp.lt.f32.partialorder %v445, 0.155
    %v609 = vsel %vm577, -inf, %v287
    %v610 = vsel %vm578, -inf, %v290
    %v611 = vsel %vm579, -inf, %v293
    %v612 = vsel %vm580, -inf, %v296
    %v613 = vsel %vm581, -inf, %v299
    %v614 = vsel %vm582, -inf, %v302
    %v615 = vsel %vm583, -inf, %v305
    %v616 = vsel %vm584, -inf, %v308
    %v617 = vsel %vm585, -inf, %v311
    %v618 = vsel %vm586, -inf, %v314
    %v619 = vsel %vm587, -inf, %v317
    %v620 = vsel %vm588, -inf, %v320
    %v621 = vsel %vm589, -inf, %v323
    %v622 = vsel %vm590, -inf, %v326
    %v623 = vsel %vm591, -inf, %v329
    %v624 = vsel %vm592, -inf, %v332
    %v625 = vsel %vm593, -inf, %v400
    %v626 = vsel %vm594, -inf, %v403
    %v627 = vsel %vm595, -inf, %v406
    %v628 = vsel %vm596, -inf, %v409
    %v629 = vsel %vm597, -inf, %v412
    %v630 = vsel %vm598, -inf, %v415
    %v631 = vsel %vm599, -inf, %v418
    %v632 = vsel %vm600, -inf, %v421
    %v633 = vsel %vm601, -inf, %v424
    %v634 = vsel %vm602, -inf, %v427
    %v635 = vsel %vm603, -inf, %v430
    %v636 = vsel %vm604, -inf, %v433
    %v637 = vsel %vm605, -inf, %v436
    %v638 = vsel %vm606, -inf, %v439
    %v639 = vsel %vm607, -inf, %v442
    %v640 = vsel %vm608, -inf, %v445
    %vm641 = vcmp.lt.f32.partialorder %v465, 0.155
    %vm642 = vcmp.lt.f32.partialorder %v468, 0.155
    %vm643 = vcmp.lt.f32.partialorder %v471, 0.155
    %vm644 = vcmp.lt.f32.partialorder %v474, 0.155
    %vm645 = vcmp.lt.f32.partialorder %v477, 0.155
    %vm646 = vcmp.lt.f32.partialorder %v480, 0.155
    %vm647 = vcmp.lt.f32.partialorder %v483, 0.155
    %vm648 = vcmp.lt.f32.partialorder %v486, 0.155
    %vm649 = vcmp.lt.f32.partialorder %v489, 0.155
    %vm650 = vcmp.lt.f32.partialorder %v492, 0.155
    %vm651 = vcmp.lt.f32.partialorder %v495, 0.155
    %vm652 = vcmp.lt.f32.partialorder %v498, 0.155
    %vm653 = vcmp.lt.f32.partialorder %v501, 0.155
    %vm654 = vcmp.lt.f32.partialorder %v504, 0.155
    %vm655 = vcmp.lt.f32.partialorder %v507, 0.155
    %vm656 = vcmp.lt.f32.partialorder %v510, 0.155
    %vm657 = vcmp.lt.f32.partialorder %v530, 0.155
    %vm658 = vcmp.lt.f32.partialorder %v533, 0.155
    %vm659 = vcmp.lt.f32.partialorder %v536, 0.155
    %vm660 = vcmp.lt.f32.partialorder %v539, 0.155
    %vm661 = vcmp.lt.f32.partialorder %v542, 0.155
    %vm662 = vcmp.lt.f32.partialorder %v545, 0.155
    %vm663 = vcmp.lt.f32.partialorder %v548, 0.155
    %vm664 = vcmp.lt.f32.partialorder %v551, 0.155
    %vm665 = vcmp.lt.f32.partialorder %v554, 0.155
    %vm666 = vcmp.lt.f32.partialorder %v557, 0.155
    %vm667 = vcmp.lt.f32.partialorder %v560, 0.155
    %vm668 = vcmp.lt.f32.partialorder %v563, 0.155
    %vm669 = vcmp.lt.f32.partialorder %v566, 0.155
    %vm670 = vcmp.lt.f32.partialorder %v569, 0.155
    %vm671 = vcmp.lt.f32.partialorder %v572, 0.155
    %vm672 = vcmp.lt.f32.partialorder %v575, 0.155
    %v673 = vsel %vm641, -inf, %v465
    %v674 = vsel %vm642, -inf, %v468
    %v675 = vsel %vm643, -inf, %v471
    %v676 = vsel %vm644, -inf, %v474
    %v677 = vsel %vm645, -inf, %v477
    %v678 = vsel %vm646, -inf, %v480
    %v679 = vsel %vm647, -inf, %v483
    %v680 = vsel %vm648, -inf, %v486
    %v681 = vsel %vm649, -inf, %v489
    %v682 = vsel %vm650, -inf, %v492
    %v683 = vsel %vm651, -inf, %v495
    %v684 = vsel %vm652, -inf, %v498
    %v685 = vsel %vm653, -inf, %v501
    %v686 = vsel %vm654, -inf, %v504
    %v687 = vsel %vm655, -inf, %v507
    %v688 = vsel %vm656, -inf, %v510
    %v689 = vsel %vm657, -inf, %v530
    %v690 = vsel %vm658, -inf, %v533
    %v691 = vsel %vm659, -inf, %v536
    %v692 = vsel %vm660, -inf, %v539
    %v693 = vsel %vm661, -inf, %v542
    %v694 = vsel %vm662, -inf, %v545
    %v695 = vsel %vm663, -inf, %v548
    %v696 = vsel %vm664, -inf, %v551
    %v697 = vsel %vm665, -inf, %v554
    %v698 = vsel %vm666, -inf, %v557
    %v699 = vsel %vm667, -inf, %v560
    %v700 = vsel %vm668, -inf, %v563
    %v701 = vsel %vm669, -inf, %v566
    %v702 = vsel %vm670, -inf, %v569
    %v703 = vsel %vm671, -inf, %v572
    %v704 = vsel %vm672, -inf, %v575
    %v705 = vsel %vm81, %v609, -inf
    %706 = vmax.xlane.f32.xlu0 %v705
    %v707 = vpop.xlane.xlu0 %706
    %v708 = vsel %vm81, %v610, -inf
    %709 = vmax.xlane.f32.xlu0 %v708
    %v710 = vpop.xlane.xlu0 %709
    %v711 = vsel %vm81, %v611, -inf
    %712 = vmax.xlane.f32.xlu0 %v711
    %v713 = vpop.xlane.xlu0 %712
    %v714 = vsel %vm81, %v612, -inf
    %715 = vmax.xlane.f32.xlu0 %v714
    %v716 = vpop.xlane.xlu0 %715
    %v717 = vsel %vm81, %v613, -inf
    %718 = vmax.xlane.f32.xlu0 %v717
    %v719 = vpop.xlane.xlu0 %718
    %v720 = vsel %vm81, %v614, -inf
    %721 = vmax.xlane.f32.xlu0 %v720
    %v722 = vpop.xlane.xlu0 %721
    %v723 = vsel %vm81, %v615, -inf
    %724 = vmax.xlane.f32.xlu0 %v723
    %v725 = vpop.xlane.xlu0 %724
    %v726 = vsel %vm81, %v616, -inf
    %727 = vmax.xlane.f32.xlu0 %v726
    %v728 = vpop.xlane.xlu0 %727
    %v729 = vsel %vm81, %v617, -inf
    %730 = vmax.xlane.f32.xlu0 %v729
    %v731 = vpop.xlane.xlu0 %730
    %v732 = vsel %vm81, %v618, -inf
    %733 = vmax.xlane.f32.xlu0 %v732
    %v734 = vpop.xlane.xlu0 %733
    %v735 = vsel %vm81, %v619, -inf
    %736 = vmax.xlane.f32.xlu0 %v735
    %v737 = vpop.xlane.xlu0 %736
    %v738 = vsel %vm81, %v620, -inf
    %739 = vmax.xlane.f32.xlu0 %v738
    %v740 = vpop.xlane.xlu0 %739
    %v741 = vsel %vm81, %v621, -inf
    %742 = vmax.xlane.f32.xlu0 %v741
    %v743 = vpop.xlane.xlu0 %742
    %v744 = vsel %vm81, %v622, -inf
    %745 = vmax.xlane.f32.xlu0 %v744
    %v746 = vpop.xlane.xlu0 %745
    %v747 = vsel %vm81, %v623, -inf
    %748 = vmax.xlane.f32.xlu0 %v747
    %v749 = vpop.xlane.xlu0 %748
    %v750 = vsel %vm81, %v624, -inf
    %751 = vmax.xlane.f32.xlu0 %v750
    %v752 = vpop.xlane.xlu0 %751
    %v753 = vsel %vm81, %v625, -inf
    %754 = vmax.xlane.f32.xlu0 %v753
    %v755 = vpop.xlane.xlu0 %754
    %v756 = vsel %vm81, %v626, -inf
    %757 = vmax.xlane.f32.xlu0 %v756
    %v758 = vpop.xlane.xlu0 %757
    %v759 = vsel %vm81, %v627, -inf
    %760 = vmax.xlane.f32.xlu0 %v759
    %v761 = vpop.xlane.xlu0 %760
    %v762 = vsel %vm81, %v628, -inf
    %763 = vmax.xlane.f32.xlu0 %v762
    %v764 = vpop.xlane.xlu0 %763
    %v765 = vsel %vm81, %v629, -inf
    %766 = vmax.xlane.f32.xlu0 %v765
    %v767 = vpop.xlane.xlu0 %766
    %v768 = vsel %vm81, %v630, -inf
    %769 = vmax.xlane.f32.xlu0 %v768
    %v770 = vpop.xlane.xlu0 %769
    %v771 = vsel %vm81, %v631, -inf
    %772 = vmax.xlane.f32.xlu0 %v771
    %v773 = vpop.xlane.xlu0 %772
    %v774 = vsel %vm81, %v632, -inf
    %775 = vmax.xlane.f32.xlu0 %v774
    %v776 = vpop.xlane.xlu0 %775
    %v777 = vsel %vm81, %v633, -inf
    %778 = vmax.xlane.f32.xlu0 %v777
    %v779 = vpop.xlane.xlu0 %778
    %v780 = vsel %vm81, %v634, -inf
    %781 = vmax.xlane.f32.xlu0 %v780
    %v782 = vpop.xlane.xlu0 %781
    %v783 = vsel %vm81, %v635, -inf
    %784 = vmax.xlane.f32.xlu0 %v783
    %v785 = vpop.xlane.xlu0 %784
    %v786 = vsel %vm81, %v636, -inf
    %787 = vmax.xlane.f32.xlu0 %v786
    %v788 = vpop.xlane.xlu0 %787
    %v789 = vsel %vm81, %v637, -inf
    %790 = vmax.xlane.f32.xlu0 %v789
    %v791 = vpop.xlane.xlu0 %790
    %v792 = vsel %vm81, %v638, -inf
    %793 = vmax.xlane.f32.xlu0 %v792
    %v794 = vpop.xlane.xlu0 %793
    %v795 = vsel %vm81, %v639, -inf
    %796 = vmax.xlane.f32.xlu0 %v795
    %v797 = vpop.xlane.xlu0 %796
    %v798 = vsel %vm81, %v640, -inf
    %799 = vmax.xlane.f32.xlu0 %v798
    %v800 = vpop.xlane.xlu0 %799
    %v801 = vsel %vm81, %v673, -inf
    %802 = vmax.xlane.f32.xlu0 %v801
    %v803 = vpop.xlane.xlu0 %802
    %v804 = vsel %vm81, %v674, -inf
    %805 = vmax.xlane.f32.xlu0 %v804
    %v806 = vpop.xlane.xlu0 %805
    %v807 = vsel %vm81, %v675, -inf
    %808 = vmax.xlane.f32.xlu0 %v807
    %v809 = vpop.xlane.xlu0 %808
    %v810 = vsel %vm81, %v676, -inf
    %811 = vmax.xlane.f32.xlu0 %v810
    %v812 = vpop.xlane.xlu0 %811
    %v813 = vsel %vm81, %v677, -inf
    %814 = vmax.xlane.f32.xlu0 %v813
    %v815 = vpop.xlane.xlu0 %814
    %v816 = vsel %vm81, %v678, -inf
    %817 = vmax.xlane.f32.xlu0 %v816
    %v818 = vpop.xlane.xlu0 %817
    %v819 = vsel %vm81, %v679, -inf
    %820 = vmax.xlane.f32.xlu0 %v819
    %v821 = vpop.xlane.xlu0 %820
    %v822 = vsel %vm81, %v680, -inf
    %823 = vmax.xlane.f32.xlu0 %v822
    %v824 = vpop.xlane.xlu0 %823
    %v825 = vsel %vm81, %v681, -inf
    %826 = vmax.xlane.f32.xlu0 %v825
    %v827 = vpop.xlane.xlu0 %826
    %v828 = vsel %vm81, %v682, -inf
    %829 = vmax.xlane.f32.xlu0 %v828
    %v830 = vpop.xlane.xlu0 %829
    %v831 = vsel %vm81, %v683, -inf
    %832 = vmax.xlane.f32.xlu0 %v831
    %v833 = vpop.xlane.xlu0 %832
    %v834 = vsel %vm81, %v684, -inf
    %835 = vmax.xlane.f32.xlu0 %v834
    %v836 = vpop.xlane.xlu0 %835
    %v837 = vsel %vm81, %v685, -inf
    %838 = vmax.xlane.f32.xlu0 %v837
    %v839 = vpop.xlane.xlu0 %838
    %v840 = vsel %vm81, %v686, -inf
    %841 = vmax.xlane.f32.xlu0 %v840
    %v842 = vpop.xlane.xlu0 %841
    %v843 = vsel %vm81, %v687, -inf
    %844 = vmax.xlane.f32.xlu0 %v843
    %v845 = vpop.xlane.xlu0 %844
    %v846 = vsel %vm81, %v688, -inf
    %847 = vmax.xlane.f32.xlu0 %v846
    %v848 = vpop.xlane.xlu0 %847
    %v849 = vsel %vm81, %v689, -inf
    %850 = vmax.xlane.f32.xlu0 %v849
    %v851 = vpop.xlane.xlu0 %850
    %v852 = vsel %vm81, %v690, -inf
    %853 = vmax.xlane.f32.xlu0 %v852
    %v854 = vpop.xlane.xlu0 %853
    %v855 = vsel %vm81, %v691, -inf
    %856 = vmax.xlane.f32.xlu0 %v855
    %v857 = vpop.xlane.xlu0 %856
    %v858 = vsel %vm81, %v692, -inf
    %859 = vmax.xlane.f32.xlu0 %v858
    %v860 = vpop.xlane.xlu0 %859
    %v861 = vsel %vm81, %v693, -inf
    %862 = vmax.xlane.f32.xlu0 %v861
    %v863 = vpop.xlane.xlu0 %862
    %v864 = vsel %vm81, %v694, -inf
    %865 = vmax.xlane.f32.xlu0 %v864
    %v866 = vpop.xlane.xlu0 %865
    %v867 = vsel %vm81, %v695, -inf
    %868 = vmax.xlane.f32.xlu0 %v867
    %v869 = vpop.xlane.xlu0 %868
    %v870 = vsel %vm81, %v696, -inf
    %871 = vmax.xlane.f32.xlu0 %v870
    %v872 = vpop.xlane.xlu0 %871
    %v873 = vsel %vm81, %v697, -inf
    %874 = vmax.xlane.f32.xlu0 %v873
    %v875 = vpop.xlane.xlu0 %874
    %v876 = vsel %vm81, %v698, -inf
    %877 = vmax.xlane.f32.xlu0 %v876
    %v878 = vpop.xlane.xlu0 %877
    %v879 = vsel %vm81, %v699, -inf
    %880 = vmax.xlane.f32.xlu0 %v879
    %v881 = vpop.xlane.xlu0 %880
    %v882 = vsel %vm81, %v700, -inf
    %883 = vmax.xlane.f32.xlu0 %v882
    %v884 = vpop.xlane.xlu0 %883
    %v885 = vsel %vm81, %v701, -inf
    %886 = vmax.xlane.f32.xlu0 %v885
    %v887 = vpop.xlane.xlu0 %886
    %v888 = vsel %vm81, %v702, -inf
    %889 = vmax.xlane.f32.xlu0 %v888
    %v890 = vpop.xlane.xlu0 %889
    %v891 = vsel %vm81, %v703, -inf
    %892 = vmax.xlane.f32.xlu0 %v891
    %v893 = vpop.xlane.xlu0 %892
    %v894 = vsel %vm81, %v704, -inf
    %895 = vmax.xlane.f32.xlu0 %v894
    %v896 = vpop.xlane.xlu0 %895
    %v897 = vmax.f32 %v707, %v803
    %v898 = vmax.f32 %v710, %v806
    %v899 = vmax.f32 %v713, %v809
    %v900 = vmax.f32 %v716, %v812
    %v901 = vmax.f32 %v719, %v815
    %v902 = vmax.f32 %v722, %v818
    %v903 = vmax.f32 %v725, %v821
    %v904 = vmax.f32 %v728, %v824
    %v905 = vmax.f32 %v731, %v827
    %v906 = vmax.f32 %v734, %v830
    %v907 = vmax.f32 %v737, %v833
    %v908 = vmax.f32 %v740, %v836
    %v909 = vmax.f32 %v743, %v839
    %v910 = vmax.f32 %v746, %v842
    %v911 = vmax.f32 %v749, %v845
    %v912 = vmax.f32 %v752, %v848
    %v913 = vmax.f32 %v755, %v851
    %v914 = vmax.f32 %v758, %v854
    %v915 = vmax.f32 %v761, %v857
    %v916 = vmax.f32 %v764, %v860
    %v917 = vmax.f32 %v767, %v863
    %v918 = vmax.f32 %v770, %v866
    %v919 = vmax.f32 %v773, %v869
    %v920 = vmax.f32 %v776, %v872
    %v921 = vmax.f32 %v779, %v875
    %v922 = vmax.f32 %v782, %v878
    %v923 = vmax.f32 %v785, %v881
    %v924 = vmax.f32 %v788, %v884
    %v925 = vmax.f32 %v791, %v887
    %v926 = vmax.f32 %v794, %v890
    %v927 = vmax.f32 %v797, %v893
    %v928 = vmax.f32 %v800, %v896
    %v929 = vlaneseq
    %v930 = vand.u32 %v929, 127
    %vm931 = vcmp.eq.f32.partialorder %v609, %v897
    %vm932 = vcmp.eq.f32.partialorder %v610, %v898
    %vm933 = vcmp.eq.f32.partialorder %v611, %v899
    %vm934 = vcmp.eq.f32.partialorder %v612, %v900
    %vm935 = vcmp.eq.f32.partialorder %v613, %v901
    %vm936 = vcmp.eq.f32.partialorder %v614, %v902
    %vm937 = vcmp.eq.f32.partialorder %v615, %v903
    %vm938 = vcmp.eq.f32.partialorder %v616, %v904
    %vm939 = vcmp.eq.f32.partialorder %v617, %v905
    %vm940 = vcmp.eq.f32.partialorder %v618, %v906
    %vm941 = vcmp.eq.f32.partialorder %v619, %v907
    %vm942 = vcmp.eq.f32.partialorder %v620, %v908
    %vm943 = vcmp.eq.f32.partialorder %v621, %v909
    %vm944 = vcmp.eq.f32.partialorder %v622, %v910
    %vm945 = vcmp.eq.f32.partialorder %v623, %v911
    %vm946 = vcmp.eq.f32.partialorder %v624, %v912
    %vm947 = vcmp.eq.f32.partialorder %v625, %v913
    %vm948 = vcmp.eq.f32.partialorder %v626, %v914
    %vm949 = vcmp.eq.f32.partialorder %v627, %v915
    %vm950 = vcmp.eq.f32.partialorder %v628, %v916
    %vm951 = vcmp.eq.f32.partialorder %v629, %v917
    %vm952 = vcmp.eq.f32.partialorder %v630, %v918
    %vm953 = vcmp.eq.f32.partialorder %v631, %v919
    %vm954 = vcmp.eq.f32.partialorder %v632, %v920
    %vm955 = vcmp.eq.f32.partialorder %v633, %v921
    %vm956 = vcmp.eq.f32.partialorder %v634, %v922
    %vm957 = vcmp.eq.f32.partialorder %v635, %v923
    %vm958 = vcmp.eq.f32.partialorder %v636, %v924
    %vm959 = vcmp.eq.f32.partialorder %v637, %v925
    %vm960 = vcmp.eq.f32.partialorder %v638, %v926
    %vm961 = vcmp.eq.f32.partialorder %v639, %v927
    %vm962 = vcmp.eq.f32.partialorder %v640, %v928
    %v963 = vmul.u32 %v930, 2
    %v964 = vsel %vm931, %v963, 128
    %v965 = vsel %vm932, %v963, 128
    %v966 = vsel %vm933, %v963, 128
    %v967 = vsel %vm934, %v963, 128
    %v968 = vsel %vm935, %v963, 128
    %v969 = vsel %vm936, %v963, 128
    %v970 = vsel %vm937, %v963, 128
    %v971 = vsel %vm938, %v963, 128
    %v972 = vsel %vm939, %v963, 128
    %v973 = vsel %vm940, %v963, 128
    %v974 = vsel %vm941, %v963, 128
    %v975 = vsel %vm942, %v963, 128
    %v976 = vsel %vm943, %v963, 128
    %v977 = vsel %vm944, %v963, 128
    %v978 = vsel %vm945, %v963, 128
    %v979 = vsel %vm946, %v963, 128
    %v980 = vsel %vm947, %v963, 128
    %v981 = vsel %vm948, %v963, 128
    %v982 = vsel %vm949, %v963, 128
    %v983 = vsel %vm950, %v963, 128
    %v984 = vsel %vm951, %v963, 128
    %v985 = vsel %vm952, %v963, 128
    %v986 = vsel %vm953, %v963, 128
    %v987 = vsel %vm954, %v963, 128
    %v988 = vsel %vm955, %v963, 128
    %v989 = vsel %vm956, %v963, 128
    %v990 = vsel %vm957, %v963, 128
    %v991 = vsel %vm958, %v963, 128
    %v992 = vsel %vm959, %v963, 128
    %v993 = vsel %vm960, %v963, 128
    %v994 = vsel %vm961, %v963, 128
    %v995 = vsel %vm962, %v963, 128
    %v996 = vsel %vm81, %v964, 2147483647
    %v997 = vand.u32 %v996, 65535
    %v998 = vshra.s32 %v996, 16
    %v999 = vcvt.s32.f32 %v997
    %v1000 = vcvt.s32.f32 %v998
    %1001 = vmin.xlane.f32.xlu0 %v1000
    %v1002 = vpop.xlane.xlu0 %1001
    %vm1003 = vcmp.eq.f32.partialorder %v1000, %v1002
    %v1004 = vsel %vm1003, %v999, inf
    %1005 = vmin.xlane.f32.xlu0 %v1004
    %v1006 = vpop.xlane.xlu0 %1005
    %v1007 = vcvt.f32.s32 %v1006
    %v1008 = vcvt.f32.s32 %v1002
    %v1009 = vshll.u32 %v1008, 16
    %v1010 = vadd.s32 %v1009, %v1007
    %v1011 = vsel %vm81, %v965, 2147483647
    %v1012 = vand.u32 %v1011, 65535
    %v1013 = vshra.s32 %v1011, 16
    %v1014 = vcvt.s32.f32 %v1012
    %v1015 = vcvt.s32.f32 %v1013
    %1016 = vmin.xlane.f32.xlu0 %v1015
    %v1017 = vpop.xlane.xlu0 %1016
    %vm1018 = vcmp.eq.f32.partialorder %v1015, %v1017
    %v1019 = vsel %vm1018, %v1014, inf
    %1020 = vmin.xlane.f32.xlu0 %v1019
    %v1021 = vpop.xlane.xlu0 %1020
    %v1022 = vcvt.f32.s32 %v1021
    %v1023 = vcvt.f32.s32 %v1017
    %v1024 = vshll.u32 %v1023, 16
    %v1025 = vadd.s32 %v1024, %v1022
    %v1026 = vsel %vm81, %v966, 2147483647
    %v1027 = vand.u32 %v1026, 65535
    %v1028 = vshra.s32 %v1026, 16
    %v1029 = vcvt.s32.f32 %v1027
    %v1030 = vcvt.s32.f32 %v1028
    %1031 = vmin.xlane.f32.xlu0 %v1030
    %v1032 = vpop.xlane.xlu0 %1031
    %vm1033 = vcmp.eq.f32.partialorder %v1030, %v1032
    %v1034 = vsel %vm1033, %v1029, inf
    %1035 = vmin.xlane.f32.xlu0 %v1034
    %v1036 = vpop.xlane.xlu0 %1035
    %v1037 = vcvt.f32.s32 %v1036
    %v1038 = vcvt.f32.s32 %v1032
    %v1039 = vshll.u32 %v1038, 16
    %v1040 = vadd.s32 %v1039, %v1037
    %v1041 = vsel %vm81, %v967, 2147483647
    %v1042 = vand.u32 %v1041, 65535
    %v1043 = vshra.s32 %v1041, 16
    %v1044 = vcvt.s32.f32 %v1042
    %v1045 = vcvt.s32.f32 %v1043
    %1046 = vmin.xlane.f32.xlu0 %v1045
    %v1047 = vpop.xlane.xlu0 %1046
    %vm1048 = vcmp.eq.f32.partialorder %v1045, %v1047
    %v1049 = vsel %vm1048, %v1044, inf
    %1050 = vmin.xlane.f32.xlu0 %v1049
    %v1051 = vpop.xlane.xlu0 %1050
    %v1052 = vcvt.f32.s32 %v1051
    %v1053 = vcvt.f32.s32 %v1047
    %v1054 = vshll.u32 %v1053, 16
    %v1055 = vadd.s32 %v1054, %v1052
    %v1056 = vsel %vm81, %v968, 2147483647
    %v1057 = vand.u32 %v1056, 65535
    %v1058 = vshra.s32 %v1056, 16
    %v1059 = vcvt.s32.f32 %v1057
    %v1060 = vcvt.s32.f32 %v1058
    %1061 = vmin.xlane.f32.xlu0 %v1060
    %v1062 = vpop.xlane.xlu0 %1061
    %vm1063 = vcmp.eq.f32.partialorder %v1060, %v1062
    %v1064 = vsel %vm1063, %v1059, inf
    %1065 = vmin.xlane.f32.xlu0 %v1064
    %v1066 = vpop.xlane.xlu0 %1065
    %v1067 = vcvt.f32.s32 %v1066
    %v1068 = vcvt.f32.s32 %v1062
    %v1069 = vshll.u32 %v1068, 16
    %v1070 = vadd.s32 %v1069, %v1067
    %v1071 = vsel %vm81, %v969, 2147483647
    %v1072 = vand.u32 %v1071, 65535
    %v1073 = vshra.s32 %v1071, 16
    %v1074 = vcvt.s32.f32 %v1072
    %v1075 = vcvt.s32.f32 %v1073
    %1076 = vmin.xlane.f32.xlu0 %v1075
    %v1077 = vpop.xlane.xlu0 %1076
    %vm1078 = vcmp.eq.f32.partialorder %v1075, %v1077
    %v1079 = vsel %vm1078, %v1074, inf
    %1080 = vmin.xlane.f32.xlu0 %v1079
    %v1081 = vpop.xlane.xlu0 %1080
    %v1082 = vcvt.f32.s32 %v1081
    %v1083 = vcvt.f32.s32 %v1077
    %v1084 = vshll.u32 %v1083, 16
    %v1085 = vadd.s32 %v1084, %v1082
    %v1086 = vsel %vm81, %v970, 2147483647
    %v1087 = vand.u32 %v1086, 65535
    %v1088 = vshra.s32 %v1086, 16
    %v1089 = vcvt.s32.f32 %v1087
    %v1090 = vcvt.s32.f32 %v1088
    %1091 = vmin.xlane.f32.xlu0 %v1090
    %v1092 = vpop.xlane.xlu0 %1091
    %vm1093 = vcmp.eq.f32.partialorder %v1090, %v1092
    %v1094 = vsel %vm1093, %v1089, inf
    %1095 = vmin.xlane.f32.xlu0 %v1094
    %v1096 = vpop.xlane.xlu0 %1095
    %v1097 = vcvt.f32.s32 %v1096
    %v1098 = vcvt.f32.s32 %v1092
    %v1099 = vshll.u32 %v1098, 16
    %v1100 = vadd.s32 %v1099, %v1097
    %v1101 = vsel %vm81, %v971, 2147483647
    %v1102 = vand.u32 %v1101, 65535
    %v1103 = vshra.s32 %v1101, 16
    %v1104 = vcvt.s32.f32 %v1102
    %v1105 = vcvt.s32.f32 %v1103
    %1106 = vmin.xlane.f32.xlu0 %v1105
    %v1107 = vpop.xlane.xlu0 %1106
    %vm1108 = vcmp.eq.f32.partialorder %v1105, %v1107
    %v1109 = vsel %vm1108, %v1104, inf
    %1110 = vmin.xlane.f32.xlu0 %v1109
    %v1111 = vpop.xlane.xlu0 %1110
    %v1112 = vcvt.f32.s32 %v1111
    %v1113 = vcvt.f32.s32 %v1107
    %v1114 = vshll.u32 %v1113, 16
    %v1115 = vadd.s32 %v1114, %v1112
    %v1116 = vsel %vm81, %v972, 2147483647
    %v1117 = vand.u32 %v1116, 65535
    %v1118 = vshra.s32 %v1116, 16
    %v1119 = vcvt.s32.f32 %v1117
    %v1120 = vcvt.s32.f32 %v1118
    %1121 = vmin.xlane.f32.xlu0 %v1120
    %v1122 = vpop.xlane.xlu0 %1121
    %vm1123 = vcmp.eq.f32.partialorder %v1120, %v1122
    %v1124 = vsel %vm1123, %v1119, inf
    %1125 = vmin.xlane.f32.xlu0 %v1124
    %v1126 = vpop.xlane.xlu0 %1125
    %v1127 = vcvt.f32.s32 %v1126
    %v1128 = vcvt.f32.s32 %v1122
    %v1129 = vshll.u32 %v1128, 16
    %v1130 = vadd.s32 %v1129, %v1127
    %v1131 = vsel %vm81, %v973, 2147483647
    %v1132 = vand.u32 %v1131, 65535
    %v1133 = vshra.s32 %v1131, 16
    %v1134 = vcvt.s32.f32 %v1132
    %v1135 = vcvt.s32.f32 %v1133
    %1136 = vmin.xlane.f32.xlu0 %v1135
    %v1137 = vpop.xlane.xlu0 %1136
    %vm1138 = vcmp.eq.f32.partialorder %v1135, %v1137
    %v1139 = vsel %vm1138, %v1134, inf
    %1140 = vmin.xlane.f32.xlu0 %v1139
    %v1141 = vpop.xlane.xlu0 %1140
    %v1142 = vcvt.f32.s32 %v1141
    %v1143 = vcvt.f32.s32 %v1137
    %v1144 = vshll.u32 %v1143, 16
    %v1145 = vadd.s32 %v1144, %v1142
    %v1146 = vsel %vm81, %v974, 2147483647
    %v1147 = vand.u32 %v1146, 65535
    %v1148 = vshra.s32 %v1146, 16
    %v1149 = vcvt.s32.f32 %v1147
    %v1150 = vcvt.s32.f32 %v1148
    %1151 = vmin.xlane.f32.xlu0 %v1150
    %v1152 = vpop.xlane.xlu0 %1151
    %vm1153 = vcmp.eq.f32.partialorder %v1150, %v1152
    %v1154 = vsel %vm1153, %v1149, inf
    %1155 = vmin.xlane.f32.xlu0 %v1154
    %v1156 = vpop.xlane.xlu0 %1155
    %v1157 = vcvt.f32.s32 %v1156
    %v1158 = vcvt.f32.s32 %v1152
    %v1159 = vshll.u32 %v1158, 16
    %v1160 = vadd.s32 %v1159, %v1157
    %v1161 = vsel %vm81, %v975, 2147483647
    %v1162 = vand.u32 %v1161, 65535
    %v1163 = vshra.s32 %v1161, 16
    %v1164 = vcvt.s32.f32 %v1162
    %v1165 = vcvt.s32.f32 %v1163
    %1166 = vmin.xlane.f32.xlu0 %v1165
    %v1167 = vpop.xlane.xlu0 %1166
    %vm1168 = vcmp.eq.f32.partialorder %v1165, %v1167
    %v1169 = vsel %vm1168, %v1164, inf
    %1170 = vmin.xlane.f32.xlu0 %v1169
    %v1171 = vpop.xlane.xlu0 %1170
    %v1172 = vcvt.f32.s32 %v1171
    %v1173 = vcvt.f32.s32 %v1167
    %v1174 = vshll.u32 %v1173, 16
    %v1175 = vadd.s32 %v1174, %v1172
    %v1176 = vsel %vm81, %v976, 2147483647
    %v1177 = vand.u32 %v1176, 65535
    %v1178 = vshra.s32 %v1176, 16
    %v1179 = vcvt.s32.f32 %v1177
    %v1180 = vcvt.s32.f32 %v1178
    %1181 = vmin.xlane.f32.xlu0 %v1180
    %v1182 = vpop.xlane.xlu0 %1181
    %vm1183 = vcmp.eq.f32.partialorder %v1180, %v1182
    %v1184 = vsel %vm1183, %v1179, inf
    %1185 = vmin.xlane.f32.xlu0 %v1184
    %v1186 = vpop.xlane.xlu0 %1185
    %v1187 = vcvt.f32.s32 %v1186
    %v1188 = vcvt.f32.s32 %v1182
    %v1189 = vshll.u32 %v1188, 16
    %v1190 = vadd.s32 %v1189, %v1187
    %v1191 = vsel %vm81, %v977, 2147483647
    %v1192 = vand.u32 %v1191, 65535
    %v1193 = vshra.s32 %v1191, 16
    %v1194 = vcvt.s32.f32 %v1192
    %v1195 = vcvt.s32.f32 %v1193
    %1196 = vmin.xlane.f32.xlu0 %v1195
    %v1197 = vpop.xlane.xlu0 %1196
    %vm1198 = vcmp.eq.f32.partialorder %v1195, %v1197
    %v1199 = vsel %vm1198, %v1194, inf
    %1200 = vmin.xlane.f32.xlu0 %v1199
    %v1201 = vpop.xlane.xlu0 %1200
    %v1202 = vcvt.f32.s32 %v1201
    %v1203 = vcvt.f32.s32 %v1197
    %v1204 = vshll.u32 %v1203, 16
    %v1205 = vadd.s32 %v1204, %v1202
    %v1206 = vsel %vm81, %v978, 2147483647
    %v1207 = vand.u32 %v1206, 65535
    %v1208 = vshra.s32 %v1206, 16
    %v1209 = vcvt.s32.f32 %v1207
    %v1210 = vcvt.s32.f32 %v1208
    %1211 = vmin.xlane.f32.xlu0 %v1210
    %v1212 = vpop.xlane.xlu0 %1211
    %vm1213 = vcmp.eq.f32.partialorder %v1210, %v1212
    %v1214 = vsel %vm1213, %v1209, inf
    %1215 = vmin.xlane.f32.xlu0 %v1214
    %v1216 = vpop.xlane.xlu0 %1215
    %v1217 = vcvt.f32.s32 %v1216
    %v1218 = vcvt.f32.s32 %v1212
    %v1219 = vshll.u32 %v1218, 16
    %v1220 = vadd.s32 %v1219, %v1217
    %v1221 = vsel %vm81, %v979, 2147483647
    %v1222 = vand.u32 %v1221, 65535
    %v1223 = vshra.s32 %v1221, 16
    %v1224 = vcvt.s32.f32 %v1222
    %v1225 = vcvt.s32.f32 %v1223
    %1226 = vmin.xlane.f32.xlu0 %v1225
    %v1227 = vpop.xlane.xlu0 %1226
    %vm1228 = vcmp.eq.f32.partialorder %v1225, %v1227
    %v1229 = vsel %vm1228, %v1224, inf
    %1230 = vmin.xlane.f32.xlu0 %v1229
    %v1231 = vpop.xlane.xlu0 %1230
    %v1232 = vcvt.f32.s32 %v1231
    %v1233 = vcvt.f32.s32 %v1227
    %v1234 = vshll.u32 %v1233, 16
    %v1235 = vadd.s32 %v1234, %v1232
    %v1236 = vsel %vm81, %v980, 2147483647
    %v1237 = vand.u32 %v1236, 65535
    %v1238 = vshra.s32 %v1236, 16
    %v1239 = vcvt.s32.f32 %v1237
    %v1240 = vcvt.s32.f32 %v1238
    %1241 = vmin.xlane.f32.xlu0 %v1240
    %v1242 = vpop.xlane.xlu0 %1241
    %vm1243 = vcmp.eq.f32.partialorder %v1240, %v1242
    %v1244 = vsel %vm1243, %v1239, inf
    %1245 = vmin.xlane.f32.xlu0 %v1244
    %v1246 = vpop.xlane.xlu0 %1245
    %v1247 = vcvt.f32.s32 %v1246
    %v1248 = vcvt.f32.s32 %v1242
    %v1249 = vshll.u32 %v1248, 16
    %v1250 = vadd.s32 %v1249, %v1247
    %v1251 = vsel %vm81, %v981, 2147483647
    %v1252 = vand.u32 %v1251, 65535
    %v1253 = vshra.s32 %v1251, 16
    %v1254 = vcvt.s32.f32 %v1252
    %v1255 = vcvt.s32.f32 %v1253
    %1256 = vmin.xlane.f32.xlu0 %v1255
    %v1257 = vpop.xlane.xlu0 %1256
    %vm1258 = vcmp.eq.f32.partialorder %v1255, %v1257
    %v1259 = vsel %vm1258, %v1254, inf
    %1260 = vmin.xlane.f32.xlu0 %v1259
    %v1261 = vpop.xlane.xlu0 %1260
    %v1262 = vcvt.f32.s32 %v1261
    %v1263 = vcvt.f32.s32 %v1257
    %v1264 = vshll.u32 %v1263, 16
    %v1265 = vadd.s32 %v1264, %v1262
    %v1266 = vsel %vm81, %v982, 2147483647
    %v1267 = vand.u32 %v1266, 65535
    %v1268 = vshra.s32 %v1266, 16
    %v1269 = vcvt.s32.f32 %v1267
    %v1270 = vcvt.s32.f32 %v1268
    %1271 = vmin.xlane.f32.xlu0 %v1270
    %v1272 = vpop.xlane.xlu0 %1271
    %vm1273 = vcmp.eq.f32.partialorder %v1270, %v1272
    %v1274 = vsel %vm1273, %v1269, inf
    %1275 = vmin.xlane.f32.xlu0 %v1274
    %v1276 = vpop.xlane.xlu0 %1275
    %v1277 = vcvt.f32.s32 %v1276
    %v1278 = vcvt.f32.s32 %v1272
    %v1279 = vshll.u32 %v1278, 16
    %v1280 = vadd.s32 %v1279, %v1277
    %v1281 = vsel %vm81, %v983, 2147483647
    %v1282 = vand.u32 %v1281, 65535
    %v1283 = vshra.s32 %v1281, 16
    %v1284 = vcvt.s32.f32 %v1282
    %v1285 = vcvt.s32.f32 %v1283
    %1286 = vmin.xlane.f32.xlu0 %v1285
    %v1287 = vpop.xlane.xlu0 %1286
    %vm1288 = vcmp.eq.f32.partialorder %v1285, %v1287
    %v1289 = vsel %vm1288, %v1284, inf
    %1290 = vmin.xlane.f32.xlu0 %v1289
    %v1291 = vpop.xlane.xlu0 %1290
    %v1292 = vcvt.f32.s32 %v1291
    %v1293 = vcvt.f32.s32 %v1287
    %v1294 = vshll.u32 %v1293, 16
    %v1295 = vadd.s32 %v1294, %v1292
    %v1296 = vsel %vm81, %v984, 2147483647
    %v1297 = vand.u32 %v1296, 65535
    %v1298 = vshra.s32 %v1296, 16
    %v1299 = vcvt.s32.f32 %v1297
    %v1300 = vcvt.s32.f32 %v1298
    %1301 = vmin.xlane.f32.xlu0 %v1300
    %v1302 = vpop.xlane.xlu0 %1301
    %vm1303 = vcmp.eq.f32.partialorder %v1300, %v1302
    %v1304 = vsel %vm1303, %v1299, inf
    %1305 = vmin.xlane.f32.xlu0 %v1304
    %v1306 = vpop.xlane.xlu0 %1305
    %v1307 = vcvt.f32.s32 %v1306
    %v1308 = vcvt.f32.s32 %v1302
    %v1309 = vshll.u32 %v1308, 16
    %v1310 = vadd.s32 %v1309, %v1307
    %v1311 = vsel %vm81, %v985, 2147483647
    %v1312 = vand.u32 %v1311, 65535
    %v1313 = vshra.s32 %v1311, 16
    %v1314 = vcvt.s32.f32 %v1312
    %v1315 = vcvt.s32.f32 %v1313
    %1316 = vmin.xlane.f32.xlu0 %v1315
    %v1317 = vpop.xlane.xlu0 %1316
    %vm1318 = vcmp.eq.f32.partialorder %v1315, %v1317
    %v1319 = vsel %vm1318, %v1314, inf
    %1320 = vmin.xlane.f32.xlu0 %v1319
    %v1321 = vpop.xlane.xlu0 %1320
    %v1322 = vcvt.f32.s32 %v1321
    %v1323 = vcvt.f32.s32 %v1317
    %v1324 = vshll.u32 %v1323, 16
    %v1325 = vadd.s32 %v1324, %v1322
    %v1326 = vsel %vm81, %v986, 2147483647
    %v1327 = vand.u32 %v1326, 65535
    %v1328 = vshra.s32 %v1326, 16
    %v1329 = vcvt.s32.f32 %v1327
    %v1330 = vcvt.s32.f32 %v1328
    %1331 = vmin.xlane.f32.xlu0 %v1330
    %v1332 = vpop.xlane.xlu0 %1331
    %vm1333 = vcmp.eq.f32.partialorder %v1330, %v1332
    %v1334 = vsel %vm1333, %v1329, inf
    %1335 = vmin.xlane.f32.xlu0 %v1334
    %v1336 = vpop.xlane.xlu0 %1335
    %v1337 = vcvt.f32.s32 %v1336
    %v1338 = vcvt.f32.s32 %v1332
    %v1339 = vshll.u32 %v1338, 16
    %v1340 = vadd.s32 %v1339, %v1337
    %v1341 = vsel %vm81, %v987, 2147483647
    %v1342 = vand.u32 %v1341, 65535
    %v1343 = vshra.s32 %v1341, 16
    %v1344 = vcvt.s32.f32 %v1342
    %v1345 = vcvt.s32.f32 %v1343
    %1346 = vmin.xlane.f32.xlu0 %v1345
    %v1347 = vpop.xlane.xlu0 %1346
    %vm1348 = vcmp.eq.f32.partialorder %v1345, %v1347
    %v1349 = vsel %vm1348, %v1344, inf
    %1350 = vmin.xlane.f32.xlu0 %v1349
    %v1351 = vpop.xlane.xlu0 %1350
    %v1352 = vcvt.f32.s32 %v1351
    %v1353 = vcvt.f32.s32 %v1347
    %v1354 = vshll.u32 %v1353, 16
    %v1355 = vadd.s32 %v1354, %v1352
    %v1356 = vsel %vm81, %v988, 2147483647
    %v1357 = vand.u32 %v1356, 65535
    %v1358 = vshra.s32 %v1356, 16
    %v1359 = vcvt.s32.f32 %v1357
    %v1360 = vcvt.s32.f32 %v1358
    %1361 = vmin.xlane.f32.xlu0 %v1360
    %v1362 = vpop.xlane.xlu0 %1361
    %vm1363 = vcmp.eq.f32.partialorder %v1360, %v1362
    %v1364 = vsel %vm1363, %v1359, inf
    %1365 = vmin.xlane.f32.xlu0 %v1364
    %v1366 = vpop.xlane.xlu0 %1365
    %v1367 = vcvt.f32.s32 %v1366
    %v1368 = vcvt.f32.s32 %v1362
    %v1369 = vshll.u32 %v1368, 16
    %v1370 = vadd.s32 %v1369, %v1367
    %v1371 = vsel %vm81, %v989, 2147483647
    %v1372 = vand.u32 %v1371, 65535
    %v1373 = vshra.s32 %v1371, 16
    %v1374 = vcvt.s32.f32 %v1372
    %v1375 = vcvt.s32.f32 %v1373
    %1376 = vmin.xlane.f32.xlu0 %v1375
    %v1377 = vpop.xlane.xlu0 %1376
    %vm1378 = vcmp.eq.f32.partialorder %v1375, %v1377
    %v1379 = vsel %vm1378, %v1374, inf
    %1380 = vmin.xlane.f32.xlu0 %v1379
    %v1381 = vpop.xlane.xlu0 %1380
    %v1382 = vcvt.f32.s32 %v1381
    %v1383 = vcvt.f32.s32 %v1377
    %v1384 = vshll.u32 %v1383, 16
    %v1385 = vadd.s32 %v1384, %v1382
    %v1386 = vsel %vm81, %v990, 2147483647
    %v1387 = vand.u32 %v1386, 65535
    %v1388 = vshra.s32 %v1386, 16
    %v1389 = vcvt.s32.f32 %v1387
    %v1390 = vcvt.s32.f32 %v1388
    %1391 = vmin.xlane.f32.xlu0 %v1390
    %v1392 = vpop.xlane.xlu0 %1391
    %vm1393 = vcmp.eq.f32.partialorder %v1390, %v1392
    %v1394 = vsel %vm1393, %v1389, inf
    %1395 = vmin.xlane.f32.xlu0 %v1394
    %v1396 = vpop.xlane.xlu0 %1395
    %v1397 = vcvt.f32.s32 %v1396
    %v1398 = vcvt.f32.s32 %v1392
    %v1399 = vshll.u32 %v1398, 16
    %v1400 = vadd.s32 %v1399, %v1397
    %v1401 = vsel %vm81, %v991, 2147483647
    %v1402 = vand.u32 %v1401, 65535
    %v1403 = vshra.s32 %v1401, 16
    %v1404 = vcvt.s32.f32 %v1402
    %v1405 = vcvt.s32.f32 %v1403
    %1406 = vmin.xlane.f32.xlu0 %v1405
    %v1407 = vpop.xlane.xlu0 %1406
    %vm1408 = vcmp.eq.f32.partialorder %v1405, %v1407
    %v1409 = vsel %vm1408, %v1404, inf
    %1410 = vmin.xlane.f32.xlu0 %v1409
    %v1411 = vpop.xlane.xlu0 %1410
    %v1412 = vcvt.f32.s32 %v1411
    %v1413 = vcvt.f32.s32 %v1407
    %v1414 = vshll.u32 %v1413, 16
    %v1415 = vadd.s32 %v1414, %v1412
    %v1416 = vsel %vm81, %v992, 2147483647
    %v1417 = vand.u32 %v1416, 65535
    %v1418 = vshra.s32 %v1416, 16
    %v1419 = vcvt.s32.f32 %v1417
    %v1420 = vcvt.s32.f32 %v1418
    %1421 = vmin.xlane.f32.xlu0 %v1420
    %v1422 = vpop.xlane.xlu0 %1421
    %vm1423 = vcmp.eq.f32.partialorder %v1420, %v1422
    %v1424 = vsel %vm1423, %v1419, inf
    %1425 = vmin.xlane.f32.xlu0 %v1424
    %v1426 = vpop.xlane.xlu0 %1425
    %v1427 = vcvt.f32.s32 %v1426
    %v1428 = vcvt.f32.s32 %v1422
    %v1429 = vshll.u32 %v1428, 16
    %v1430 = vadd.s32 %v1429, %v1427
    %v1431 = vsel %vm81, %v993, 2147483647
    %v1432 = vand.u32 %v1431, 65535
    %v1433 = vshra.s32 %v1431, 16
    %v1434 = vcvt.s32.f32 %v1432
    %v1435 = vcvt.s32.f32 %v1433
    %1436 = vmin.xlane.f32.xlu0 %v1435
    %v1437 = vpop.xlane.xlu0 %1436
    %vm1438 = vcmp.eq.f32.partialorder %v1435, %v1437
    %v1439 = vsel %vm1438, %v1434, inf
    %1440 = vmin.xlane.f32.xlu0 %v1439
    %v1441 = vpop.xlane.xlu0 %1440
    %v1442 = vcvt.f32.s32 %v1441
    %v1443 = vcvt.f32.s32 %v1437
    %v1444 = vshll.u32 %v1443, 16
    %v1445 = vadd.s32 %v1444, %v1442
    %v1446 = vsel %vm81, %v994, 2147483647
    %v1447 = vand.u32 %v1446, 65535
    %v1448 = vshra.s32 %v1446, 16
    %v1449 = vcvt.s32.f32 %v1447
    %v1450 = vcvt.s32.f32 %v1448
    %1451 = vmin.xlane.f32.xlu0 %v1450
    %v1452 = vpop.xlane.xlu0 %1451
    %vm1453 = vcmp.eq.f32.partialorder %v1450, %v1452
    %v1454 = vsel %vm1453, %v1449, inf
    %1455 = vmin.xlane.f32.xlu0 %v1454
    %v1456 = vpop.xlane.xlu0 %1455
    %v1457 = vcvt.f32.s32 %v1456
    %v1458 = vcvt.f32.s32 %v1452
    %v1459 = vshll.u32 %v1458, 16
    %v1460 = vadd.s32 %v1459, %v1457
    %v1461 = vsel %vm81, %v995, 2147483647
    %v1462 = vand.u32 %v1461, 65535
    %v1463 = vshra.s32 %v1461, 16
    %v1464 = vcvt.s32.f32 %v1462
    %v1465 = vcvt.s32.f32 %v1463
    %1466 = vmin.xlane.f32.xlu0 %v1465
    %v1467 = vpop.xlane.xlu0 %1466
    %vm1468 = vcmp.eq.f32.partialorder %v1465, %v1467
    %v1469 = vsel %vm1468, %v1464, inf
    %1470 = vmin.xlane.f32.xlu0 %v1469
    %v1471 = vpop.xlane.xlu0 %1470
    %v1472 = vcvt.f32.s32 %v1471
    %v1473 = vcvt.f32.s32 %v1467
    %v1474 = vshll.u32 %v1473, 16
    %v1475 = vadd.s32 %v1474, %v1472
    %vm1476 = vcmp.eq.f32.partialorder %v673, %v897
    %vm1477 = vcmp.eq.f32.partialorder %v674, %v898
    %vm1478 = vcmp.eq.f32.partialorder %v675, %v899
    %vm1479 = vcmp.eq.f32.partialorder %v676, %v900
    %vm1480 = vcmp.eq.f32.partialorder %v677, %v901
    %vm1481 = vcmp.eq.f32.partialorder %v678, %v902
    %vm1482 = vcmp.eq.f32.partialorder %v679, %v903
    %vm1483 = vcmp.eq.f32.partialorder %v680, %v904
    %vm1484 = vcmp.eq.f32.partialorder %v681, %v905
    %vm1485 = vcmp.eq.f32.partialorder %v682, %v906
    %vm1486 = vcmp.eq.f32.partialorder %v683, %v907
    %vm1487 = vcmp.eq.f32.partialorder %v684, %v908
    %vm1488 = vcmp.eq.f32.partialorder %v685, %v909
    %vm1489 = vcmp.eq.f32.partialorder %v686, %v910
    %vm1490 = vcmp.eq.f32.partialorder %v687, %v911
    %vm1491 = vcmp.eq.f32.partialorder %v688, %v912
    %vm1492 = vcmp.eq.f32.partialorder %v689, %v913
    %vm1493 = vcmp.eq.f32.partialorder %v690, %v914
    %vm1494 = vcmp.eq.f32.partialorder %v691, %v915
    %vm1495 = vcmp.eq.f32.partialorder %v692, %v916
    %vm1496 = vcmp.eq.f32.partialorder %v693, %v917
    %vm1497 = vcmp.eq.f32.partialorder %v694, %v918
    %vm1498 = vcmp.eq.f32.partialorder %v695, %v919
    %vm1499 = vcmp.eq.f32.partialorder %v696, %v920
    %vm1500 = vcmp.eq.f32.partialorder %v697, %v921
    %vm1501 = vcmp.eq.f32.partialorder %v698, %v922
    %vm1502 = vcmp.eq.f32.partialorder %v699, %v923
    %vm1503 = vcmp.eq.f32.partialorder %v700, %v924
    %vm1504 = vcmp.eq.f32.partialorder %v701, %v925
    %vm1505 = vcmp.eq.f32.partialorder %v702, %v926
    %vm1506 = vcmp.eq.f32.partialorder %v703, %v927
    %vm1507 = vcmp.eq.f32.partialorder %v704, %v928
    %v1508 = vadd.s32 %v963, 1
    %v1509 = vsel %vm1476, %v1508, 128
    %v1510 = vsel %vm1477, %v1508, 128
    %v1511 = vsel %vm1478, %v1508, 128
    %v1512 = vsel %vm1479, %v1508, 128
    %v1513 = vsel %vm1480, %v1508, 128
    %v1514 = vsel %vm1481, %v1508, 128
    %v1515 = vsel %vm1482, %v1508, 128
    %v1516 = vsel %vm1483, %v1508, 128
    %v1517 = vsel %vm1484, %v1508, 128
    %v1518 = vsel %vm1485, %v1508, 128
    %v1519 = vsel %vm1486, %v1508, 128
    %v1520 = vsel %vm1487, %v1508, 128
    %v1521 = vsel %vm1488, %v1508, 128
    %v1522 = vsel %vm1489, %v1508, 128
    %v1523 = vsel %vm1490, %v1508, 128
    %v1524 = vsel %vm1491, %v1508, 128
    %v1525 = vsel %vm1492, %v1508, 128
    %v1526 = vsel %vm1493, %v1508, 128
    %v1527 = vsel %vm1494, %v1508, 128
    %v1528 = vsel %vm1495, %v1508, 128
    %v1529 = vsel %vm1496, %v1508, 128
    %v1530 = vsel %vm1497, %v1508, 128
    %v1531 = vsel %vm1498, %v1508, 128
    %v1532 = vsel %vm1499, %v1508, 128
    %v1533 = vsel %vm1500, %v1508, 128
    %v1534 = vsel %vm1501, %v1508, 128
    %v1535 = vsel %vm1502, %v1508, 128
    %v1536 = vsel %vm1503, %v1508, 128
    %v1537 = vsel %vm1504, %v1508, 128
    %v1538 = vsel %vm1505, %v1508, 128
    %v1539 = vsel %vm1506, %v1508, 128
    %v1540 = vsel %vm1507, %v1508, 128
    %v1541 = vsel %vm81, %v1509, 2147483647
    %v1542 = vand.u32 %v1541, 65535
    %v1543 = vshra.s32 %v1541, 16
    %v1544 = vcvt.s32.f32 %v1542
    %v1545 = vcvt.s32.f32 %v1543
    %1546 = vmin.xlane.f32.xlu0 %v1545
    %v1547 = vpop.xlane.xlu0 %1546
    %vm1548 = vcmp.eq.f32.partialorder %v1545, %v1547
    %v1549 = vsel %vm1548, %v1544, inf
    %1550 = vmin.xlane.f32.xlu0 %v1549
    %v1551 = vpop.xlane.xlu0 %1550
    %v1552 = vcvt.f32.s32 %v1551
    %v1553 = vcvt.f32.s32 %v1547
    %v1554 = vshll.u32 %v1553, 16
    %v1555 = vadd.s32 %v1554, %v1552
    %v1556 = vsel %vm81, %v1510, 2147483647
    %v1557 = vand.u32 %v1556, 65535
    %v1558 = vshra.s32 %v1556, 16
    %v1559 = vcvt.s32.f32 %v1557
    %v1560 = vcvt.s32.f32 %v1558
    %1561 = vmin.xlane.f32.xlu0 %v1560
    %v1562 = vpop.xlane.xlu0 %1561
    %vm1563 = vcmp.eq.f32.partialorder %v1560, %v1562
    %v1564 = vsel %vm1563, %v1559, inf
    %1565 = vmin.xlane.f32.xlu0 %v1564
    %v1566 = vpop.xlane.xlu0 %1565
    %v1567 = vcvt.f32.s32 %v1566
    %v1568 = vcvt.f32.s32 %v1562
    %v1569 = vshll.u32 %v1568, 16
    %v1570 = vadd.s32 %v1569, %v1567
    %v1571 = vsel %vm81, %v1511, 2147483647
    %v1572 = vand.u32 %v1571, 65535
    %v1573 = vshra.s32 %v1571, 16
    %v1574 = vcvt.s32.f32 %v1572
    %v1575 = vcvt.s32.f32 %v1573
    %1576 = vmin.xlane.f32.xlu0 %v1575
    %v1577 = vpop.xlane.xlu0 %1576
    %vm1578 = vcmp.eq.f32.partialorder %v1575, %v1577
    %v1579 = vsel %vm1578, %v1574, inf
    %1580 = vmin.xlane.f32.xlu0 %v1579
    %v1581 = vpop.xlane.xlu0 %1580
    %v1582 = vcvt.f32.s32 %v1581
    %v1583 = vcvt.f32.s32 %v1577
    %v1584 = vshll.u32 %v1583, 16
    %v1585 = vadd.s32 %v1584, %v1582
    %v1586 = vsel %vm81, %v1512, 2147483647
    %v1587 = vand.u32 %v1586, 65535
    %v1588 = vshra.s32 %v1586, 16
    %v1589 = vcvt.s32.f32 %v1587
    %v1590 = vcvt.s32.f32 %v1588
    %1591 = vmin.xlane.f32.xlu0 %v1590
    %v1592 = vpop.xlane.xlu0 %1591
    %vm1593 = vcmp.eq.f32.partialorder %v1590, %v1592
    %v1594 = vsel %vm1593, %v1589, inf
    %1595 = vmin.xlane.f32.xlu0 %v1594
    %v1596 = vpop.xlane.xlu0 %1595
    %v1597 = vcvt.f32.s32 %v1596
    %v1598 = vcvt.f32.s32 %v1592
    %v1599 = vshll.u32 %v1598, 16
    %v1600 = vadd.s32 %v1599, %v1597
    %v1601 = vsel %vm81, %v1513, 2147483647
    %v1602 = vand.u32 %v1601, 65535
    %v1603 = vshra.s32 %v1601, 16
    %v1604 = vcvt.s32.f32 %v1602
    %v1605 = vcvt.s32.f32 %v1603
    %1606 = vmin.xlane.f32.xlu0 %v1605
    %v1607 = vpop.xlane.xlu0 %1606
    %vm1608 = vcmp.eq.f32.partialorder %v1605, %v1607
    %v1609 = vsel %vm1608, %v1604, inf
    %1610 = vmin.xlane.f32.xlu0 %v1609
    %v1611 = vpop.xlane.xlu0 %1610
    %v1612 = vcvt.f32.s32 %v1611
    %v1613 = vcvt.f32.s32 %v1607
    %v1614 = vshll.u32 %v1613, 16
    %v1615 = vadd.s32 %v1614, %v1612
    %v1616 = vsel %vm81, %v1514, 2147483647
    %v1617 = vand.u32 %v1616, 65535
    %v1618 = vshra.s32 %v1616, 16
    %v1619 = vcvt.s32.f32 %v1617
    %v1620 = vcvt.s32.f32 %v1618
    %1621 = vmin.xlane.f32.xlu0 %v1620
    %v1622 = vpop.xlane.xlu0 %1621
    %vm1623 = vcmp.eq.f32.partialorder %v1620, %v1622
    %v1624 = vsel %vm1623, %v1619, inf
    %1625 = vmin.xlane.f32.xlu0 %v1624
    %v1626 = vpop.xlane.xlu0 %1625
    %v1627 = vcvt.f32.s32 %v1626
    %v1628 = vcvt.f32.s32 %v1622
    %v1629 = vshll.u32 %v1628, 16
    %v1630 = vadd.s32 %v1629, %v1627
    %v1631 = vsel %vm81, %v1515, 2147483647
    %v1632 = vand.u32 %v1631, 65535
    %v1633 = vshra.s32 %v1631, 16
    %v1634 = vcvt.s32.f32 %v1632
    %v1635 = vcvt.s32.f32 %v1633
    %1636 = vmin.xlane.f32.xlu0 %v1635
    %v1637 = vpop.xlane.xlu0 %1636
    %vm1638 = vcmp.eq.f32.partialorder %v1635, %v1637
    %v1639 = vsel %vm1638, %v1634, inf
    %1640 = vmin.xlane.f32.xlu0 %v1639
    %v1641 = vpop.xlane.xlu0 %1640
    %v1642 = vcvt.f32.s32 %v1641
    %v1643 = vcvt.f32.s32 %v1637
    %v1644 = vshll.u32 %v1643, 16
    %v1645 = vadd.s32 %v1644, %v1642
    %v1646 = vsel %vm81, %v1516, 2147483647
    %v1647 = vand.u32 %v1646, 65535
    %v1648 = vshra.s32 %v1646, 16
    %v1649 = vcvt.s32.f32 %v1647
    %v1650 = vcvt.s32.f32 %v1648
    %1651 = vmin.xlane.f32.xlu0 %v1650
    %v1652 = vpop.xlane.xlu0 %1651
    %vm1653 = vcmp.eq.f32.partialorder %v1650, %v1652
    %v1654 = vsel %vm1653, %v1649, inf
    %1655 = vmin.xlane.f32.xlu0 %v1654
    %v1656 = vpop.xlane.xlu0 %1655
    %v1657 = vcvt.f32.s32 %v1656
    %v1658 = vcvt.f32.s32 %v1652
    %v1659 = vshll.u32 %v1658, 16
    %v1660 = vadd.s32 %v1659, %v1657
    %v1661 = vsel %vm81, %v1517, 2147483647
    %v1662 = vand.u32 %v1661, 65535
    %v1663 = vshra.s32 %v1661, 16
    %v1664 = vcvt.s32.f32 %v1662
    %v1665 = vcvt.s32.f32 %v1663
    %1666 = vmin.xlane.f32.xlu0 %v1665
    %v1667 = vpop.xlane.xlu0 %1666
    %vm1668 = vcmp.eq.f32.partialorder %v1665, %v1667
    %v1669 = vsel %vm1668, %v1664, inf
    %1670 = vmin.xlane.f32.xlu0 %v1669
    %v1671 = vpop.xlane.xlu0 %1670
    %v1672 = vcvt.f32.s32 %v1671
    %v1673 = vcvt.f32.s32 %v1667
    %v1674 = vshll.u32 %v1673, 16
    %v1675 = vadd.s32 %v1674, %v1672
    %v1676 = vsel %vm81, %v1518, 2147483647
    %v1677 = vand.u32 %v1676, 65535
    %v1678 = vshra.s32 %v1676, 16
    %v1679 = vcvt.s32.f32 %v1677
    %v1680 = vcvt.s32.f32 %v1678
    %1681 = vmin.xlane.f32.xlu0 %v1680
    %v1682 = vpop.xlane.xlu0 %1681
    %vm1683 = vcmp.eq.f32.partialorder %v1680, %v1682
    %v1684 = vsel %vm1683, %v1679, inf
    %1685 = vmin.xlane.f32.xlu0 %v1684
    %v1686 = vpop.xlane.xlu0 %1685
    %v1687 = vcvt.f32.s32 %v1686
    %v1688 = vcvt.f32.s32 %v1682
    %v1689 = vshll.u32 %v1688, 16
    %v1690 = vadd.s32 %v1689, %v1687
    %v1691 = vsel %vm81, %v1519, 2147483647
    %v1692 = vand.u32 %v1691, 65535
    %v1693 = vshra.s32 %v1691, 16
    %v1694 = vcvt.s32.f32 %v1692
    %v1695 = vcvt.s32.f32 %v1693
    %1696 = vmin.xlane.f32.xlu0 %v1695
    %v1697 = vpop.xlane.xlu0 %1696
    %vm1698 = vcmp.eq.f32.partialorder %v1695, %v1697
    %v1699 = vsel %vm1698, %v1694, inf
    %1700 = vmin.xlane.f32.xlu0 %v1699
    %v1701 = vpop.xlane.xlu0 %1700
    %v1702 = vcvt.f32.s32 %v1701
    %v1703 = vcvt.f32.s32 %v1697
    %v1704 = vshll.u32 %v1703, 16
    %v1705 = vadd.s32 %v1704, %v1702
    %v1706 = vsel %vm81, %v1520, 2147483647
    %v1707 = vand.u32 %v1706, 65535
    %v1708 = vshra.s32 %v1706, 16
    %v1709 = vcvt.s32.f32 %v1707
    %v1710 = vcvt.s32.f32 %v1708
    %1711 = vmin.xlane.f32.xlu0 %v1710
    %v1712 = vpop.xlane.xlu0 %1711
    %vm1713 = vcmp.eq.f32.partialorder %v1710, %v1712
    %v1714 = vsel %vm1713, %v1709, inf
    %1715 = vmin.xlane.f32.xlu0 %v1714
    %v1716 = vpop.xlane.xlu0 %1715
    %v1717 = vcvt.f32.s32 %v1716
    %v1718 = vcvt.f32.s32 %v1712
    %v1719 = vshll.u32 %v1718, 16
    %v1720 = vadd.s32 %v1719, %v1717
    %v1721 = vsel %vm81, %v1521, 2147483647
    %v1722 = vand.u32 %v1721, 65535
    %v1723 = vshra.s32 %v1721, 16
    %v1724 = vcvt.s32.f32 %v1722
    %v1725 = vcvt.s32.f32 %v1723
    %1726 = vmin.xlane.f32.xlu0 %v1725
    %v1727 = vpop.xlane.xlu0 %1726
    %vm1728 = vcmp.eq.f32.partialorder %v1725, %v1727
    %v1729 = vsel %vm1728, %v1724, inf
    %1730 = vmin.xlane.f32.xlu0 %v1729
    %v1731 = vpop.xlane.xlu0 %1730
    %v1732 = vcvt.f32.s32 %v1731
    %v1733 = vcvt.f32.s32 %v1727
    %v1734 = vshll.u32 %v1733, 16
    %v1735 = vadd.s32 %v1734, %v1732
    %v1736 = vsel %vm81, %v1522, 2147483647
    %v1737 = vand.u32 %v1736, 65535
    %v1738 = vshra.s32 %v1736, 16
    %v1739 = vcvt.s32.f32 %v1737
    %v1740 = vcvt.s32.f32 %v1738
    %1741 = vmin.xlane.f32.xlu0 %v1740
    %v1742 = vpop.xlane.xlu0 %1741
    %vm1743 = vcmp.eq.f32.partialorder %v1740, %v1742
    %v1744 = vsel %vm1743, %v1739, inf
    %1745 = vmin.xlane.f32.xlu0 %v1744
    %v1746 = vpop.xlane.xlu0 %1745
    %v1747 = vcvt.f32.s32 %v1746
    %v1748 = vcvt.f32.s32 %v1742
    %v1749 = vshll.u32 %v1748, 16
    %v1750 = vadd.s32 %v1749, %v1747
    %v1751 = vsel %vm81, %v1523, 2147483647
    %v1752 = vand.u32 %v1751, 65535
    %v1753 = vshra.s32 %v1751, 16
    %v1754 = vcvt.s32.f32 %v1752
    %v1755 = vcvt.s32.f32 %v1753
    %1756 = vmin.xlane.f32.xlu0 %v1755
    %v1757 = vpop.xlane.xlu0 %1756
    %vm1758 = vcmp.eq.f32.partialorder %v1755, %v1757
    %v1759 = vsel %vm1758, %v1754, inf
    %1760 = vmin.xlane.f32.xlu0 %v1759
    %v1761 = vpop.xlane.xlu0 %1760
    %v1762 = vcvt.f32.s32 %v1761
    %v1763 = vcvt.f32.s32 %v1757
    %v1764 = vshll.u32 %v1763, 16
    %v1765 = vadd.s32 %v1764, %v1762
    %v1766 = vsel %vm81, %v1524, 2147483647
    %v1767 = vand.u32 %v1766, 65535
    %v1768 = vshra.s32 %v1766, 16
    %v1769 = vcvt.s32.f32 %v1767
    %v1770 = vcvt.s32.f32 %v1768
    %1771 = vmin.xlane.f32.xlu0 %v1770
    %v1772 = vpop.xlane.xlu0 %1771
    %vm1773 = vcmp.eq.f32.partialorder %v1770, %v1772
    %v1774 = vsel %vm1773, %v1769, inf
    %1775 = vmin.xlane.f32.xlu0 %v1774
    %v1776 = vpop.xlane.xlu0 %1775
    %v1777 = vcvt.f32.s32 %v1776
    %v1778 = vcvt.f32.s32 %v1772
    %v1779 = vshll.u32 %v1778, 16
    %v1780 = vadd.s32 %v1779, %v1777
    %v1781 = vsel %vm81, %v1525, 2147483647
    %v1782 = vand.u32 %v1781, 65535
    %v1783 = vshra.s32 %v1781, 16
    %v1784 = vcvt.s32.f32 %v1782
    %v1785 = vcvt.s32.f32 %v1783
    %1786 = vmin.xlane.f32.xlu0 %v1785
    %v1787 = vpop.xlane.xlu0 %1786
    %vm1788 = vcmp.eq.f32.partialorder %v1785, %v1787
    %v1789 = vsel %vm1788, %v1784, inf
    %1790 = vmin.xlane.f32.xlu0 %v1789
    %v1791 = vpop.xlane.xlu0 %1790
    %v1792 = vcvt.f32.s32 %v1791
    %v1793 = vcvt.f32.s32 %v1787
    %v1794 = vshll.u32 %v1793, 16
    %v1795 = vadd.s32 %v1794, %v1792
    %v1796 = vsel %vm81, %v1526, 2147483647
    %v1797 = vand.u32 %v1796, 65535
    %v1798 = vshra.s32 %v1796, 16
    %v1799 = vcvt.s32.f32 %v1797
    %v1800 = vcvt.s32.f32 %v1798
    %1801 = vmin.xlane.f32.xlu0 %v1800
    %v1802 = vpop.xlane.xlu0 %1801
    %vm1803 = vcmp.eq.f32.partialorder %v1800, %v1802
    %v1804 = vsel %vm1803, %v1799, inf
    %1805 = vmin.xlane.f32.xlu0 %v1804
    %v1806 = vpop.xlane.xlu0 %1805
    %v1807 = vcvt.f32.s32 %v1806
    %v1808 = vcvt.f32.s32 %v1802
    %v1809 = vshll.u32 %v1808, 16
    %v1810 = vadd.s32 %v1809, %v1807
    %v1811 = vsel %vm81, %v1527, 2147483647
    %v1812 = vand.u32 %v1811, 65535
    %v1813 = vshra.s32 %v1811, 16
    %v1814 = vcvt.s32.f32 %v1812
    %v1815 = vcvt.s32.f32 %v1813
    %1816 = vmin.xlane.f32.xlu0 %v1815
    %v1817 = vpop.xlane.xlu0 %1816
    %vm1818 = vcmp.eq.f32.partialorder %v1815, %v1817
    %v1819 = vsel %vm1818, %v1814, inf
    %1820 = vmin.xlane.f32.xlu0 %v1819
    %v1821 = vpop.xlane.xlu0 %1820
    %v1822 = vcvt.f32.s32 %v1821
    %v1823 = vcvt.f32.s32 %v1817
    %v1824 = vshll.u32 %v1823, 16
    %v1825 = vadd.s32 %v1824, %v1822
    %v1826 = vsel %vm81, %v1528, 2147483647
    %v1827 = vand.u32 %v1826, 65535
    %v1828 = vshra.s32 %v1826, 16
    %v1829 = vcvt.s32.f32 %v1827
    %v1830 = vcvt.s32.f32 %v1828
    %1831 = vmin.xlane.f32.xlu0 %v1830
    %v1832 = vpop.xlane.xlu0 %1831
    %vm1833 = vcmp.eq.f32.partialorder %v1830, %v1832
    %v1834 = vsel %vm1833, %v1829, inf
    %1835 = vmin.xlane.f32.xlu0 %v1834
    %v1836 = vpop.xlane.xlu0 %1835
    %v1837 = vcvt.f32.s32 %v1836
    %v1838 = vcvt.f32.s32 %v1832
    %v1839 = vshll.u32 %v1838, 16
    %v1840 = vadd.s32 %v1839, %v1837
    %v1841 = vsel %vm81, %v1529, 2147483647
    %v1842 = vand.u32 %v1841, 65535
    %v1843 = vshra.s32 %v1841, 16
    %v1844 = vcvt.s32.f32 %v1842
    %v1845 = vcvt.s32.f32 %v1843
    %1846 = vmin.xlane.f32.xlu0 %v1845
    %v1847 = vpop.xlane.xlu0 %1846
    %vm1848 = vcmp.eq.f32.partialorder %v1845, %v1847
    %v1849 = vsel %vm1848, %v1844, inf
    %1850 = vmin.xlane.f32.xlu0 %v1849
    %v1851 = vpop.xlane.xlu0 %1850
    %v1852 = vcvt.f32.s32 %v1851
    %v1853 = vcvt.f32.s32 %v1847
    %v1854 = vshll.u32 %v1853, 16
    %v1855 = vadd.s32 %v1854, %v1852
    %v1856 = vsel %vm81, %v1530, 2147483647
    %v1857 = vand.u32 %v1856, 65535
    %v1858 = vshra.s32 %v1856, 16
    %v1859 = vcvt.s32.f32 %v1857
    %v1860 = vcvt.s32.f32 %v1858
    %1861 = vmin.xlane.f32.xlu0 %v1860
    %v1862 = vpop.xlane.xlu0 %1861
    %vm1863 = vcmp.eq.f32.partialorder %v1860, %v1862
    %v1864 = vsel %vm1863, %v1859, inf
    %1865 = vmin.xlane.f32.xlu0 %v1864
    %v1866 = vpop.xlane.xlu0 %1865
    %v1867 = vcvt.f32.s32 %v1866
    %v1868 = vcvt.f32.s32 %v1862
    %v1869 = vshll.u32 %v1868, 16
    %v1870 = vadd.s32 %v1869, %v1867
    %v1871 = vsel %vm81, %v1531, 2147483647
    %v1872 = vand.u32 %v1871, 65535
    %v1873 = vshra.s32 %v1871, 16
    %v1874 = vcvt.s32.f32 %v1872
    %v1875 = vcvt.s32.f32 %v1873
    %1876 = vmin.xlane.f32.xlu0 %v1875
    %v1877 = vpop.xlane.xlu0 %1876
    %vm1878 = vcmp.eq.f32.partialorder %v1875, %v1877
    %v1879 = vsel %vm1878, %v1874, inf
    %1880 = vmin.xlane.f32.xlu0 %v1879
    %v1881 = vpop.xlane.xlu0 %1880
    %v1882 = vcvt.f32.s32 %v1881
    %v1883 = vcvt.f32.s32 %v1877
    %v1884 = vshll.u32 %v1883, 16
    %v1885 = vadd.s32 %v1884, %v1882
    %v1886 = vsel %vm81, %v1532, 2147483647
    %v1887 = vand.u32 %v1886, 65535
    %v1888 = vshra.s32 %v1886, 16
    %v1889 = vcvt.s32.f32 %v1887
    %v1890 = vcvt.s32.f32 %v1888
    %1891 = vmin.xlane.f32.xlu0 %v1890
    %v1892 = vpop.xlane.xlu0 %1891
    %vm1893 = vcmp.eq.f32.partialorder %v1890, %v1892
    %v1894 = vsel %vm1893, %v1889, inf
    %1895 = vmin.xlane.f32.xlu0 %v1894
    %v1896 = vpop.xlane.xlu0 %1895
    %v1897 = vcvt.f32.s32 %v1896
    %v1898 = vcvt.f32.s32 %v1892
    %v1899 = vshll.u32 %v1898, 16
    %v1900 = vadd.s32 %v1899, %v1897
    %v1901 = vsel %vm81, %v1533, 2147483647
    %v1902 = vand.u32 %v1901, 65535
    %v1903 = vshra.s32 %v1901, 16
    %v1904 = vcvt.s32.f32 %v1902
    %v1905 = vcvt.s32.f32 %v1903
    %1906 = vmin.xlane.f32.xlu0 %v1905
    %v1907 = vpop.xlane.xlu0 %1906
    %vm1908 = vcmp.eq.f32.partialorder %v1905, %v1907
    %v1909 = vsel %vm1908, %v1904, inf
    %1910 = vmin.xlane.f32.xlu0 %v1909
    %v1911 = vpop.xlane.xlu0 %1910
    %v1912 = vcvt.f32.s32 %v1911
    %v1913 = vcvt.f32.s32 %v1907
    %v1914 = vshll.u32 %v1913, 16
    %v1915 = vadd.s32 %v1914, %v1912
    %v1916 = vsel %vm81, %v1534, 2147483647
    %v1917 = vand.u32 %v1916, 65535
    %v1918 = vshra.s32 %v1916, 16
    %v1919 = vcvt.s32.f32 %v1917
    %v1920 = vcvt.s32.f32 %v1918
    %1921 = vmin.xlane.f32.xlu0 %v1920
    %v1922 = vpop.xlane.xlu0 %1921
    %vm1923 = vcmp.eq.f32.partialorder %v1920, %v1922
    %v1924 = vsel %vm1923, %v1919, inf
    %1925 = vmin.xlane.f32.xlu0 %v1924
    %v1926 = vpop.xlane.xlu0 %1925
    %v1927 = vcvt.f32.s32 %v1926
    %v1928 = vcvt.f32.s32 %v1922
    %v1929 = vshll.u32 %v1928, 16
    %v1930 = vadd.s32 %v1929, %v1927
    %v1931 = vsel %vm81, %v1535, 2147483647
    %v1932 = vand.u32 %v1931, 65535
    %v1933 = vshra.s32 %v1931, 16
    %v1934 = vcvt.s32.f32 %v1932
    %v1935 = vcvt.s32.f32 %v1933
    %1936 = vmin.xlane.f32.xlu0 %v1935
    %v1937 = vpop.xlane.xlu0 %1936
    %vm1938 = vcmp.eq.f32.partialorder %v1935, %v1937
    %v1939 = vsel %vm1938, %v1934, inf
    %1940 = vmin.xlane.f32.xlu0 %v1939
    %v1941 = vpop.xlane.xlu0 %1940
    %v1942 = vcvt.f32.s32 %v1941
    %v1943 = vcvt.f32.s32 %v1937
    %v1944 = vshll.u32 %v1943, 16
    %v1945 = vadd.s32 %v1944, %v1942
    %v1946 = vsel %vm81, %v1536, 2147483647
    %v1947 = vand.u32 %v1946, 65535
    %v1948 = vshra.s32 %v1946, 16
    %v1949 = vcvt.s32.f32 %v1947
    %v1950 = vcvt.s32.f32 %v1948
    %1951 = vmin.xlane.f32.xlu0 %v1950
    %v1952 = vpop.xlane.xlu0 %1951
    %vm1953 = vcmp.eq.f32.partialorder %v1950, %v1952
    %v1954 = vsel %vm1953, %v1949, inf
    %1955 = vmin.xlane.f32.xlu0 %v1954
    %v1956 = vpop.xlane.xlu0 %1955
    %v1957 = vcvt.f32.s32 %v1956
    %v1958 = vcvt.f32.s32 %v1952
    %v1959 = vshll.u32 %v1958, 16
    %v1960 = vadd.s32 %v1959, %v1957
    %v1961 = vsel %vm81, %v1537, 2147483647
    %v1962 = vand.u32 %v1961, 65535
    %v1963 = vshra.s32 %v1961, 16
    %v1964 = vcvt.s32.f32 %v1962
    %v1965 = vcvt.s32.f32 %v1963
    %1966 = vmin.xlane.f32.xlu0 %v1965
    %v1967 = vpop.xlane.xlu0 %1966
    %vm1968 = vcmp.eq.f32.partialorder %v1965, %v1967
    %v1969 = vsel %vm1968, %v1964, inf
    %1970 = vmin.xlane.f32.xlu0 %v1969
    %v1971 = vpop.xlane.xlu0 %1970
    %v1972 = vcvt.f32.s32 %v1971
    %v1973 = vcvt.f32.s32 %v1967
    %v1974 = vshll.u32 %v1973, 16
    %v1975 = vadd.s32 %v1974, %v1972
    %v1976 = vsel %vm81, %v1538, 2147483647
    %v1977 = vand.u32 %v1976, 65535
    %v1978 = vshra.s32 %v1976, 16
    %v1979 = vcvt.s32.f32 %v1977
    %v1980 = vcvt.s32.f32 %v1978
    %1981 = vmin.xlane.f32.xlu0 %v1980
    %v1982 = vpop.xlane.xlu0 %1981
    %vm1983 = vcmp.eq.f32.partialorder %v1980, %v1982
    %v1984 = vsel %vm1983, %v1979, inf
    %1985 = vmin.xlane.f32.xlu0 %v1984
    %v1986 = vpop.xlane.xlu0 %1985
    %v1987 = vcvt.f32.s32 %v1986
    %v1988 = vcvt.f32.s32 %v1982
    %v1989 = vshll.u32 %v1988, 16
    %v1990 = vadd.s32 %v1989, %v1987
    %v1991 = vsel %vm81, %v1539, 2147483647
    %v1992 = vand.u32 %v1991, 65535
    %v1993 = vshra.s32 %v1991, 16
    %v1994 = vcvt.s32.f32 %v1992
    %v1995 = vcvt.s32.f32 %v1993
    %1996 = vmin.xlane.f32.xlu0 %v1995
    %v1997 = vpop.xlane.xlu0 %1996
    %vm1998 = vcmp.eq.f32.partialorder %v1995, %v1997
    %v1999 = vsel %vm1998, %v1994, inf
    %2000 = vmin.xlane.f32.xlu0 %v1999
    %v2001 = vpop.xlane.xlu0 %2000
    %v2002 = vcvt.f32.s32 %v2001
    %v2003 = vcvt.f32.s32 %v1997
    %v2004 = vshll.u32 %v2003, 16
    %v2005 = vadd.s32 %v2004, %v2002
    %v2006 = vsel %vm81, %v1540, 2147483647
    %v2007 = vand.u32 %v2006, 65535
    %v2008 = vshra.s32 %v2006, 16
    %v2009 = vcvt.s32.f32 %v2007
    %v2010 = vcvt.s32.f32 %v2008
    %2011 = vmin.xlane.f32.xlu0 %v2010
    %v2012 = vpop.xlane.xlu0 %2011
    %vm2013 = vcmp.eq.f32.partialorder %v2010, %v2012
    %v2014 = vsel %vm2013, %v2009, inf
    %2015 = vmin.xlane.f32.xlu0 %v2014
    %v2016 = vpop.xlane.xlu0 %2015
    %v2017 = vcvt.f32.s32 %v2016
    %v2018 = vcvt.f32.s32 %v2012
    %v2019 = vshll.u32 %v2018, 16
    %v2020 = vadd.s32 %v2019, %v2017
    %vm2021 = vcmp.lt.s32.totalorder %v1010, %v1555
    %v2022 = vsel %vm2021, %v1010, %v1555
    %vm2023 = vcmp.lt.s32.totalorder %v1025, %v1570
    %v2024 = vsel %vm2023, %v1025, %v1570
    %vm2025 = vcmp.lt.s32.totalorder %v1040, %v1585
    %v2026 = vsel %vm2025, %v1040, %v1585
    %vm2027 = vcmp.lt.s32.totalorder %v1055, %v1600
    %v2028 = vsel %vm2027, %v1055, %v1600
    %vm2029 = vcmp.lt.s32.totalorder %v1070, %v1615
    %v2030 = vsel %vm2029, %v1070, %v1615
    %vm2031 = vcmp.lt.s32.totalorder %v1085, %v1630
    %v2032 = vsel %vm2031, %v1085, %v1630
    %vm2033 = vcmp.lt.s32.totalorder %v1100, %v1645
    %v2034 = vsel %vm2033, %v1100, %v1645
    %vm2035 = vcmp.lt.s32.totalorder %v1115, %v1660
    %v2036 = vsel %vm2035, %v1115, %v1660
    %vm2037 = vcmp.lt.s32.totalorder %v1130, %v1675
    %v2038 = vsel %vm2037, %v1130, %v1675
    %vm2039 = vcmp.lt.s32.totalorder %v1145, %v1690
    %v2040 = vsel %vm2039, %v1145, %v1690
    %vm2041 = vcmp.lt.s32.totalorder %v1160, %v1705
    %v2042 = vsel %vm2041, %v1160, %v1705
    %vm2043 = vcmp.lt.s32.totalorder %v1175, %v1720
    %v2044 = vsel %vm2043, %v1175, %v1720
    %vm2045 = vcmp.lt.s32.totalorder %v1190, %v1735
    %v2046 = vsel %vm2045, %v1190, %v1735
    %vm2047 = vcmp.lt.s32.totalorder %v1205, %v1750
    %v2048 = vsel %vm2047, %v1205, %v1750
    %vm2049 = vcmp.lt.s32.totalorder %v1220, %v1765
    %v2050 = vsel %vm2049, %v1220, %v1765
    %vm2051 = vcmp.lt.s32.totalorder %v1235, %v1780
    %v2052 = vsel %vm2051, %v1235, %v1780
    %vm2053 = vcmp.lt.s32.totalorder %v1250, %v1795
    %v2054 = vsel %vm2053, %v1250, %v1795
    %vm2055 = vcmp.lt.s32.totalorder %v1265, %v1810
    %v2056 = vsel %vm2055, %v1265, %v1810
    %vm2057 = vcmp.lt.s32.totalorder %v1280, %v1825
    %v2058 = vsel %vm2057, %v1280, %v1825
    %vm2059 = vcmp.lt.s32.totalorder %v1295, %v1840
    %v2060 = vsel %vm2059, %v1295, %v1840
    %vm2061 = vcmp.lt.s32.totalorder %v1310, %v1855
    %v2062 = vsel %vm2061, %v1310, %v1855
    %vm2063 = vcmp.lt.s32.totalorder %v1325, %v1870
    %v2064 = vsel %vm2063, %v1325, %v1870
    %vm2065 = vcmp.lt.s32.totalorder %v1340, %v1885
    %v2066 = vsel %vm2065, %v1340, %v1885
    %vm2067 = vcmp.lt.s32.totalorder %v1355, %v1900
    %v2068 = vsel %vm2067, %v1355, %v1900
    %vm2069 = vcmp.lt.s32.totalorder %v1370, %v1915
    %v2070 = vsel %vm2069, %v1370, %v1915
    %vm2071 = vcmp.lt.s32.totalorder %v1385, %v1930
    %v2072 = vsel %vm2071, %v1385, %v1930
    %vm2073 = vcmp.lt.s32.totalorder %v1400, %v1945
    %v2074 = vsel %vm2073, %v1400, %v1945
    %vm2075 = vcmp.lt.s32.totalorder %v1415, %v1960
    %v2076 = vsel %vm2075, %v1415, %v1960
    %vm2077 = vcmp.lt.s32.totalorder %v1430, %v1975
    %v2078 = vsel %vm2077, %v1430, %v1975
    %vm2079 = vcmp.lt.s32.totalorder %v1445, %v1990
    %v2080 = vsel %vm2079, %v1445, %v1990
    %vm2081 = vcmp.lt.s32.totalorder %v1460, %v2005
    %v2082 = vsel %vm2081, %v1460, %v2005
    %vm2083 = vcmp.lt.s32.totalorder %v1475, %v2020
    %v2084 = vsel %vm2083, %v1475, %v2020
    %vm2085 = vcmp.eq.s32.totalorder %v963, %v2022
    %vm2086 = vcmp.eq.s32.totalorder %v963, %v2024
    %vm2087 = vcmp.eq.s32.totalorder %v963, %v2026
    %vm2088 = vcmp.eq.s32.totalorder %v963, %v2028
    %vm2089 = vcmp.eq.s32.totalorder %v963, %v2030
    %vm2090 = vcmp.eq.s32.totalorder %v963, %v2032
    %vm2091 = vcmp.eq.s32.totalorder %v963, %v2034
    %vm2092 = vcmp.eq.s32.totalorder %v963, %v2036
    %vm2093 = vcmp.eq.s32.totalorder %v963, %v2038
    %vm2094 = vcmp.eq.s32.totalorder %v963, %v2040
    %vm2095 = vcmp.eq.s32.totalorder %v963, %v2042
    %vm2096 = vcmp.eq.s32.totalorder %v963, %v2044
    %vm2097 = vcmp.eq.s32.totalorder %v963, %v2046
    %vm2098 = vcmp.eq.s32.totalorder %v963, %v2048
    %vm2099 = vcmp.eq.s32.totalorder %v963, %v2050
    %vm2100 = vcmp.eq.s32.totalorder %v963, %v2052
    %vm2101 = vcmp.eq.s32.totalorder %v963, %v2054
    %vm2102 = vcmp.eq.s32.totalorder %v963, %v2056
    %vm2103 = vcmp.eq.s32.totalorder %v963, %v2058
    %vm2104 = vcmp.eq.s32.totalorder %v963, %v2060
    %vm2105 = vcmp.eq.s32.totalorder %v963, %v2062
    %vm2106 = vcmp.eq.s32.totalorder %v963, %v2064
    %vm2107 = vcmp.eq.s32.totalorder %v963, %v2066
    %vm2108 = vcmp.eq.s32.totalorder %v963, %v2068
    %vm2109 = vcmp.eq.s32.totalorder %v963, %v2070
    %vm2110 = vcmp.eq.s32.totalorder %v963, %v2072
    %vm2111 = vcmp.eq.s32.totalorder %v963, %v2074
    %vm2112 = vcmp.eq.s32.totalorder %v963, %v2076
    %vm2113 = vcmp.eq.s32.totalorder %v963, %v2078
    %vm2114 = vcmp.eq.s32.totalorder %v963, %v2080
    %vm2115 = vcmp.eq.s32.totalorder %v963, %v2082
    %vm2116 = vcmp.eq.s32.totalorder %v963, %v2084
    %v2117 = vsel %vm2085, 1, 0
    %v2118 = vsel %vm2086, 1, 0
    %v2119 = vsel %vm2087, 1, 0
    %v2120 = vsel %vm2088, 1, 0
    %v2121 = vsel %vm2089, 1, 0
    %v2122 = vsel %vm2090, 1, 0
    %v2123 = vsel %vm2091, 1, 0
    %v2124 = vsel %vm2092, 1, 0
    %v2125 = vsel %vm2093, 1, 0
    %v2126 = vsel %vm2094, 1, 0
    %v2127 = vsel %vm2095, 1, 0
    %v2128 = vsel %vm2096, 1, 0
    %v2129 = vsel %vm2097, 1, 0
    %v2130 = vsel %vm2098, 1, 0
    %v2131 = vsel %vm2099, 1, 0
    %v2132 = vsel %vm2100, 1, 0
    %v2133 = vsel %vm2101, 1, 0
    %v2134 = vsel %vm2102, 1, 0
    %v2135 = vsel %vm2103, 1, 0
    %v2136 = vsel %vm2104, 1, 0
    %v2137 = vsel %vm2105, 1, 0
    %v2138 = vsel %vm2106, 1, 0
    %v2139 = vsel %vm2107, 1, 0
    %v2140 = vsel %vm2108, 1, 0
    %v2141 = vsel %vm2109, 1, 0
    %v2142 = vsel %vm2110, 1, 0
    %v2143 = vsel %vm2111, 1, 0
    %v2144 = vsel %vm2112, 1, 0
    %v2145 = vsel %vm2113, 1, 0
    %v2146 = vsel %vm2114, 1, 0
    %v2147 = vsel %vm2115, 1, 0
    %v2148 = vsel %vm2116, 1, 0
    %v2149 = vcvt.s32.f32 %v2117
    %v2150 = vcvt.s32.f32 %v2118
    %v2151 = vcvt.s32.f32 %v2119
    %v2152 = vcvt.s32.f32 %v2120
    %v2153 = vcvt.s32.f32 %v2121
    %v2154 = vcvt.s32.f32 %v2122
    %v2155 = vcvt.s32.f32 %v2123
    %v2156 = vcvt.s32.f32 %v2124
    %v2157 = vcvt.s32.f32 %v2125
    %v2158 = vcvt.s32.f32 %v2126
    %v2159 = vcvt.s32.f32 %v2127
    %v2160 = vcvt.s32.f32 %v2128
    %v2161 = vcvt.s32.f32 %v2129
    %v2162 = vcvt.s32.f32 %v2130
    %v2163 = vcvt.s32.f32 %v2131
    %v2164 = vcvt.s32.f32 %v2132
    %v2165 = vcvt.s32.f32 %v2133
    %v2166 = vcvt.s32.f32 %v2134
    %v2167 = vcvt.s32.f32 %v2135
    %v2168 = vcvt.s32.f32 %v2136
    %v2169 = vcvt.s32.f32 %v2137
    %v2170 = vcvt.s32.f32 %v2138
    %v2171 = vcvt.s32.f32 %v2139
    %v2172 = vcvt.s32.f32 %v2140
    %v2173 = vcvt.s32.f32 %v2141
    %v2174 = vcvt.s32.f32 %v2142
    %v2175 = vcvt.s32.f32 %v2143
    %v2176 = vcvt.s32.f32 %v2144
    %v2177 = vcvt.s32.f32 %v2145
    %v2178 = vcvt.s32.f32 %v2146
    %v2179 = vcvt.s32.f32 %v2147
    %v2180 = vcvt.s32.f32 %v2148
    %vm2181 = vcmp.eq.s32.totalorder %v1508, %v2022
    %vm2182 = vcmp.eq.s32.totalorder %v1508, %v2024
    %vm2183 = vcmp.eq.s32.totalorder %v1508, %v2026
    %vm2184 = vcmp.eq.s32.totalorder %v1508, %v2028
    %vm2185 = vcmp.eq.s32.totalorder %v1508, %v2030
    %vm2186 = vcmp.eq.s32.totalorder %v1508, %v2032
    %vm2187 = vcmp.eq.s32.totalorder %v1508, %v2034
    %vm2188 = vcmp.eq.s32.totalorder %v1508, %v2036
    %vm2189 = vcmp.eq.s32.totalorder %v1508, %v2038
    %vm2190 = vcmp.eq.s32.totalorder %v1508, %v2040
    %vm2191 = vcmp.eq.s32.totalorder %v1508, %v2042
    %vm2192 = vcmp.eq.s32.totalorder %v1508, %v2044
    %vm2193 = vcmp.eq.s32.totalorder %v1508, %v2046
    %vm2194 = vcmp.eq.s32.totalorder %v1508, %v2048
    %vm2195 = vcmp.eq.s32.totalorder %v1508, %v2050
    %vm2196 = vcmp.eq.s32.totalorder %v1508, %v2052
    %vm2197 = vcmp.eq.s32.totalorder %v1508, %v2054
    %vm2198 = vcmp.eq.s32.totalorder %v1508, %v2056
    %vm2199 = vcmp.eq.s32.totalorder %v1508, %v2058
    %vm2200 = vcmp.eq.s32.totalorder %v1508, %v2060
    %vm2201 = vcmp.eq.s32.totalorder %v1508, %v2062
    %vm2202 = vcmp.eq.s32.totalorder %v1508, %v2064
    %vm2203 = vcmp.eq.s32.totalorder %v1508, %v2066
    %vm2204 = vcmp.eq.s32.totalorder %v1508, %v2068
    %vm2205 = vcmp.eq.s32.totalorder %v1508, %v2070
    %vm2206 = vcmp.eq.s32.totalorder %v1508, %v2072
    %vm2207 = vcmp.eq.s32.totalorder %v1508, %v2074
    %vm2208 = vcmp.eq.s32.totalorder %v1508, %v2076
    %vm2209 = vcmp.eq.s32.totalorder %v1508, %v2078
    %vm2210 = vcmp.eq.s32.totalorder %v1508, %v2080
    %vm2211 = vcmp.eq.s32.totalorder %v1508, %v2082
    %vm2212 = vcmp.eq.s32.totalorder %v1508, %v2084
    %v2213 = vsel %vm2181, 1, 0
    %v2214 = vsel %vm2182, 1, 0
    %v2215 = vsel %vm2183, 1, 0
    %v2216 = vsel %vm2184, 1, 0
    %v2217 = vsel %vm2185, 1, 0
    %v2218 = vsel %vm2186, 1, 0
    %v2219 = vsel %vm2187, 1, 0
    %v2220 = vsel %vm2188, 1, 0
    %v2221 = vsel %vm2189, 1, 0
    %v2222 = vsel %vm2190, 1, 0
    %v2223 = vsel %vm2191, 1, 0
    %v2224 = vsel %vm2192, 1, 0
    %v2225 = vsel %vm2193, 1, 0
    %v2226 = vsel %vm2194, 1, 0
    %v2227 = vsel %vm2195, 1, 0
    %v2228 = vsel %vm2196, 1, 0
    %v2229 = vsel %vm2197, 1, 0
    %v2230 = vsel %vm2198, 1, 0
    %v2231 = vsel %vm2199, 1, 0
    %v2232 = vsel %vm2200, 1, 0
    %v2233 = vsel %vm2201, 1, 0
    %v2234 = vsel %vm2202, 1, 0
    %v2235 = vsel %vm2203, 1, 0
    %v2236 = vsel %vm2204, 1, 0
    %v2237 = vsel %vm2205, 1, 0
    %v2238 = vsel %vm2206, 1, 0
    %v2239 = vsel %vm2207, 1, 0
    %v2240 = vsel %vm2208, 1, 0
    %v2241 = vsel %vm2209, 1, 0
    %v2242 = vsel %vm2210, 1, 0
    %v2243 = vsel %vm2211, 1, 0
    %v2244 = vsel %vm2212, 1, 0
    %v2245 = vcvt.s32.f32 %v2213
    %v2246 = vcvt.s32.f32 %v2214
    %v2247 = vcvt.s32.f32 %v2215
    %v2248 = vcvt.s32.f32 %v2216
    %v2249 = vcvt.s32.f32 %v2217
    %v2250 = vcvt.s32.f32 %v2218
    %v2251 = vcvt.s32.f32 %v2219
    %v2252 = vcvt.s32.f32 %v2220
    %v2253 = vcvt.s32.f32 %v2221
    %v2254 = vcvt.s32.f32 %v2222
    %v2255 = vcvt.s32.f32 %v2223
    %v2256 = vcvt.s32.f32 %v2224
    %v2257 = vcvt.s32.f32 %v2225
    %v2258 = vcvt.s32.f32 %v2226
    %v2259 = vcvt.s32.f32 %v2227
    %v2260 = vcvt.s32.f32 %v2228
    %v2261 = vcvt.s32.f32 %v2229
    %v2262 = vcvt.s32.f32 %v2230
    %v2263 = vcvt.s32.f32 %v2231
    %v2264 = vcvt.s32.f32 %v2232
    %v2265 = vcvt.s32.f32 %v2233
    %v2266 = vcvt.s32.f32 %v2234
    %v2267 = vcvt.s32.f32 %v2235
    %v2268 = vcvt.s32.f32 %v2236
    %v2269 = vcvt.s32.f32 %v2237
    %v2270 = vcvt.s32.f32 %v2238
    %v2271 = vcvt.s32.f32 %v2239
    %v2272 = vcvt.s32.f32 %v2240
    %v2273 = vcvt.s32.f32 %v2241
    %v2274 = vcvt.s32.f32 %v2242
    %v2275 = vcvt.s32.f32 %v2243
    %v2276 = vcvt.s32.f32 %v2244
    %2277 = vmatpush.msra.mxu0 %v2164
    %2278 = vmatpush.msra.mxu0 %v2163
    %2279 = vmatpush.msra.mxu0 %v2162
    %2280 = vmatpush.msra.mxu0 %v2161
    %2281 = vmatpush.msra.mxu0 %v2160
    %2282 = vmatpush.msra.mxu0 %v2159
    %2283 = vmatpush.msra.mxu0 %v2158
    %2284 = vmatpush.msra.mxu0 %v2157
    %2285 = vmatpush.msra.mxu0 %v2156
    %2286 = vmatpush.msra.mxu0 %v2155
    %2287 = vmatpush.msra.mxu0 %v2154
    %2288 = vmatpush.msra.mxu0 %v2153
    %2289 = vmatpush.msra.mxu0 %v2152
    %2290 = vmatpush.msra.mxu0 %v2151
    %2291 = vmatpush.msra.mxu0 %v2150
    %2292 = vmatpush.msra.mxu0 %v2149
    %2293 = vmatmul.f32.gmra.mxu0 %v37
    %v2294 = vpop.f32.mrf.mxu0
    %v2295 = vadd.f32 0.0, %v2294
    %2296 = vdwg.mxu0
    %2297 = vmatpush.msra.mxu0 %v2180
    %2298 = vmatpush.msra.mxu0 %v2179
    %2299 = vmatpush.msra.mxu0 %v2178
    %2300 = vmatpush.msra.mxu0 %v2177
    %2301 = vmatpush.msra.mxu0 %v2176
    %2302 = vmatpush.msra.mxu0 %v2175
    %2303 = vmatpush.msra.mxu0 %v2174
    %2304 = vmatpush.msra.mxu0 %v2173
    %2305 = vmatpush.msra.mxu0 %v2172
    %2306 = vmatpush.msra.mxu0 %v2171
    %2307 = vmatpush.msra.mxu0 %v2170
    %2308 = vmatpush.msra.mxu0 %v2169
    %2309 = vmatpush.msra.mxu0 %v2168
    %2310 = vmatpush.msra.mxu0 %v2167
    %2311 = vmatpush.msra.mxu0 %v2166
    %2312 = vmatpush.msra.mxu0 %v2165
    %2313 = vmatmul.f32.gmra.mxu0 %v38
    %v2314 = vpop.f32.mrf.mxu0
    %v2315 = vadd.f32 0.0, %v2314
    %2316 = vdwg.mxu0
    %2317 = vmatpush.msra.mxu0 %v2260
    %2318 = vmatpush.msra.mxu0 %v2259
    %2319 = vmatpush.msra.mxu0 %v2258
    %2320 = vmatpush.msra.mxu0 %v2257
    %2321 = vmatpush.msra.mxu0 %v2256
    %2322 = vmatpush.msra.mxu0 %v2255
    %2323 = vmatpush.msra.mxu0 %v2254
    %2324 = vmatpush.msra.mxu0 %v2253
    %2325 = vmatpush.msra.mxu0 %v2252
    %2326 = vmatpush.msra.mxu0 %v2251
    %2327 = vmatpush.msra.mxu0 %v2250
    %2328 = vmatpush.msra.mxu0 %v2249
    %2329 = vmatpush.msra.mxu0 %v2248
    %2330 = vmatpush.msra.mxu0 %v2247
    %2331 = vmatpush.msra.mxu0 %v2246
    %2332 = vmatpush.msra.mxu0 %v2245
    %2333 = vmatmul.f32.gmra.mxu0 %v37
    %v2334 = vpop.f32.mrf.mxu0
    %v2335 = vadd.f32 0.0, %v2334
    %2336 = vdwg.mxu0
    %2337 = vmatpush.msra.mxu0 %v2276
    %2338 = vmatpush.msra.mxu0 %v2275
    %2339 = vmatpush.msra.mxu0 %v2274
    %2340 = vmatpush.msra.mxu0 %v2273
    %2341 = vmatpush.msra.mxu0 %v2272
    %2342 = vmatpush.msra.mxu0 %v2271
    %2343 = vmatpush.msra.mxu0 %v2270
    %2344 = vmatpush.msra.mxu0 %v2269
    %2345 = vmatpush.msra.mxu0 %v2268
    %2346 = vmatpush.msra.mxu0 %v2267
    %2347 = vmatpush.msra.mxu0 %v2266
    %2348 = vmatpush.msra.mxu0 %v2265
    %2349 = vmatpush.msra.mxu0 %v2264
    %2350 = vmatpush.msra.mxu0 %v2263
    %2351 = vmatpush.msra.mxu0 %v2262
    %2352 = vmatpush.msra.mxu0 %v2261
    %2353 = vmatmul.f32.gmra.mxu0 %v38
    %v2354 = vpop.f32.mrf.mxu0
    %v2355 = vadd.f32 0.0, %v2354
    %2356 = vdwg.mxu0
    %v2357 = vsel %vm81, %v2149, 0.0
    %v2358 = vsel %vm81, %v2150, 0.0
    %v2359 = vadd.f32 %v2357, %v2358
    %v2360 = vsel %vm81, %v2151, 0.0
    %v2361 = vadd.f32 %v2359, %v2360
    %v2362 = vsel %vm81, %v2152, 0.0
    %v2363 = vadd.f32 %v2361, %v2362
    %v2364 = vsel %vm81, %v2153, 0.0
    %v2365 = vadd.f32 %v2363, %v2364
    %v2366 = vsel %vm81, %v2154, 0.0
    %v2367 = vadd.f32 %v2365, %v2366
    %v2368 = vsel %vm81, %v2155, 0.0
    %v2369 = vadd.f32 %v2367, %v2368
    %v2370 = vsel %vm81, %v2156, 0.0
    %v2371 = vadd.f32 %v2369, %v2370
    %v2372 = vsel %vm81, %v2157, 0.0
    %v2373 = vadd.f32 %v2371, %v2372
    %v2374 = vsel %vm81, %v2158, 0.0
    %v2375 = vadd.f32 %v2373, %v2374
    %v2376 = vsel %vm81, %v2159, 0.0
    %v2377 = vadd.f32 %v2375, %v2376
    %v2378 = vsel %vm81, %v2160, 0.0
    %v2379 = vadd.f32 %v2377, %v2378
    %v2380 = vsel %vm81, %v2161, 0.0
    %v2381 = vadd.f32 %v2379, %v2380
    %v2382 = vsel %vm81, %v2162, 0.0
    %v2383 = vadd.f32 %v2381, %v2382
    %v2384 = vsel %vm81, %v2163, 0.0
    %v2385 = vadd.f32 %v2383, %v2384
    %v2386 = vsel %vm81, %v2164, 0.0
    %v2387 = vadd.f32 %v2385, %v2386
    %v2388 = vrot.slane %v2387, 4
    %v2389 = vadd.f32 %v2387, %v2388
    %v2390 = vrot.slane %v2389, 2
    %v2391 = vadd.f32 %v2389, %v2390
    %v2392 = vrot.slane %v2391, 1
    %v2393 = vadd.f32 %v2391, %v2392
    %v2394 = vsel %vm81, %v2165, 0.0
    %v2395 = vsel %vm81, %v2166, 0.0
    %v2396 = vadd.f32 %v2394, %v2395
    %v2397 = vsel %vm81, %v2167, 0.0
    %v2398 = vadd.f32 %v2396, %v2397
    %v2399 = vsel %vm81, %v2168, 0.0
    %v2400 = vadd.f32 %v2398, %v2399
    %v2401 = vsel %vm81, %v2169, 0.0
    %v2402 = vadd.f32 %v2400, %v2401
    %v2403 = vsel %vm81, %v2170, 0.0
    %v2404 = vadd.f32 %v2402, %v2403
    %v2405 = vsel %vm81, %v2171, 0.0
    %v2406 = vadd.f32 %v2404, %v2405
    %v2407 = vsel %vm81, %v2172, 0.0
    %v2408 = vadd.f32 %v2406, %v2407
    %v2409 = vsel %vm81, %v2173, 0.0
    %v2410 = vadd.f32 %v2408, %v2409
    %v2411 = vsel %vm81, %v2174, 0.0
    %v2412 = vadd.f32 %v2410, %v2411
    %v2413 = vsel %vm81, %v2175, 0.0
    %v2414 = vadd.f32 %v2412, %v2413
    %v2415 = vsel %vm81, %v2176, 0.0
    %v2416 = vadd.f32 %v2414, %v2415
    %v2417 = vsel %vm81, %v2177, 0.0
    %v2418 = vadd.f32 %v2416, %v2417
    %v2419 = vsel %vm81, %v2178, 0.0
    %v2420 = vadd.f32 %v2418, %v2419
    %v2421 = vsel %vm81, %v2179, 0.0
    %v2422 = vadd.f32 %v2420, %v2421
    %v2423 = vsel %vm81, %v2180, 0.0
    %v2424 = vadd.f32 %v2422, %v2423
    %v2425 = vrot.slane %v2424, 4
    %v2426 = vadd.f32 %v2424, %v2425
    %v2427 = vrot.slane %v2426, 2
    %v2428 = vadd.f32 %v2426, %v2427
    %v2429 = vrot.slane %v2428, 1
    %v2430 = vadd.f32 %v2428, %v2429
    %v2431 = vsel %vm81, %v2245, 0.0
    %v2432 = vsel %vm81, %v2246, 0.0
    %v2433 = vadd.f32 %v2431, %v2432
    %v2434 = vsel %vm81, %v2247, 0.0
    %v2435 = vadd.f32 %v2433, %v2434
    %v2436 = vsel %vm81, %v2248, 0.0
    %v2437 = vadd.f32 %v2435, %v2436
    %v2438 = vsel %vm81, %v2249, 0.0
    %v2439 = vadd.f32 %v2437, %v2438
    %v2440 = vsel %vm81, %v2250, 0.0
    %v2441 = vadd.f32 %v2439, %v2440
    %v2442 = vsel %vm81, %v2251, 0.0
    %v2443 = vadd.f32 %v2441, %v2442
    %v2444 = vsel %vm81, %v2252, 0.0
    %v2445 = vadd.f32 %v2443, %v2444
    %v2446 = vsel %vm81, %v2253, 0.0
    %v2447 = vadd.f32 %v2445, %v2446
    %v2448 = vsel %vm81, %v2254, 0.0
    %v2449 = vadd.f32 %v2447, %v2448
    %v2450 = vsel %vm81, %v2255, 0.0
    %v2451 = vadd.f32 %v2449, %v2450
    %v2452 = vsel %vm81, %v2256, 0.0
    %v2453 = vadd.f32 %v2451, %v2452
    %v2454 = vsel %vm81, %v2257, 0.0
    %v2455 = vadd.f32 %v2453, %v2454
    %v2456 = vsel %vm81, %v2258, 0.0
    %v2457 = vadd.f32 %v2455, %v2456
    %v2458 = vsel %vm81, %v2259, 0.0
    %v2459 = vadd.f32 %v2457, %v2458
    %v2460 = vsel %vm81, %v2260, 0.0
    %v2461 = vadd.f32 %v2459, %v2460
    %v2462 = vrot.slane %v2461, 4
    %v2463 = vadd.f32 %v2461, %v2462
    %v2464 = vrot.slane %v2463, 2
    %v2465 = vadd.f32 %v2463, %v2464
    %v2466 = vrot.slane %v2465, 1
    %v2467 = vadd.f32 %v2465, %v2466
    %v2468 = vsel %vm81, %v2261, 0.0
    %v2469 = vsel %vm81, %v2262, 0.0
    %v2470 = vadd.f32 %v2468, %v2469
    %v2471 = vsel %vm81, %v2263, 0.0
    %v2472 = vadd.f32 %v2470, %v2471
    %v2473 = vsel %vm81, %v2264, 0.0
    %v2474 = vadd.f32 %v2472, %v2473
    %v2475 = vsel %vm81, %v2265, 0.0
    %v2476 = vadd.f32 %v2474, %v2475
    %v2477 = vsel %vm81, %v2266, 0.0
    %v2478 = vadd.f32 %v2476, %v2477
    %v2479 = vsel %vm81, %v2267, 0.0
    %v2480 = vadd.f32 %v2478, %v2479
    %v2481 = vsel %vm81, %v2268, 0.0
    %v2482 = vadd.f32 %v2480, %v2481
    %v2483 = vsel %vm81, %v2269, 0.0
    %v2484 = vadd.f32 %v2482, %v2483
    %v2485 = vsel %vm81, %v2270, 0.0
    %v2486 = vadd.f32 %v2484, %v2485
    %v2487 = vsel %vm81, %v2271, 0.0
    %v2488 = vadd.f32 %v2486, %v2487
    %v2489 = vsel %vm81, %v2272, 0.0
    %v2490 = vadd.f32 %v2488, %v2489
    %v2491 = vsel %vm81, %v2273, 0.0
    %v2492 = vadd.f32 %v2490, %v2491
    %v2493 = vsel %vm81, %v2274, 0.0
    %v2494 = vadd.f32 %v2492, %v2493
    %v2495 = vsel %vm81, %v2275, 0.0
    %v2496 = vadd.f32 %v2494, %v2495
    %v2497 = vsel %vm81, %v2276, 0.0
    %v2498 = vadd.f32 %v2496, %v2497
    %v2499 = vrot.slane %v2498, 4
    %v2500 = vadd.f32 %v2498, %v2499
    %v2501 = vrot.slane %v2500, 2
    %v2502 = vadd.f32 %v2500, %v2501
    %v2503 = vrot.slane %v2502, 1
    %v2504 = vadd.f32 %v2502, %v2503
    %v2505 = vadd.f32 %v39, %v2295
    %v2506 = vadd.f32 %v40, %v2315
    %v2507 = vadd.f32 %v2393, 1.0
    %v2508 = vadd.f32 %v2430, 1.0
    %v2509 = vrcp.pop %v2507
    %v2510 = vmul.f32 %v2507, %v2509
    %v2511 = vsub.f32 1.0, %v2510
    %v2512 = vmul.f32 %v2509, %v2511
    %v2513 = vadd.f32 %v2509, %v2512
    %vm2514 = vweird.f32 %v2507
    %vm2515 = vweird.f32 %v2509
    %vm2516 = vmor %vm2514, %vm2515
    %v2517 = vsel %vm2516, %v2509, %v2513
    %v2518 = vand.u32 2147483647, %v2507
    %vm2519 = vcmp.eq.f32.partialorder %v2518, 8.507059e+37
    %v2520 = vand.u32 %v2507, 2147483648
    %v2521 = vor.u32 1.1754944e-38, %v2520
    %v2522 = vsel %vm2519, %v2521, %v2517
    %v2523 = vmul.f32 1.0, %v2522
    %v2524 = vrcp.pop %v2508
    %v2525 = vmul.f32 %v2508, %v2524
    %v2526 = vsub.f32 1.0, %v2525
    %v2527 = vmul.f32 %v2524, %v2526
    %v2528 = vadd.f32 %v2524, %v2527
    %vm2529 = vweird.f32 %v2508
    %vm2530 = vweird.f32 %v2524
    %vm2531 = vmor %vm2529, %vm2530
    %v2532 = vsel %vm2531, %v2524, %v2528
    %v2533 = vand.u32 2147483647, %v2508
    %vm2534 = vcmp.eq.f32.partialorder %v2533, 8.507059e+37
    %v2535 = vand.u32 %v2508, 2147483648
    %v2536 = vor.u32 1.1754944e-38, %v2535
    %v2537 = vsel %vm2534, %v2536, %v2532
    %v2538 = vmul.f32 1.0, %v2537
    %v2539 = vmul.f32 %v2505, %v2523
    %v2540 = vmul.f32 %v2506, %v2538
    %v2541 = vadd.f32 %v41, %v2335
    %v2542 = vadd.f32 %v42, %v2355
    %v2543 = vadd.f32 %v2467, 1.0
    %v2544 = vadd.f32 %v2504, 1.0
    %v2545 = vrcp.pop %v2543
    %v2546 = vmul.f32 %v2543, %v2545
    %v2547 = vsub.f32 1.0, %v2546
    %v2548 = vmul.f32 %v2545, %v2547
    %v2549 = vadd.f32 %v2545, %v2548
    %vm2550 = vweird.f32 %v2543
    %vm2551 = vweird.f32 %v2545
    %vm2552 = vmor %vm2550, %vm2551
    %v2553 = vsel %vm2552, %v2545, %v2549
    %v2554 = vand.u32 2147483647, %v2543
    %vm2555 = vcmp.eq.f32.partialorder %v2554, 8.507059e+37
    %v2556 = vand.u32 %v2543, 2147483648
    %v2557 = vor.u32 1.1754944e-38, %v2556
    %v2558 = vsel %vm2555, %v2557, %v2553
    %v2559 = vmul.f32 1.0, %v2558
    %v2560 = vrcp.pop %v2544
    %v2561 = vmul.f32 %v2544, %v2560
    %v2562 = vsub.f32 1.0, %v2561
    %v2563 = vmul.f32 %v2560, %v2562
    %v2564 = vadd.f32 %v2560, %v2563
    %vm2565 = vweird.f32 %v2544
    %vm2566 = vweird.f32 %v2560
    %vm2567 = vmor %vm2565, %vm2566
    %v2568 = vsel %vm2567, %v2560, %v2564
    %v2569 = vand.u32 2147483647, %v2544
    %vm2570 = vcmp.eq.f32.partialorder %v2569, 8.507059e+37
    %v2571 = vand.u32 %v2544, 2147483648
    %v2572 = vor.u32 1.1754944e-38, %v2571
    %v2573 = vsel %vm2570, %v2572, %v2568
    %v2574 = vmul.f32 1.0, %v2573
    %v2575 = vmul.f32 %v2541, %v2559
    %v2576 = vmul.f32 %v2542, %v2574
    %v2577 = vmul.f32 %v2539, %v2539
    %v2578 = vmul.f32 %v2540, %v2540
    %v2579 = vsel %vm81, %v2577, 0.0
    %v2580 = vrot.slane %v2579, 4
    %v2581 = vadd.f32 %v2579, %v2580
    %v2582 = vrot.slane %v2581, 2
    %v2583 = vadd.f32 %v2581, %v2582
    %v2584 = vrot.slane %v2583, 1
    %v2585 = vadd.f32 %v2583, %v2584
    %v2586 = vsel %vm81, %v2578, 0.0
    %v2587 = vrot.slane %v2586, 4
    %v2588 = vadd.f32 %v2586, %v2587
    %v2589 = vrot.slane %v2588, 2
    %v2590 = vadd.f32 %v2588, %v2589
    %v2591 = vrot.slane %v2590, 1
    %v2592 = vadd.f32 %v2590, %v2591
    %v2593 = vrsqrt.pop %v2585
    %v2594 = vmul.f32 %v2593, %v2585
    %v2595 = vmul.f32 %v2594, %v2593
    %v2596 = vmul.f32 0.5, %v2595
    %v2597 = vsub.f32 1.5, %v2596
    %v2598 = vmul.f32 %v2593, %v2597
    %vm2599 = vweird.f32 %v2585
    %vm2600 = vweird.f32 %v2593
    %vm2601 = vmor %vm2599, %vm2600
    %v2602 = vsel %vm2601, %v2593, %v2598
    %v2603 = vrsqrt.pop %v2592
    %v2604 = vmul.f32 %v2603, %v2592
    %v2605 = vmul.f32 %v2604, %v2603
    %v2606 = vmul.f32 0.5, %v2605
    %v2607 = vsub.f32 1.5, %v2606
    %v2608 = vmul.f32 %v2603, %v2607
    %vm2609 = vweird.f32 %v2592
    %vm2610 = vweird.f32 %v2603
    %vm2611 = vmor %vm2609, %vm2610
    %v2612 = vsel %vm2611, %v2603, %v2608
    %v2613 = vmul.f32 %v2539, %v2602
    %v2614 = vmul.f32 %v2540, %v2612
    %v2615 = vmul.f32 %v2575, %v2575
    %v2616 = vmul.f32 %v2576, %v2576
    %v2617 = vsel %vm81, %v2615, 0.0
    %v2618 = vrot.slane %v2617, 4
    %v2619 = vadd.f32 %v2617, %v2618
    %v2620 = vrot.slane %v2619, 2
    %v2621 = vadd.f32 %v2619, %v2620
    %v2622 = vrot.slane %v2621, 1
    %v2623 = vadd.f32 %v2621, %v2622
    %v2624 = vsel %vm81, %v2616, 0.0
    %v2625 = vrot.slane %v2624, 4
    %v2626 = vadd.f32 %v2624, %v2625
    %v2627 = vrot.slane %v2626, 2
    %v2628 = vadd.f32 %v2626, %v2627
    %v2629 = vrot.slane %v2628, 1
    %v2630 = vadd.f32 %v2628, %v2629
    %v2631 = vrsqrt.pop %v2623
    %v2632 = vmul.f32 %v2631, %v2623
    %v2633 = vmul.f32 %v2632, %v2631
    %v2634 = vmul.f32 0.5, %v2633
    %v2635 = vsub.f32 1.5, %v2634
    %v2636 = vmul.f32 %v2631, %v2635
    %vm2637 = vweird.f32 %v2623
    %vm2638 = vweird.f32 %v2631
    %vm2639 = vmor %vm2637, %vm2638
    %v2640 = vsel %vm2639, %v2631, %v2636
    %v2641 = vrsqrt.pop %v2630
    %v2642 = vmul.f32 %v2641, %v2630
    %v2643 = vmul.f32 %v2642, %v2641
    %v2644 = vmul.f32 0.5, %v2643
    %v2645 = vsub.f32 1.5, %v2644
    %v2646 = vmul.f32 %v2641, %v2645
    %vm2647 = vweird.f32 %v2630
    %vm2648 = vweird.f32 %v2641
    %vm2649 = vmor %vm2647, %vm2648
    %v2650 = vsel %vm2649, %v2641, %v2646
    %v2651 = vmul.f32 %v2575, %v2640
    %v2652 = vmul.f32 %v2576, %v2650
    %2653 = vxpose.xlu0.b32.start [1/16] %v2613, 128
    %2654 = vxpose.xlu0.b32.cont [2/16] 0.0, 128
    %2655 = vxpose.xlu0.b32.cont [3/16] 0.0, 128
    %2656 = vxpose.xlu0.b32.cont [4/16] 0.0, 128
    %2657 = vxpose.xlu0.b32.cont [5/16] 0.0, 128
    %2658 = vxpose.xlu0.b32.cont [6/16] 0.0, 128
    %2659 = vxpose.xlu0.b32.cont [7/16] 0.0, 128
    %2660 = vxpose.xlu0.b32.cont [8/16] 0.0, 128
    %2661 = vxpose.xlu0.b32.cont [9/16] 0.0, 128
    %2662 = vxpose.xlu0.b32.cont [10/16] 0.0, 128
    %2663 = vxpose.xlu0.b32.cont [11/16] 0.0, 128
    %2664 = vxpose.xlu0.b32.cont [12/16] 0.0, 128
    %2665 = vxpose.xlu0.b32.cont [13/16] 0.0, 128
    %2666 = vxpose.xlu0.b32.cont [14/16] 0.0, 128
    %2667 = vxpose.xlu0.b32.cont [15/16] 0.0, 128
    %2668 = vxpose.xlu0.b32.end [16/16] 0.0, 128
    %v2669 = vpop.trf.xlu0
    %v2670 = vpop.trf.xlu0
    %v2671 = vpop.trf.xlu0
    %v2672 = vpop.trf.xlu0
    %v2673 = vpop.trf.xlu0
    %v2674 = vpop.trf.xlu0
    %v2675 = vpop.trf.xlu0
    %v2676 = vpop.trf.xlu0
    %v2677 = vpop.trf.xlu0
    %v2678 = vpop.trf.xlu0
    %v2679 = vpop.trf.xlu0
    %v2680 = vpop.trf.xlu0
    %v2681 = vpop.trf.xlu0
    %v2682 = vpop.trf.xlu0
    %v2683 = vpop.trf.xlu0
    %v2684 = vpop.trf.xlu0
    %2685 = vxpose.xlu0.b32.start [1/16] %v2614, 128
    %2686 = vxpose.xlu0.b32.cont [2/16] 0.0, 128
    %2687 = vxpose.xlu0.b32.cont [3/16] 0.0, 128
    %2688 = vxpose.xlu0.b32.cont [4/16] 0.0, 128
    %2689 = vxpose.xlu0.b32.cont [5/16] 0.0, 128
    %2690 = vxpose.xlu0.b32.cont [6/16] 0.0, 128
    %2691 = vxpose.xlu0.b32.cont [7/16] 0.0, 128
    %2692 = vxpose.xlu0.b32.cont [8/16] 0.0, 128
    %2693 = vxpose.xlu0.b32.cont [9/16] 0.0, 128
    %2694 = vxpose.xlu0.b32.cont [10/16] 0.0, 128
    %2695 = vxpose.xlu0.b32.cont [11/16] 0.0, 128
    %2696 = vxpose.xlu0.b32.cont [12/16] 0.0, 128
    %2697 = vxpose.xlu0.b32.cont [13/16] 0.0, 128
    %2698 = vxpose.xlu0.b32.cont [14/16] 0.0, 128
    %2699 = vxpose.xlu0.b32.cont [15/16] 0.0, 128
    %2700 = vxpose.xlu0.b32.end [16/16] 0.0, 128
    %v2701 = vpop.trf.xlu0
    %v2702 = vpop.trf.xlu0
    %v2703 = vpop.trf.xlu0
    %v2704 = vpop.trf.xlu0
    %v2705 = vpop.trf.xlu0
    %v2706 = vpop.trf.xlu0
    %v2707 = vpop.trf.xlu0
    %v2708 = vpop.trf.xlu0
    %v2709 = vpop.trf.xlu0
    %v2710 = vpop.trf.xlu0
    %v2711 = vpop.trf.xlu0
    %v2712 = vpop.trf.xlu0
    %v2713 = vpop.trf.xlu0
    %v2714 = vpop.trf.xlu0
    %v2715 = vpop.trf.xlu0
    %v2716 = vpop.trf.xlu0
    %v2718 = vsel %vm220, %v2669, 0
    %v2721 = vsel %vm220, %v2670, 0
    %v2724 = vsel %vm220, %v2671, 0
    %v2727 = vsel %vm220, %v2672, 0
    %v2730 = vsel %vm220, %v2673, 0
    %v2733 = vsel %vm220, %v2674, 0
    %v2736 = vsel %vm220, %v2675, 0
    %v2739 = vsel %vm220, %v2676, 0
    %2741 = vmatpush.msra.mxu0 0.0
    %2742 = vmatpush.msra.mxu0 0.0
    %2743 = vmatpush.msra.mxu0 0.0
    %2744 = vmatpush.msra.mxu0 0.0
    %2745 = vmatpush.msra.mxu0 0.0
    %2746 = vmatpush.msra.mxu0 0.0
    %2747 = vmatpush.msra.mxu0 0.0
    %2748 = vmatpush.msra.mxu0 0.0
    %2749 = vmatpush.msra.mxu0 0.0
    %2750 = vmatpush.msra.mxu0 0.0
    %2751 = vmatpush.msra.mxu0 0.0
    %2752 = vmatpush.msra.mxu0 0.0
    %2753 = vmatpush.msra.mxu0 0.0
    %2754 = vmatpush.msra.mxu0 0.0
    %2755 = vmatpush.msra.mxu0 0.0
    %2756 = vmatpush.msra.mxu0 %v2651
    %2757 = vmatmul.f32.gmra.mxu0 %v2718
    %v2758 = vpop.f32.mrf.mxu0
    %v2759 = vadd.f32 0.0, %v2758
    %2760 = vmatmul.f32.gmra.mxu0 %v2721
    %v2761 = vpop.f32.mrf.mxu0
    %v2762 = vadd.f32 0.0, %v2761
    %2763 = vmatmul.f32.gmra.mxu0 %v2724
    %v2764 = vpop.f32.mrf.mxu0
    %v2765 = vadd.f32 0.0, %v2764
    %2766 = vmatmul.f32.gmra.mxu0 %v2727
    %v2767 = vpop.f32.mrf.mxu0
    %v2768 = vadd.f32 0.0, %v2767
    %2769 = vmatmul.f32.gmra.mxu0 %v2730
    %v2770 = vpop.f32.mrf.mxu0
    %v2771 = vadd.f32 0.0, %v2770
    %2772 = vmatmul.f32.gmra.mxu0 %v2733
    %v2773 = vpop.f32.mrf.mxu0
    %v2774 = vadd.f32 0.0, %v2773
    %2775 = vmatmul.f32.gmra.mxu0 %v2736
    %v2776 = vpop.f32.mrf.mxu0
    %v2777 = vadd.f32 0.0, %v2776
    %2778 = vmatmul.f32.gmra.mxu0 %v2739
    %v2779 = vpop.f32.mrf.mxu0
    %v2780 = vadd.f32 0.0, %v2779
    %2781 = vdwg.mxu0
    %v2783 = vsel %vm220, %v2701, 0
    %v2786 = vsel %vm220, %v2702, 0
    %v2789 = vsel %vm220, %v2703, 0
    %v2792 = vsel %vm220, %v2704, 0
    %v2795 = vsel %vm220, %v2705, 0
    %v2798 = vsel %vm220, %v2706, 0
    %v2801 = vsel %vm220, %v2707, 0
    %v2804 = vsel %vm220, %v2708, 0
    %2806 = vmatpush.msra.mxu0 0.0
    %2807 = vmatpush.msra.mxu0 0.0
    %2808 = vmatpush.msra.mxu0 0.0
    %2809 = vmatpush.msra.mxu0 0.0
    %2810 = vmatpush.msra.mxu0 0.0
    %2811 = vmatpush.msra.mxu0 0.0
    %2812 = vmatpush.msra.mxu0 0.0
    %2813 = vmatpush.msra.mxu0 0.0
    %2814 = vmatpush.msra.mxu0 0.0
    %2815 = vmatpush.msra.mxu0 0.0
    %2816 = vmatpush.msra.mxu0 0.0
    %2817 = vmatpush.msra.mxu0 0.0
    %2818 = vmatpush.msra.mxu0 0.0
    %2819 = vmatpush.msra.mxu0 0.0
    %2820 = vmatpush.msra.mxu0 0.0
    %2821 = vmatpush.msra.mxu0 %v2652
    %2822 = vmatmul.f32.gmra.mxu0 %v2783
    %v2823 = vpop.f32.mrf.mxu0
    %v2824 = vadd.f32 0.0, %v2823
    %2825 = vmatmul.f32.gmra.mxu0 %v2786
    %v2826 = vpop.f32.mrf.mxu0
    %v2827 = vadd.f32 0.0, %v2826
    %2828 = vmatmul.f32.gmra.mxu0 %v2789
    %v2829 = vpop.f32.mrf.mxu0
    %v2830 = vadd.f32 0.0, %v2829
    %2831 = vmatmul.f32.gmra.mxu0 %v2792
    %v2832 = vpop.f32.mrf.mxu0
    %v2833 = vadd.f32 0.0, %v2832
    %2834 = vmatmul.f32.gmra.mxu0 %v2795
    %v2835 = vpop.f32.mrf.mxu0
    %v2836 = vadd.f32 0.0, %v2835
    %2837 = vmatmul.f32.gmra.mxu0 %v2798
    %v2838 = vpop.f32.mrf.mxu0
    %v2839 = vadd.f32 0.0, %v2838
    %2840 = vmatmul.f32.gmra.mxu0 %v2801
    %v2841 = vpop.f32.mrf.mxu0
    %v2842 = vadd.f32 0.0, %v2841
    %2843 = vmatmul.f32.gmra.mxu0 %v2804
    %v2844 = vpop.f32.mrf.mxu0
    %v2845 = vadd.f32 0.0, %v2844
    %2846 = vdwg.mxu0
    %vm2847 = vcmp.lt.f32.partialorder %v2759, 0.155
    %vm2848 = vcmp.lt.f32.partialorder %v2762, 0.155
    %vm2849 = vcmp.lt.f32.partialorder %v2765, 0.155
    %vm2850 = vcmp.lt.f32.partialorder %v2768, 0.155
    %vm2851 = vcmp.lt.f32.partialorder %v2771, 0.155
    %vm2852 = vcmp.lt.f32.partialorder %v2774, 0.155
    %vm2853 = vcmp.lt.f32.partialorder %v2777, 0.155
    %vm2854 = vcmp.lt.f32.partialorder %v2780, 0.155
    %vm2855 = vcmp.lt.f32.partialorder %v2824, 0.155
    %vm2856 = vcmp.lt.f32.partialorder %v2827, 0.155
    %vm2857 = vcmp.lt.f32.partialorder %v2830, 0.155
    %vm2858 = vcmp.lt.f32.partialorder %v2833, 0.155
    %vm2859 = vcmp.lt.f32.partialorder %v2836, 0.155
    %vm2860 = vcmp.lt.f32.partialorder %v2839, 0.155
    %vm2861 = vcmp.lt.f32.partialorder %v2842, 0.155
    %vm2862 = vcmp.lt.f32.partialorder %v2845, 0.155
    %v2863 = vsel %vm2847, -inf, %v2759
    %v2864 = vsel %vm2848, -inf, %v2762
    %v2865 = vsel %vm2849, -inf, %v2765
    %v2866 = vsel %vm2850, -inf, %v2768
    %v2867 = vsel %vm2851, -inf, %v2771
    %v2868 = vsel %vm2852, -inf, %v2774
    %v2869 = vsel %vm2853, -inf, %v2777
    %v2870 = vsel %vm2854, -inf, %v2780
    %v2871 = vsel %vm2855, -inf, %v2824
    %v2872 = vsel %vm2856, -inf, %v2827
    %v2873 = vsel %vm2857, -inf, %v2830
    %v2874 = vsel %vm2858, -inf, %v2833
    %v2875 = vsel %vm2859, -inf, %v2836
    %v2876 = vsel %vm2860, -inf, %v2839
    %v2877 = vsel %vm2861, -inf, %v2842
    %v2878 = vsel %vm2862, -inf, %v2845
    %v2879 = vsel %vm81, %v2863, -inf
    %2880 = vmax.xlane.f32.xlu0 %v2879
    %v2881 = vpop.xlane.xlu0 %2880
    %v2882 = vsel %vm81, %v2864, -inf
    %2883 = vmax.xlane.f32.xlu0 %v2882
    %v2884 = vpop.xlane.xlu0 %2883
    %v2885 = vsel %vm81, %v2865, -inf
    %2886 = vmax.xlane.f32.xlu0 %v2885
    %v2887 = vpop.xlane.xlu0 %2886
    %v2888 = vsel %vm81, %v2866, -inf
    %2889 = vmax.xlane.f32.xlu0 %v2888
    %v2890 = vpop.xlane.xlu0 %2889
    %v2891 = vsel %vm81, %v2867, -inf
    %2892 = vmax.xlane.f32.xlu0 %v2891
    %v2893 = vpop.xlane.xlu0 %2892
    %v2894 = vsel %vm81, %v2868, -inf
    %2895 = vmax.xlane.f32.xlu0 %v2894
    %v2896 = vpop.xlane.xlu0 %2895
    %v2897 = vsel %vm81, %v2869, -inf
    %2898 = vmax.xlane.f32.xlu0 %v2897
    %v2899 = vpop.xlane.xlu0 %2898
    %v2900 = vsel %vm81, %v2870, -inf
    %2901 = vmax.xlane.f32.xlu0 %v2900
    %v2902 = vpop.xlane.xlu0 %2901
    %v2903 = vsel %vm81, %v2871, -inf
    %2904 = vmax.xlane.f32.xlu0 %v2903
    %v2905 = vpop.xlane.xlu0 %2904
    %v2906 = vsel %vm81, %v2872, -inf
    %2907 = vmax.xlane.f32.xlu0 %v2906
    %v2908 = vpop.xlane.xlu0 %2907
    %v2909 = vsel %vm81, %v2873, -inf
    %2910 = vmax.xlane.f32.xlu0 %v2909
    %v2911 = vpop.xlane.xlu0 %2910
    %v2912 = vsel %vm81, %v2874, -inf
    %2913 = vmax.xlane.f32.xlu0 %v2912
    %v2914 = vpop.xlane.xlu0 %2913
    %v2915 = vsel %vm81, %v2875, -inf
    %2916 = vmax.xlane.f32.xlu0 %v2915
    %v2917 = vpop.xlane.xlu0 %2916
    %v2918 = vsel %vm81, %v2876, -inf
    %2919 = vmax.xlane.f32.xlu0 %v2918
    %v2920 = vpop.xlane.xlu0 %2919
    %v2921 = vsel %vm81, %v2877, -inf
    %2922 = vmax.xlane.f32.xlu0 %v2921
    %v2923 = vpop.xlane.xlu0 %2922
    %v2924 = vsel %vm81, %v2878, -inf
    %2925 = vmax.xlane.f32.xlu0 %v2924
    %v2926 = vpop.xlane.xlu0 %2925
    %vm2927 = vcmp.eq.f32.partialorder %v2863, %v2881
    %vm2928 = vcmp.eq.f32.partialorder %v2864, %v2884
    %vm2929 = vcmp.eq.f32.partialorder %v2865, %v2887
    %vm2930 = vcmp.eq.f32.partialorder %v2866, %v2890
    %vm2931 = vcmp.eq.f32.partialorder %v2867, %v2893
    %vm2932 = vcmp.eq.f32.partialorder %v2868, %v2896
    %vm2933 = vcmp.eq.f32.partialorder %v2869, %v2899
    %vm2934 = vcmp.eq.f32.partialorder %v2870, %v2902
    %vm2935 = vcmp.eq.f32.partialorder %v2871, %v2905
    %vm2936 = vcmp.eq.f32.partialorder %v2872, %v2908
    %vm2937 = vcmp.eq.f32.partialorder %v2873, %v2911
    %vm2938 = vcmp.eq.f32.partialorder %v2874, %v2914
    %vm2939 = vcmp.eq.f32.partialorder %v2875, %v2917
    %vm2940 = vcmp.eq.f32.partialorder %v2876, %v2920
    %vm2941 = vcmp.eq.f32.partialorder %v2877, %v2923
    %vm2942 = vcmp.eq.f32.partialorder %v2878, %v2926
    %v2943 = vsel %vm2927, %v930, 64
    %v2944 = vsel %vm2928, %v930, 64
    %v2945 = vsel %vm2929, %v930, 64
    %v2946 = vsel %vm2930, %v930, 64
    %v2947 = vsel %vm2931, %v930, 64
    %v2948 = vsel %vm2932, %v930, 64
    %v2949 = vsel %vm2933, %v930, 64
    %v2950 = vsel %vm2934, %v930, 64
    %v2951 = vsel %vm2935, %v930, 64
    %v2952 = vsel %vm2936, %v930, 64
    %v2953 = vsel %vm2937, %v930, 64
    %v2954 = vsel %vm2938, %v930, 64
    %v2955 = vsel %vm2939, %v930, 64
    %v2956 = vsel %vm2940, %v930, 64
    %v2957 = vsel %vm2941, %v930, 64
    %v2958 = vsel %vm2942, %v930, 64
    %v2959 = vsel %vm81, %v2943, 2147483647
    %v2960 = vand.u32 %v2959, 65535
    %v2961 = vshra.s32 %v2959, 16
    %v2962 = vcvt.s32.f32 %v2960
    %v2963 = vcvt.s32.f32 %v2961
    %2964 = vmin.xlane.f32.xlu0 %v2963
    %v2965 = vpop.xlane.xlu0 %2964
    %vm2966 = vcmp.eq.f32.partialorder %v2963, %v2965
    %v2967 = vsel %vm2966, %v2962, inf
    %2968 = vmin.xlane.f32.xlu0 %v2967
    %v2969 = vpop.xlane.xlu0 %2968
    %v2970 = vcvt.f32.s32 %v2969
    %v2971 = vcvt.f32.s32 %v2965
    %v2972 = vshll.u32 %v2971, 16
    %v2973 = vadd.s32 %v2972, %v2970
    %v2974 = vsel %vm81, %v2944, 2147483647
    %v2975 = vand.u32 %v2974, 65535
    %v2976 = vshra.s32 %v2974, 16
    %v2977 = vcvt.s32.f32 %v2975
    %v2978 = vcvt.s32.f32 %v2976
    %2979 = vmin.xlane.f32.xlu0 %v2978
    %v2980 = vpop.xlane.xlu0 %2979
    %vm2981 = vcmp.eq.f32.partialorder %v2978, %v2980
    %v2982 = vsel %vm2981, %v2977, inf
    %2983 = vmin.xlane.f32.xlu0 %v2982
    %v2984 = vpop.xlane.xlu0 %2983
    %v2985 = vcvt.f32.s32 %v2984
    %v2986 = vcvt.f32.s32 %v2980
    %v2987 = vshll.u32 %v2986, 16
    %v2988 = vadd.s32 %v2987, %v2985
    %v2989 = vsel %vm81, %v2945, 2147483647
    %v2990 = vand.u32 %v2989, 65535
    %v2991 = vshra.s32 %v2989, 16
    %v2992 = vcvt.s32.f32 %v2990
    %v2993 = vcvt.s32.f32 %v2991
    %2994 = vmin.xlane.f32.xlu0 %v2993
    %v2995 = vpop.xlane.xlu0 %2994
    %vm2996 = vcmp.eq.f32.partialorder %v2993, %v2995
    %v2997 = vsel %vm2996, %v2992, inf
    %2998 = vmin.xlane.f32.xlu0 %v2997
    %v2999 = vpop.xlane.xlu0 %2998
    %v3000 = vcvt.f32.s32 %v2999
    %v3001 = vcvt.f32.s32 %v2995
    %v3002 = vshll.u32 %v3001, 16
    %v3003 = vadd.s32 %v3002, %v3000
    %v3004 = vsel %vm81, %v2946, 2147483647
    %v3005 = vand.u32 %v3004, 65535
    %v3006 = vshra.s32 %v3004, 16
    %v3007 = vcvt.s32.f32 %v3005
    %v3008 = vcvt.s32.f32 %v3006
    %3009 = vmin.xlane.f32.xlu0 %v3008
    %v3010 = vpop.xlane.xlu0 %3009
    %vm3011 = vcmp.eq.f32.partialorder %v3008, %v3010
    %v3012 = vsel %vm3011, %v3007, inf
    %3013 = vmin.xlane.f32.xlu0 %v3012
    %v3014 = vpop.xlane.xlu0 %3013
    %v3015 = vcvt.f32.s32 %v3014
    %v3016 = vcvt.f32.s32 %v3010
    %v3017 = vshll.u32 %v3016, 16
    %v3018 = vadd.s32 %v3017, %v3015
    %v3019 = vsel %vm81, %v2947, 2147483647
    %v3020 = vand.u32 %v3019, 65535
    %v3021 = vshra.s32 %v3019, 16
    %v3022 = vcvt.s32.f32 %v3020
    %v3023 = vcvt.s32.f32 %v3021
    %3024 = vmin.xlane.f32.xlu0 %v3023
    %v3025 = vpop.xlane.xlu0 %3024
    %vm3026 = vcmp.eq.f32.partialorder %v3023, %v3025
    %v3027 = vsel %vm3026, %v3022, inf
    %3028 = vmin.xlane.f32.xlu0 %v3027
    %v3029 = vpop.xlane.xlu0 %3028
    %v3030 = vcvt.f32.s32 %v3029
    %v3031 = vcvt.f32.s32 %v3025
    %v3032 = vshll.u32 %v3031, 16
    %v3033 = vadd.s32 %v3032, %v3030
    %v3034 = vsel %vm81, %v2948, 2147483647
    %v3035 = vand.u32 %v3034, 65535
    %v3036 = vshra.s32 %v3034, 16
    %v3037 = vcvt.s32.f32 %v3035
    %v3038 = vcvt.s32.f32 %v3036
    %3039 = vmin.xlane.f32.xlu0 %v3038
    %v3040 = vpop.xlane.xlu0 %3039
    %vm3041 = vcmp.eq.f32.partialorder %v3038, %v3040
    %v3042 = vsel %vm3041, %v3037, inf
    %3043 = vmin.xlane.f32.xlu0 %v3042
    %v3044 = vpop.xlane.xlu0 %3043
    %v3045 = vcvt.f32.s32 %v3044
    %v3046 = vcvt.f32.s32 %v3040
    %v3047 = vshll.u32 %v3046, 16
    %v3048 = vadd.s32 %v3047, %v3045
    %v3049 = vsel %vm81, %v2949, 2147483647
    %v3050 = vand.u32 %v3049, 65535
    %v3051 = vshra.s32 %v3049, 16
    %v3052 = vcvt.s32.f32 %v3050
    %v3053 = vcvt.s32.f32 %v3051
    %3054 = vmin.xlane.f32.xlu0 %v3053
    %v3055 = vpop.xlane.xlu0 %3054
    %vm3056 = vcmp.eq.f32.partialorder %v3053, %v3055
    %v3057 = vsel %vm3056, %v3052, inf
    %3058 = vmin.xlane.f32.xlu0 %v3057
    %v3059 = vpop.xlane.xlu0 %3058
    %v3060 = vcvt.f32.s32 %v3059
    %v3061 = vcvt.f32.s32 %v3055
    %v3062 = vshll.u32 %v3061, 16
    %v3063 = vadd.s32 %v3062, %v3060
    %v3064 = vsel %vm81, %v2950, 2147483647
    %v3065 = vand.u32 %v3064, 65535
    %v3066 = vshra.s32 %v3064, 16
    %v3067 = vcvt.s32.f32 %v3065
    %v3068 = vcvt.s32.f32 %v3066
    %3069 = vmin.xlane.f32.xlu0 %v3068
    %v3070 = vpop.xlane.xlu0 %3069
    %vm3071 = vcmp.eq.f32.partialorder %v3068, %v3070
    %v3072 = vsel %vm3071, %v3067, inf
    %3073 = vmin.xlane.f32.xlu0 %v3072
    %v3074 = vpop.xlane.xlu0 %3073
    %v3075 = vcvt.f32.s32 %v3074
    %v3076 = vcvt.f32.s32 %v3070
    %v3077 = vshll.u32 %v3076, 16
    %v3078 = vadd.s32 %v3077, %v3075
    %v3079 = vsel %vm81, %v2951, 2147483647
    %v3080 = vand.u32 %v3079, 65535
    %v3081 = vshra.s32 %v3079, 16
    %v3082 = vcvt.s32.f32 %v3080
    %v3083 = vcvt.s32.f32 %v3081
    %3084 = vmin.xlane.f32.xlu0 %v3083
    %v3085 = vpop.xlane.xlu0 %3084
    %vm3086 = vcmp.eq.f32.partialorder %v3083, %v3085
    %v3087 = vsel %vm3086, %v3082, inf
    %3088 = vmin.xlane.f32.xlu0 %v3087
    %v3089 = vpop.xlane.xlu0 %3088
    %v3090 = vcvt.f32.s32 %v3089
    %v3091 = vcvt.f32.s32 %v3085
    %v3092 = vshll.u32 %v3091, 16
    %v3093 = vadd.s32 %v3092, %v3090
    %v3094 = vsel %vm81, %v2952, 2147483647
    %v3095 = vand.u32 %v3094, 65535
    %v3096 = vshra.s32 %v3094, 16
    %v3097 = vcvt.s32.f32 %v3095
    %v3098 = vcvt.s32.f32 %v3096
    %3099 = vmin.xlane.f32.xlu0 %v3098
    %v3100 = vpop.xlane.xlu0 %3099
    %vm3101 = vcmp.eq.f32.partialorder %v3098, %v3100
    %v3102 = vsel %vm3101, %v3097, inf
    %3103 = vmin.xlane.f32.xlu0 %v3102
    %v3104 = vpop.xlane.xlu0 %3103
    %v3105 = vcvt.f32.s32 %v3104
    %v3106 = vcvt.f32.s32 %v3100
    %v3107 = vshll.u32 %v3106, 16
    %v3108 = vadd.s32 %v3107, %v3105
    %v3109 = vsel %vm81, %v2953, 2147483647
    %v3110 = vand.u32 %v3109, 65535
    %v3111 = vshra.s32 %v3109, 16
    %v3112 = vcvt.s32.f32 %v3110
    %v3113 = vcvt.s32.f32 %v3111
    %3114 = vmin.xlane.f32.xlu0 %v3113
    %v3115 = vpop.xlane.xlu0 %3114
    %vm3116 = vcmp.eq.f32.partialorder %v3113, %v3115
    %v3117 = vsel %vm3116, %v3112, inf
    %3118 = vmin.xlane.f32.xlu0 %v3117
    %v3119 = vpop.xlane.xlu0 %3118
    %v3120 = vcvt.f32.s32 %v3119
    %v3121 = vcvt.f32.s32 %v3115
    %v3122 = vshll.u32 %v3121, 16
    %v3123 = vadd.s32 %v3122, %v3120
    %v3124 = vsel %vm81, %v2954, 2147483647
    %v3125 = vand.u32 %v3124, 65535
    %v3126 = vshra.s32 %v3124, 16
    %v3127 = vcvt.s32.f32 %v3125
    %v3128 = vcvt.s32.f32 %v3126
    %3129 = vmin.xlane.f32.xlu0 %v3128
    %v3130 = vpop.xlane.xlu0 %3129
    %vm3131 = vcmp.eq.f32.partialorder %v3128, %v3130
    %v3132 = vsel %vm3131, %v3127, inf
    %3133 = vmin.xlane.f32.xlu0 %v3132
    %v3134 = vpop.xlane.xlu0 %3133
    %v3135 = vcvt.f32.s32 %v3134
    %v3136 = vcvt.f32.s32 %v3130
    %v3137 = vshll.u32 %v3136, 16
    %v3138 = vadd.s32 %v3137, %v3135
    %v3139 = vsel %vm81, %v2955, 2147483647
    %v3140 = vand.u32 %v3139, 65535
    %v3141 = vshra.s32 %v3139, 16
    %v3142 = vcvt.s32.f32 %v3140
    %v3143 = vcvt.s32.f32 %v3141
    %3144 = vmin.xlane.f32.xlu0 %v3143
    %v3145 = vpop.xlane.xlu0 %3144
    %vm3146 = vcmp.eq.f32.partialorder %v3143, %v3145
    %v3147 = vsel %vm3146, %v3142, inf
    %3148 = vmin.xlane.f32.xlu0 %v3147
    %v3149 = vpop.xlane.xlu0 %3148
    %v3150 = vcvt.f32.s32 %v3149
    %v3151 = vcvt.f32.s32 %v3145
    %v3152 = vshll.u32 %v3151, 16
    %v3153 = vadd.s32 %v3152, %v3150
    %v3154 = vsel %vm81, %v2956, 2147483647
    %v3155 = vand.u32 %v3154, 65535
    %v3156 = vshra.s32 %v3154, 16
    %v3157 = vcvt.s32.f32 %v3155
    %v3158 = vcvt.s32.f32 %v3156
    %3159 = vmin.xlane.f32.xlu0 %v3158
    %v3160 = vpop.xlane.xlu0 %3159
    %vm3161 = vcmp.eq.f32.partialorder %v3158, %v3160
    %v3162 = vsel %vm3161, %v3157, inf
    %3163 = vmin.xlane.f32.xlu0 %v3162
    %v3164 = vpop.xlane.xlu0 %3163
    %v3165 = vcvt.f32.s32 %v3164
    %v3166 = vcvt.f32.s32 %v3160
    %v3167 = vshll.u32 %v3166, 16
    %v3168 = vadd.s32 %v3167, %v3165
    %v3169 = vsel %vm81, %v2957, 2147483647
    %v3170 = vand.u32 %v3169, 65535
    %v3171 = vshra.s32 %v3169, 16
    %v3172 = vcvt.s32.f32 %v3170
    %v3173 = vcvt.s32.f32 %v3171
    %3174 = vmin.xlane.f32.xlu0 %v3173
    %v3175 = vpop.xlane.xlu0 %3174
    %vm3176 = vcmp.eq.f32.partialorder %v3173, %v3175
    %v3177 = vsel %vm3176, %v3172, inf
    %3178 = vmin.xlane.f32.xlu0 %v3177
    %v3179 = vpop.xlane.xlu0 %3178
    %v3180 = vcvt.f32.s32 %v3179
    %v3181 = vcvt.f32.s32 %v3175
    %v3182 = vshll.u32 %v3181, 16
    %v3183 = vadd.s32 %v3182, %v3180
    %v3184 = vsel %vm81, %v2958, 2147483647
    %v3185 = vand.u32 %v3184, 65535
    %v3186 = vshra.s32 %v3184, 16
    %v3187 = vcvt.s32.f32 %v3185
    %v3188 = vcvt.s32.f32 %v3186
    %3189 = vmin.xlane.f32.xlu0 %v3188
    %v3190 = vpop.xlane.xlu0 %3189
    %vm3191 = vcmp.eq.f32.partialorder %v3188, %v3190
    %v3192 = vsel %vm3191, %v3187, inf
    %3193 = vmin.xlane.f32.xlu0 %v3192
    %v3194 = vpop.xlane.xlu0 %3193
    %v3195 = vcvt.f32.s32 %v3194
    %v3196 = vcvt.f32.s32 %v3190
    %v3197 = vshll.u32 %v3196, 16
    %v3198 = vadd.s32 %v3197, %v3195
    %vm3199 = vcmp.eq.s32.totalorder %v930, %v2973
    %vm3200 = vcmp.eq.s32.totalorder %v930, %v2988
    %vm3201 = vcmp.eq.s32.totalorder %v930, %v3003
    %vm3202 = vcmp.eq.s32.totalorder %v930, %v3018
    %vm3203 = vcmp.eq.s32.totalorder %v930, %v3033
    %vm3204 = vcmp.eq.s32.totalorder %v930, %v3048
    %vm3205 = vcmp.eq.s32.totalorder %v930, %v3063
    %vm3206 = vcmp.eq.s32.totalorder %v930, %v3078
    %vm3207 = vcmp.eq.s32.totalorder %v930, %v3093
    %vm3208 = vcmp.eq.s32.totalorder %v930, %v3108
    %vm3209 = vcmp.eq.s32.totalorder %v930, %v3123
    %vm3210 = vcmp.eq.s32.totalorder %v930, %v3138
    %vm3211 = vcmp.eq.s32.totalorder %v930, %v3153
    %vm3212 = vcmp.eq.s32.totalorder %v930, %v3168
    %vm3213 = vcmp.eq.s32.totalorder %v930, %v3183
    %vm3214 = vcmp.eq.s32.totalorder %v930, %v3198
    %v3215 = vsel %vm3199, 1, 0
    %v3216 = vsel %vm3200, 1, 0
    %v3217 = vsel %vm3201, 1, 0
    %v3218 = vsel %vm3202, 1, 0
    %v3219 = vsel %vm3203, 1, 0
    %v3220 = vsel %vm3204, 1, 0
    %v3221 = vsel %vm3205, 1, 0
    %v3222 = vsel %vm3206, 1, 0
    %v3223 = vsel %vm3207, 1, 0
    %v3224 = vsel %vm3208, 1, 0
    %v3225 = vsel %vm3209, 1, 0
    %v3226 = vsel %vm3210, 1, 0
    %v3227 = vsel %vm3211, 1, 0
    %v3228 = vsel %vm3212, 1, 0
    %v3229 = vsel %vm3213, 1, 0
    %v3230 = vsel %vm3214, 1, 0
    %v3231 = vcvt.s32.f32 %v3215
    %v3232 = vcvt.s32.f32 %v3216
    %v3233 = vcvt.s32.f32 %v3217
    %v3234 = vcvt.s32.f32 %v3218
    %v3235 = vcvt.s32.f32 %v3219
    %v3236 = vcvt.s32.f32 %v3220
    %v3237 = vcvt.s32.f32 %v3221
    %v3238 = vcvt.s32.f32 %v3222
    %v3239 = vcvt.s32.f32 %v3223
    %v3240 = vcvt.s32.f32 %v3224
    %v3241 = vcvt.s32.f32 %v3225
    %v3242 = vcvt.s32.f32 %v3226
    %v3243 = vcvt.s32.f32 %v3227
    %v3244 = vcvt.s32.f32 %v3228
    %v3245 = vcvt.s32.f32 %v3229
    %v3246 = vcvt.s32.f32 %v3230
    %v3248 = vsel %vm81, %v2539, 0
    %3250 = vmatpush.msra.mxu0 0.0
    %3251 = vmatpush.msra.mxu0 0.0
    %3252 = vmatpush.msra.mxu0 0.0
    %3253 = vmatpush.msra.mxu0 0.0
    %3254 = vmatpush.msra.mxu0 0.0
    %3255 = vmatpush.msra.mxu0 0.0
    %3256 = vmatpush.msra.mxu0 0.0
    %3257 = vmatpush.msra.mxu0 0.0
    %3258 = vmatpush.msra.mxu0 %v3238
    %3259 = vmatpush.msra.mxu0 %v3237
    %3260 = vmatpush.msra.mxu0 %v3236
    %3261 = vmatpush.msra.mxu0 %v3235
    %3262 = vmatpush.msra.mxu0 %v3234
    %3263 = vmatpush.msra.mxu0 %v3233
    %3264 = vmatpush.msra.mxu0 %v3232
    %3265 = vmatpush.msra.mxu0 %v3231
    %3266 = vmatmul.f32.gmra.mxu0 %v3248
    %v3267 = vpop.f32.mrf.mxu0
    %v3268 = vadd.f32 0.0, %v3267
    %3269 = vdwg.mxu0
    %v3271 = vsel %vm81, %v2540, 0
    %3273 = vmatpush.msra.mxu0 0.0
    %3274 = vmatpush.msra.mxu0 0.0
    %3275 = vmatpush.msra.mxu0 0.0
    %3276 = vmatpush.msra.mxu0 0.0
    %3277 = vmatpush.msra.mxu0 0.0
    %3278 = vmatpush.msra.mxu0 0.0
    %3279 = vmatpush.msra.mxu0 0.0
    %3280 = vmatpush.msra.mxu0 0.0
    %3281 = vmatpush.msra.mxu0 %v3246
    %3282 = vmatpush.msra.mxu0 %v3245
    %3283 = vmatpush.msra.mxu0 %v3244
    %3284 = vmatpush.msra.mxu0 %v3243
    %3285 = vmatpush.msra.mxu0 %v3242
    %3286 = vmatpush.msra.mxu0 %v3241
    %3287 = vmatpush.msra.mxu0 %v3240
    %3288 = vmatpush.msra.mxu0 %v3239
    %3289 = vmatmul.f32.gmra.mxu0 %v3271
    %v3290 = vpop.f32.mrf.mxu0
    %v3291 = vadd.f32 0.0, %v3290
    %3292 = vdwg.mxu0
    %v3293 = vsel %vm81, %v3231, 0.0
    %v3294 = vsel %vm81, %v3232, 0.0
    %v3295 = vadd.f32 %v3293, %v3294
    %v3296 = vsel %vm81, %v3233, 0.0
    %v3297 = vadd.f32 %v3295, %v3296
    %v3298 = vsel %vm81, %v3234, 0.0
    %v3299 = vadd.f32 %v3297, %v3298
    %v3300 = vsel %vm81, %v3235, 0.0
    %v3301 = vadd.f32 %v3299, %v3300
    %v3302 = vsel %vm81, %v3236, 0.0
    %v3303 = vadd.f32 %v3301, %v3302
    %v3304 = vsel %vm81, %v3237, 0.0
    %v3305 = vadd.f32 %v3303, %v3304
    %v3306 = vsel %vm81, %v3238, 0.0
    %v3307 = vadd.f32 %v3305, %v3306
    %v3308 = vrot.slane %v3307, 4
    %v3309 = vadd.f32 %v3307, %v3308
    %v3310 = vrot.slane %v3309, 2
    %v3311 = vadd.f32 %v3309, %v3310
    %v3312 = vrot.slane %v3311, 1
    %v3313 = vadd.f32 %v3311, %v3312
    %v3314 = vsel %vm81, %v3239, 0.0
    %v3315 = vsel %vm81, %v3240, 0.0
    %v3316 = vadd.f32 %v3314, %v3315
    %v3317 = vsel %vm81, %v3241, 0.0
    %v3318 = vadd.f32 %v3316, %v3317
    %v3319 = vsel %vm81, %v3242, 0.0
    %v3320 = vadd.f32 %v3318, %v3319
    %v3321 = vsel %vm81, %v3243, 0.0
    %v3322 = vadd.f32 %v3320, %v3321
    %v3323 = vsel %vm81, %v3244, 0.0
    %v3324 = vadd.f32 %v3322, %v3323
    %v3325 = vsel %vm81, %v3245, 0.0
    %v3326 = vadd.f32 %v3324, %v3325
    %v3327 = vsel %vm81, %v3246, 0.0
    %v3328 = vadd.f32 %v3326, %v3327
    %v3329 = vrot.slane %v3328, 4
    %v3330 = vadd.f32 %v3328, %v3329
    %v3331 = vrot.slane %v3330, 2
    %v3332 = vadd.f32 %v3330, %v3331
    %v3333 = vrot.slane %v3332, 1
    %v3334 = vadd.f32 %v3332, %v3333
    %v3335 = vadd.f32 %v2575, %v3268
    %v3336 = vadd.f32 %v2576, %v3291
    %v3337 = vadd.f32 %v3313, 1.0
    %v3338 = vadd.f32 %v3334, 1.0
    %v3339 = vrcp.pop %v3337
    %v3340 = vmul.f32 %v3337, %v3339
    %v3341 = vsub.f32 1.0, %v3340
    %v3342 = vmul.f32 %v3339, %v3341
    %v3343 = vadd.f32 %v3339, %v3342
    %vm3344 = vweird.f32 %v3337
    %vm3345 = vweird.f32 %v3339
    %vm3346 = vmor %vm3344, %vm3345
    %v3347 = vsel %vm3346, %v3339, %v3343
    %v3348 = vand.u32 2147483647, %v3337
    %vm3349 = vcmp.eq.f32.partialorder %v3348, 8.507059e+37
    %v3350 = vand.u32 %v3337, 2147483648
    %v3351 = vor.u32 1.1754944e-38, %v3350
    %v3352 = vsel %vm3349, %v3351, %v3347
    %v3353 = vmul.f32 1.0, %v3352
    %v3354 = vrcp.pop %v3338
    %v3355 = vmul.f32 %v3338, %v3354
    %v3356 = vsub.f32 1.0, %v3355
    %v3357 = vmul.f32 %v3354, %v3356
    %v3358 = vadd.f32 %v3354, %v3357
    %vm3359 = vweird.f32 %v3338
    %vm3360 = vweird.f32 %v3354
    %vm3361 = vmor %vm3359, %vm3360
    %v3362 = vsel %vm3361, %v3354, %v3358
    %v3363 = vand.u32 2147483647, %v3338
    %vm3364 = vcmp.eq.f32.partialorder %v3363, 8.507059e+37
    %v3365 = vand.u32 %v3338, 2147483648
    %v3366 = vor.u32 1.1754944e-38, %v3365
    %v3367 = vsel %vm3364, %v3366, %v3362
    %v3368 = vmul.f32 1.0, %v3367
    %v3369 = vmul.f32 %v3335, %v3353
    %v3370 = vmul.f32 %v3336, %v3368
    %v3371 = vld [vmem:[%s3] sm:$0xff]
    %v3372 = vld [vmem:[%s3 + $0x8] sm:$0xff]
    %v3373 = vld [vmem:[%s4] sm:$0xff]
    %v3374 = vld [vmem:[%s4 + $0x8] sm:$0xff]
    %3376 = vset.pattern.permute.xlu0 0
    %3377 = vperm.xlu0 %3376, %v3373
    %v3378 = vpop.permute.xlu0 %3377
    %3381 = vset.pattern.permute.xlu0 0
    %3382 = vperm.xlu0 %3381, %v3374
    %v3383 = vpop.permute.xlu0 %3382
    %v3386 = vsel %vm220, %v3371, 0
    %v3389 = vsel %vm220, %v3372, 0
    %3391 = vmatpush.msra.mxu0 0.0
    %3392 = vmatpush.msra.mxu0 0.0
    %3393 = vmatpush.msra.mxu0 0.0
    %3394 = vmatpush.msra.mxu0 0.0
    %3395 = vmatpush.msra.mxu0 0.0
    %3396 = vmatpush.msra.mxu0 0.0
    %3397 = vmatpush.msra.mxu0 0.0
    %3398 = vmatpush.msra.mxu0 0.0
    %3399 = vmatpush.msra.mxu0 0.0
    %3400 = vmatpush.msra.mxu0 0.0
    %3401 = vmatpush.msra.mxu0 0.0
    %3402 = vmatpush.msra.mxu0 0.0
    %3403 = vmatpush.msra.mxu0 0.0
    %3404 = vmatpush.msra.mxu0 0.0
    %3405 = vmatpush.msra.mxu0 0.0
    %3406 = vmatpush.msra.mxu0 %v3369
    %3407 = vmatmul.f32.gmra.mxu0 %v3386
    %v3408 = vpop.f32.mrf.mxu0
    %v3409 = vadd.f32 %v3378, %v3408
    %3410 = vmatmul.f32.gmra.mxu0 %v3389
    %v3411 = vpop.f32.mrf.mxu0
    %v3412 = vadd.f32 %v3383, %v3411
    %3413 = vdwg.mxu0
    %v3414 = vxor.u32 %v3409, 2147483648
    %v3415 = vxor.u32 %v3412, 2147483648
    %v3416 = vmul.f32 %v3414, 1.442695
    %v3417 = vpow.pop %v3416
    %v3418 = vmul.f32 %v3415, 1.442695
    %v3419 = vpow.pop %v3418
    %v3420 = vadd.f32 %v3417, 1.0
    %v3421 = vadd.f32 %v3419, 1.0
    %v3422 = vrcp.pop %v3420
    %v3423 = vmul.f32 %v3420, %v3422
    %v3424 = vsub.f32 1.0, %v3423
    %v3425 = vmul.f32 %v3422, %v3424
    %v3426 = vadd.f32 %v3422, %v3425
    %vm3427 = vweird.f32 %v3420
    %vm3428 = vweird.f32 %v3422
    %vm3429 = vmor %vm3427, %vm3428
    %v3430 = vsel %vm3429, %v3422, %v3426
    %v3431 = vand.u32 2147483647, %v3420
    %vm3432 = vcmp.eq.f32.partialorder %v3431, 8.507059e+37
    %v3433 = vand.u32 %v3420, 2147483648
    %v3434 = vor.u32 1.1754944e-38, %v3433
    %v3435 = vsel %vm3432, %v3434, %v3430
    %v3436 = vmul.f32 1.0, %v3435
    %v3437 = vrcp.pop %v3421
    %v3438 = vmul.f32 %v3421, %v3437
    %v3439 = vsub.f32 1.0, %v3438
    %v3440 = vmul.f32 %v3437, %v3439
    %v3441 = vadd.f32 %v3437, %v3440
    %vm3442 = vweird.f32 %v3421
    %vm3443 = vweird.f32 %v3437
    %vm3444 = vmor %vm3442, %vm3443
    %v3445 = vsel %vm3444, %v3437, %v3441
    %v3446 = vand.u32 2147483647, %v3421
    %vm3447 = vcmp.eq.f32.partialorder %v3446, 8.507059e+37
    %v3448 = vand.u32 %v3421, 2147483648
    %v3449 = vor.u32 1.1754944e-38, %v3448
    %v3450 = vsel %vm3447, %v3449, %v3445
    %v3451 = vmul.f32 1.0, %v3450
    %v3452 = vmul.f32 %v3409, %v3436
    %v3453 = vmul.f32 %v3412, %v3451
    %3454 = vst.msk [vmem:[#allocation5] sm:$0xff] %vm81, %v3452
    %3455 = vst.msk [vmem:[#allocation5 + $0x8] sm:$0xff] %vm81, %v3453
    %3456 = vmatpush.msra.mxu0 0.0
    %3457 = vmatpush.msra.mxu0 0.0
    %3458 = vmatpush.msra.mxu0 0.0
    %3459 = vmatpush.msra.mxu0 0.0
    %3460 = vmatpush.msra.mxu0 0.0
    %3461 = vmatpush.msra.mxu0 0.0
    %3462 = vmatpush.msra.mxu0 0.0
    %3463 = vmatpush.msra.mxu0 0.0
    %3464 = vmatpush.msra.mxu0 0.0
    %3465 = vmatpush.msra.mxu0 0.0
    %3466 = vmatpush.msra.mxu0 0.0
    %3467 = vmatpush.msra.mxu0 0.0
    %3468 = vmatpush.msra.mxu0 0.0
    %3469 = vmatpush.msra.mxu0 0.0
    %3470 = vmatpush.msra.mxu0 0.0
    %3471 = vmatpush.msra.mxu0 %v3370
    %3472 = vmatmul.f32.gmra.mxu0 %v3386
    %v3473 = vpop.f32.mrf.mxu0
    %v3474 = vadd.f32 %v3378, %v3473
    %3475 = vmatmul.f32.gmra.mxu0 %v3389
    %v3476 = vpop.f32.mrf.mxu0
    %v3477 = vadd.f32 %v3383, %v3476
    %3478 = vdwg.mxu0
    %v3479 = vxor.u32 %v3474, 2147483648
    %v3480 = vxor.u32 %v3477, 2147483648
    %v3481 = vmul.f32 %v3479, 1.442695
    %v3482 = vpow.pop %v3481
    %v3483 = vmul.f32 %v3480, 1.442695
    %v3484 = vpow.pop %v3483
    %v3485 = vadd.f32 %v3482, 1.0
    %v3486 = vadd.f32 %v3484, 1.0
    %v3487 = vrcp.pop %v3485
    %v3488 = vmul.f32 %v3485, %v3487
    %v3489 = vsub.f32 1.0, %v3488
    %v3490 = vmul.f32 %v3487, %v3489
    %v3491 = vadd.f32 %v3487, %v3490
    %vm3492 = vweird.f32 %v3485
    %vm3493 = vweird.f32 %v3487
    %vm3494 = vmor %vm3492, %vm3493
    %v3495 = vsel %vm3494, %v3487, %v3491
    %v3496 = vand.u32 2147483647, %v3485
    %vm3497 = vcmp.eq.f32.partialorder %v3496, 8.507059e+37
    %v3498 = vand.u32 %v3485, 2147483648
    %v3499 = vor.u32 1.1754944e-38, %v3498
    %v3500 = vsel %vm3497, %v3499, %v3495
    %v3501 = vmul.f32 1.0, %v3500
    %v3502 = vrcp.pop %v3486
    %v3503 = vmul.f32 %v3486, %v3502
    %v3504 = vsub.f32 1.0, %v3503
    %v3505 = vmul.f32 %v3502, %v3504
    %v3506 = vadd.f32 %v3502, %v3505
    %vm3507 = vweird.f32 %v3486
    %vm3508 = vweird.f32 %v3502
    %vm3509 = vmor %vm3507, %vm3508
    %v3510 = vsel %vm3509, %v3502, %v3506
    %v3511 = vand.u32 2147483647, %v3486
    %vm3512 = vcmp.eq.f32.partialorder %v3511, 8.507059e+37
    %v3513 = vand.u32 %v3486, 2147483648
    %v3514 = vor.u32 1.1754944e-38, %v3513
    %v3515 = vsel %vm3512, %v3514, %v3510
    %v3516 = vmul.f32 1.0, %v3515
    %v3517 = vmul.f32 %v3474, %v3501
    %v3518 = vmul.f32 %v3477, %v3516
    %3521 = vrot.lane.b32.xlu0 %v3517, 64
    %v3522 = vpop.permute.xlu0 %3521
    %3523 = vrot.lane.b32.xlu0 %v3518, 64
    %v3524 = vpop.permute.xlu0 %3523
    %vm3527 = vcmask 1048064
    %3528 = vst.msk [vmem:[#allocation5] sm:$0xff] %vm3527, %v3522
    %3529 = vst.msk [vmem:[#allocation5 + $0x8] sm:$0xff] %vm3527, %v3524
    // Predicated region
    $region26: #{tpu_custom_call.1} parent=1 // pred_check
      _
    $region27: #{tpu_custom_call.1} parent=1 // pred_check_branch
      %3531 = sbr.rel (0) target = $region29
    $region28: #{tpu_custom_call.1} parent=1 // pred_region
      %3533 = vsyncadd [#allocation4], 0
      %s3534 = sshll.u32 [#allocation5], 4
      %s3535 = int_to_ptr.vmem [resolvable:$true] %s3534
      %s3536 = sshll.u32 %s5, 4
      %s3537 = int_to_ptr.hbm [resolvable:$true] %s3536
      %3542 = dma.vmem_to_hbm [thread:$0]  %s3535, 256, %s3537, [#allocation4], 128, 128, 8
    $region29: #{tpu_custom_call.1} parent=1 // pred_fallthru
      _
    // Predicated region
    $region30: #{tpu_custom_call.1} parent=1 // pred_check
      _
    $region31: #{tpu_custom_call.1} parent=1 // pred_check_branch
      %3544 = sbr.rel (0) target = $region33
    $region32: #{tpu_custom_call.1} parent=1 // pred_region
      %3546 = dma.done [#allocation4], 256
    $region33: #{tpu_custom_call.1} parent=1 // pred_fallthru
      _
    %3547 = vsyncpa [#allocation3], 1
    %3548 = vsyncpa [#allocation4], 1

</llo_original>
